<compile_context>
chip_gen: v6e
topology: v6e:2x2x1
jax: 0.10.0
libtpu: 0.0.40
codegen_flags: <defaults>
</compile_context>

<pallas_src>
import numpy as np
import jax
import jax.numpy as jnp
from jax.experimental import pallas as pl
from jax.experimental.pallas import tpu as pltpu


# ------------------------------ wavelet mixing ---------------------------------

def db1_mixing():
    """Haar ('db1') analysis / synthesis 2x2 mixing matrices.

    Replicates create_wavelet_filter('db1', ...) from the PyTorch reference.
    (The reference applies [::-1] followed by .flip(0) to the rec filters,
    which is a no-op pair, so the plain rec filters are used here.)
      dec_m[k, 2*i + j] : analysis coeff of input phase (i, j) for subband k
      rec_m[2*i + j, k] : synthesis coeff of subband k for output phase (i, j)
    """
    a = 1.0 / np.sqrt(2.0)
    dec_lo = np.array([a, a], np.float64)[::-1]
    dec_hi = np.array([-a, a], np.float64)[::-1]
    rec_lo = np.array([a, a], np.float64)
    rec_hi = np.array([a, -a], np.float64)

    def pair(first, second):              # [i, j] = second[i] * first[j]
        return second[:, None] * first[None, :]

    dec_f = np.stack([pair(dec_lo, dec_lo), pair(dec_lo, dec_hi),
                      pair(dec_hi, dec_lo), pair(dec_hi, dec_hi)], 0)
    rec_f = np.stack([pair(rec_lo, rec_lo), pair(rec_lo, rec_hi),
                      pair(rec_hi, rec_lo), pair(rec_hi, rec_hi)], 0)
    dec_m = dec_f.reshape(4, 4)
    rec_m = rec_f.reshape(4, 4).T
    return dec_m, rec_m


# ------------------------------ parameters -------------------------------------

def init_params(C, seed=0):
    rng = np.random.default_rng(seed)
    dec_m, rec_m = db1_mixing()

    def rnd(*shape, scale=0.1):
        return (rng.standard_normal(shape) * scale).astype(np.float32)

    def bn_fold(n):
        # Inference-mode BatchNorm folded to scale/bias.
        gamma = 1.0 + 0.1 * rng.standard_normal(n)
        beta = 0.1 * rng.standard_normal(n)
        mean = 0.1 * rng.standard_normal(n)
        var = 1.0 + 0.1 * np.abs(rng.standard_normal(n))
        s = (gamma / np.sqrt(var + 1e-5)).astype(np.float32)
        b = (beta - mean * s).astype(np.float32)
        return s, b

    bf16, f32 = jnp.bfloat16, jnp.float32
    p = {}

    # ---- local_op: DWConv2d_BN_ReLU(dim, dim, 3) ------------------------------
    loc_dw = np.transpose(rnd(C, 1, 3, 3)[:, 0], (1, 2, 0))            # (3,3,C)
    s1, b1 = bn_fold(C)
    pw = rnd(C, 1, 1, 1)[:, 0, 0, 0]                                   # per-ch 1x1
    s2, b2 = bn_fold(C)
    p['loc_dw'] = jnp.asarray((loc_dw * s1)[:, :, None, :], f32)       # BN1 scale folded
    p['loc_b1'] = jnp.asarray(b1[None, :], f32)
    p['loc_s2'] = jnp.asarray((pw * s2)[None, :], f32)                 # 1x1 * BN2 scale
    p['loc_b2'] = jnp.asarray(b2[None, :], f32)

    # ---- MBWT LL branch: depthwise 3x3 (+bias) -> pointwise 1x1 (+bias) -------
    ll_dw = np.transpose(rnd(C, 1, 3, 3)[:, 0], (1, 2, 0))
    ll_dwb = rnd(C)
    ll_pw = np.transpose(rnd(C, C, 1, 1)[:, :, 0, 0], (1, 0))          # (Cin,Cout)
    ll_pwb = rnd(C)
    p['ll_dw'] = jnp.asarray(ll_dw[:, :, None, :], f32)
    p['ll_pw'] = jnp.asarray(ll_pw, bf16)
    p['ll_pwb'] = jnp.asarray((ll_dwb @ ll_pw + ll_pwb)[None, :], f32)  # dw bias folded

    # ---- MBWT HF branch --------------------------------------------------------
    # Only the LH channels (0::3) of the grouped 3C wavelet conv are consumed
    # downstream (the reference slices [:, ::3] before SS2D).
    wav_dw = rnd(3 * C, 1, 3, 3)[0::3, 0]                              # (C,3,3)
    wav_sc = rnd(1, 3 * C, 1, 1)[0, 0::3, 0, 0]                        # (C,)
    p['hf_dw'] = jnp.asarray(
        (np.transpose(wav_dw, (1, 2, 0)) * wav_sc)[:, :, None, :], f32)  # scale folded
    base_sc = rnd(1, C, 1, 1)[0, :, 0, 0]                              # base_scale
    conv_w = rnd(3 * C, C, 3, 3)                                       # self.conv
    conv_b = rnd(3 * C)
    W0 = np.transpose(conv_w, (2, 3, 1, 0))                            # (3,3,Cin,3C)
    W0 = W0 * base_sc[None, None, :, None]                             # fold base_scale
    # Fold inverse-Haar synthesis into the conv: output block t holds the HF
    # contribution of output phase t (rec_m[t, 1:4] mix of LH/HL/HH columns).
    W0r = W0.reshape(3, 3, C, C, 3)                                    # [.., ch j, subband]
    R = rec_m[:, 1:4].astype(np.float32)                               # (4,3)
    Wfold = np.einsum('xyijk,tk->xyitj', W0r, R)                       # (3,3,Cin,4,C)
    p['hf_cw'] = jnp.asarray(Wfold.reshape(9 * C, 4 * C), bf16)        # im2col weight
    bfold = np.einsum('jk,tk->tj', conv_b.reshape(C, 3), R)            # (4,C)
    p['hf_cb'] = jnp.asarray(bfold.reshape(1, 4 * C), f32)

    # ---- proj: ReLU -> 1x1 conv -> BN (folded) ---------------------------------
    proj_w = np.transpose(rnd(C, C, 1, 1)[:, :, 0, 0], (1, 0))
    ps, pb = bn_fold(C)
    p['proj_w'] = jnp.asarray(proj_w * ps[None, :], bf16)
    p['proj_b'] = jnp.asarray(pb[None, :], f32)

    dec_ll = [float(dec_m[0, t]) for t in range(4)]
    dec_lh = [float(dec_m[1, t]) for t in range(4)]
    rec0 = [float(rec_m[t, 0]) for t in range(4)]
    return p, dec_ll, dec_lh, rec0


# ------------------------------ fused kernel -----------------------------------

def make_fused_kernel(Hh, Wh, dec_ll, dec_lh, rec0):
    N = Hh * Wh

    def kernel(x_ref, mask_l_ref, mask_r_ref,
               loc_dw_ref, loc_b1_ref, loc_s2_ref, loc_b2_ref,
               ll_dw_ref, ll_pw_ref, ll_pwb_ref,
               hf_dw_ref, hf_cw_ref, hf_cb_ref,
               proj_w_ref, proj_b_ref, o_ref):
        f32, bf16 = jnp.float32, jnp.bfloat16
        C = x_ref.shape[-1]
        mask_l = mask_l_ref[...]       # (N,1): 1.0 where column j-1 is in range
        mask_r = mask_r_ref[...]       # (N,1): 1.0 where column j+1 is in range

        def shift_flat(v, k):
            # y[n] = v[n + k] with zero fill; k is a static python int.
            if k == 0:
                return v
            z = jnp.zeros((abs(k), v.shape[1]), v.dtype)
            if k > 0:
                return jnp.concatenate([v[k:], z], axis=0)
            return jnp.concatenate([z, v[:k]], axis=0)

        def shift2d(v, dh, dw):
            # value at (i+dh, j+dw) on the (Hh, Wh) grid flattened into rows.
            t = shift_flat(v, dh * Wh + dw)
            if dw == 1:
                t = t * mask_r
            elif dw == -1:
                t = t * mask_l
            return t

        def dw3x3(v, w):               # depthwise 3x3, pad 1; w: (3,3,1,C) value
            acc = v * w[1, 1]
            for du in (-1, 0, 1):
                for dv in (-1, 0, 1):
                    if du == 0 and dv == 0:
                        continue
                    acc = acc + shift2d(v, du, dv) * w[du + 1, dv + 1]
            return acc

        # -------- input phase planes: P[2a+b][i*Wh+j] = x[2i+a, 2j+b] ----------
        P = [x_ref[0, t] for t in range(4)]                       # 4 x (N, C)

        # -------- 1. local_op (dw3x3 -> BN -> ReLU -> per-ch 1x1 -> BN) --------
        #            evaluated directly on each output phase plane.
        loc_w = loc_dw_ref[...]
        loc_b1 = loc_b1_ref[...]
        loc_s2 = loc_s2_ref[...]
        loc_b2 = loc_b2_ref[...]
        shift_cache = {}

        def phase_shift(t, dh, dw):
            key = (t, dh, dw)
            if key not in shift_cache:
                shift_cache[key] = shift2d(P[t], dh, dw)
            return shift_cache[key]

        Z = []
        for pa in (0, 1):
            for pb in (0, 1):
                acc = None
                for du in (-1, 0, 1):
                    sa, ra = (pa + du) & 1, (pa + du) >> 1
                    for dv in (-1, 0, 1):
                        sb, rb = (pb + dv) & 1, (pb + dv) >> 1
                        term = phase_shift(2 * sa + sb, ra, rb) * loc_w[du + 1, dv + 1]
                        acc = term if acc is None else acc + term
                z = jnp.maximum(acc + loc_b1, 0.0)
                Z.append(z * loc_s2 + loc_b2)

        # -------- 2. Haar analysis: only LL and LH feed the rest ---------------
        ll = (dec_ll[0] * Z[0] + dec_ll[1] * Z[1] +
              dec_ll[2] * Z[2] + dec_ll[3] * Z[3])
        lh = (dec_lh[0] * Z[0] + dec_lh[1] * Z[1] +
              dec_lh[2] * Z[2] + dec_lh[3] * Z[3])

        # -------- 3. LL branch: depthwise 3x3 -> pointwise 1x1 (biases folded) -
        u_ll = dw3x3(ll, ll_dw_ref[...])
        ll_out = jnp.dot(u_ll.astype(bf16), ll_pw_ref[...],
                         preferred_element_type=f32) + ll_pwb_ref[...]

        # -------- 4. HF branch: wavelet depthwise conv (scale folded) ----------
        v_hf = dw3x3(lh, hf_dw_ref[...])
        # TODO(synk): SS2D (self.global_atten) selective-scan source is not
        # provided; it is applied as identity here.  base_scale and the inverse
        # Haar mixing are folded into hf_cw / hf_cb at init time.
        taps = [shift2d(v_hf, kh - 1, kw - 1)
                for kh in range(3) for kw in range(3)]
        im2col = jnp.concatenate(taps, axis=1).astype(bf16)            # (N, 9C)
        hf = jnp.dot(im2col, hf_cw_ref[...],
                     preferred_element_type=f32) + hf_cb_ref[...]      # (N, 4C)

        # -------- 5/6. inverse Haar (LL term) + proj (one matmul, 4 phases) ----
        o_cat = jnp.concatenate(
            [rec0[t] * ll_out + hf[:, t * C:(t + 1) * C] for t in range(4)],
            axis=0)                                                    # (4N, C)
        r = jnp.maximum(o_cat, 0.0).astype(bf16)
        y = jnp.dot(r, proj_w_ref[...],
                    preferred_element_type=f32) + proj_b_ref[...]      # (4N, C)
        for t in range(4):
            o_ref[0, t] = y[t * N:(t + 1) * N]

    return kernel


# --------------------------------- model ---------------------------------------

class FIQAMambaPallas:
    def __init__(self, dim, seed=0):
        self.dim = dim
        (self.params, self.dec_ll, self.dec_lh, self.rec0) = init_params(dim, seed)

    def __call__(self, x_nchw):
        p = self.params
        B, C, H, W = x_nchw.shape
        assert C == self.dim and H % 2 == 0 and W % 2 == 0
        Hh, Wh = H // 2, W // 2
        N = Hh * Wh
        f32 = jnp.float32

        # NCHW -> stride-2 phase planes (B, 4, Hh*Wh, C).  This rides on the
        # layout transpose that is needed anyway (no extra HBM pass).
        xp = x_nchw.astype(f32).reshape(B, C, Hh, 2, Wh, 2)
        xp = jnp.transpose(xp, (0, 3, 5, 2, 4, 1)).reshape(B, 4, N, C)

        # Column-boundary masks for +/-1 shifts along W (built on host).
        jcol = np.arange(N) % Wh
        mask_l = jnp.asarray((jcol >= 1).astype(np.float32)[:, None])
        mask_r = jnp.asarray((jcol + 1 < Wh).astype(np.float32)[:, None])

        weights = [p['loc_dw'], p['loc_b1'], p['loc_s2'], p['loc_b2'],
                   p['ll_dw'], p['ll_pw'], p['ll_pwb'],
                   p['hf_dw'], p['hf_cw'], p['hf_cb'],
                   p['proj_w'], p['proj_b']]

        def wspec(arr):
            shape = tuple(int(s) for s in arr.shape)
            nd = len(shape)
            return pl.BlockSpec(shape, lambda b, _nd=nd: (0,) * _nd)

        act_spec = pl.BlockSpec((1, 4, N, C), lambda b: (b, 0, 0, 0))

        flops = B * (132 * N * C + 82 * N * C * C)
        bytes_acc = B * 2 * (4 * N * C) * 4 + sum(
            int(np.prod(w.shape)) * w.dtype.itemsize for w in weights)
        cost = pl.CostEstimate(flops=int(flops), transcendentals=0,
                               bytes_accessed=int(bytes_acc))

        out = pl.pallas_call(
            make_fused_kernel(Hh, Wh, self.dec_ll, self.dec_lh, self.rec0),
            out_shape=jax.ShapeDtypeStruct((B, 4, N, C), f32),
            grid=(B,),
            in_specs=[act_spec, wspec(mask_l), wspec(mask_r)]
                     + [wspec(w) for w in weights],
            out_specs=act_spec,
            compiler_params=pltpu.CompilerParams(
                dimension_semantics=("parallel",),
                vmem_limit_bytes=32 * 1024 * 1024),
            cost_estimate=cost,
        )(xp, mask_l, mask_r, *weights)

        # phase planes -> NCHW (single fused transpose + reshape)
        out = out.reshape(B, 2, 2, Hh, Wh, C)
        out = jnp.transpose(out, (0, 5, 3, 1, 4, 2)).reshape(B, C, H, W)
        return out


# ---------------------------------- main ----------------------------------------

if __name__ == "__main__":
    B, C, H, W = 2, 8, 16, 16
    key = jax.random.PRNGKey(0)
    x = jax.random.normal(key, (B, C, H, W), dtype=jnp.float32)     # NCHW input
    model = FIQAMambaPallas(dim=C, seed=0)
    fwd = jax.jit(model.__call__)
    out = fwd(x)
    jax.block_until_ready(out)
    assert out.shape == (B, C, H, W)
    assert bool(jnp.all(jnp.isfinite(out)))
    print("KERNEL_OK")
</pallas_src>

<mosaic_0001>
module attributes {stable_mosaic.version = 11 : i64} {
  func.func @kernel(%arg0: i32, %arg1: memref<1x4x64x8xf32, #tpu.memory_space<vmem>>, %arg2: memref<64x1xf32, #tpu.memory_space<vmem>>, %arg3: memref<64x1xf32, #tpu.memory_space<vmem>>, %arg4: memref<3x3x1x8xf32, #tpu.memory_space<vmem>>, %arg5: memref<1x8xf32, #tpu.memory_space<vmem>>, %arg6: memref<1x8xf32, #tpu.memory_space<vmem>>, %arg7: memref<1x8xf32, #tpu.memory_space<vmem>>, %arg8: memref<3x3x1x8xf32, #tpu.memory_space<vmem>>, %arg9: memref<8x8xbf16, #tpu.memory_space<vmem>>, %arg10: memref<1x8xf32, #tpu.memory_space<vmem>>, %arg11: memref<3x3x1x8xf32, #tpu.memory_space<vmem>>, %arg12: memref<72x32xbf16, #tpu.memory_space<vmem>>, %arg13: memref<1x32xf32, #tpu.memory_space<vmem>>, %arg14: memref<8x8xbf16, #tpu.memory_space<vmem>>, %arg15: memref<1x8xf32, #tpu.memory_space<vmem>>, %arg16: memref<1x4x64x8xf32, #tpu.memory_space<vmem>>) attributes {dimension_semantics = [#tpu.dimension_semantics<parallel>], iteration_bounds = array<i64: 2>, scalar_prefetch = 0 : i64, scratch_operands = 0 : i64, tpu.core_type = #tpu.core_type<tc>, window_params = [{transform_indices = @transform_0, window_bounds = array<i64: 1, 4, 64, 8>}, {pipeline_mode = #tpu.pipeline_mode<synchronous>, transform_indices = @transform_1, window_bounds = array<i64: 64, 1>}, {pipeline_mode = #tpu.pipeline_mode<synchronous>, transform_indices = @transform_2, window_bounds = array<i64: 64, 1>}, {pipeline_mode = #tpu.pipeline_mode<synchronous>, transform_indices = @transform_3, window_bounds = array<i64: 3, 3, 1, 8>}, {pipeline_mode = #tpu.pipeline_mode<synchronous>, transform_indices = @transform_4, window_bounds = array<i64: 1, 8>}, {pipeline_mode = #tpu.pipeline_mode<synchronous>, transform_indices = @transform_5, window_bounds = array<i64: 1, 8>}, {pipeline_mode = #tpu.pipeline_mode<synchronous>, transform_indices = @transform_6, window_bounds = array<i64: 1, 8>}, {pipeline_mode = #tpu.pipeline_mode<synchronous>, transform_indices = @transform_7, window_bounds = array<i64: 3, 3, 1, 8>}, {pipeline_mode = #tpu.pipeline_mode<synchronous>, transform_indices = @transform_8, window_bounds = array<i64: 8, 8>}, {pipeline_mode = #tpu.pipeline_mode<synchronous>, transform_indices = @transform_9, window_bounds = array<i64: 1, 8>}, {pipeline_mode = #tpu.pipeline_mode<synchronous>, transform_indices = @transform_10, window_bounds = array<i64: 3, 3, 1, 8>}, {pipeline_mode = #tpu.pipeline_mode<synchronous>, transform_indices = @transform_11, window_bounds = array<i64: 72, 32>}, {pipeline_mode = #tpu.pipeline_mode<synchronous>, transform_indices = @transform_12, window_bounds = array<i64: 1, 32>}, {pipeline_mode = #tpu.pipeline_mode<synchronous>, transform_indices = @transform_13, window_bounds = array<i64: 8, 8>}, {pipeline_mode = #tpu.pipeline_mode<synchronous>, transform_indices = @transform_14, window_bounds = array<i64: 1, 8>}, {transform_indices = @transform_15, window_bounds = array<i64: 1, 4, 64, 8>}]} {
    %c0 = arith.constant 0 : index
    %c0_0 = arith.constant 0 : index
    %0 = vector.load %arg2[%c0, %c0_0] : memref<64x1xf32, #tpu.memory_space<vmem>>, vector<64x1xf32>
    %c0_1 = arith.constant 0 : index
    %c0_2 = arith.constant 0 : index
    %1 = vector.load %arg3[%c0_1, %c0_2] : memref<64x1xf32, #tpu.memory_space<vmem>>, vector<64x1xf32>
    %c0_3 = arith.constant 0 : index
    %c0_4 = arith.constant 0 : index
    %c0_5 = arith.constant 0 : index
    %c0_6 = arith.constant 0 : index
    %2 = vector.load %arg1[%c0_3, %c0_4, %c0_5, %c0_6] : memref<1x4x64x8xf32, #tpu.memory_space<vmem>>, vector<1x1x64x8xf32>
    %3 = vector.shape_cast %2 : vector<1x1x64x8xf32> to vector<64x8xf32>
    %c0_7 = arith.constant 0 : index
    %c1 = arith.constant 1 : index
    %c0_8 = arith.constant 0 : index
    %c0_9 = arith.constant 0 : index
    %4 = vector.load %arg1[%c0_7, %c1, %c0_8, %c0_9] : memref<1x4x64x8xf32, #tpu.memory_space<vmem>>, vector<1x1x64x8xf32>
    %5 = vector.shape_cast %4 : vector<1x1x64x8xf32> to vector<64x8xf32>
    %c0_10 = arith.constant 0 : index
    %c2 = arith.constant 2 : index
    %c0_11 = arith.constant 0 : index
    %c0_12 = arith.constant 0 : index
    %6 = vector.load %arg1[%c0_10, %c2, %c0_11, %c0_12] : memref<1x4x64x8xf32, #tpu.memory_space<vmem>>, vector<1x1x64x8xf32>
    %7 = vector.shape_cast %6 : vector<1x1x64x8xf32> to vector<64x8xf32>
    %c0_13 = arith.constant 0 : index
    %c3 = arith.constant 3 : index
    %c0_14 = arith.constant 0 : index
    %c0_15 = arith.constant 0 : index
    %8 = vector.load %arg1[%c0_13, %c3, %c0_14, %c0_15] : memref<1x4x64x8xf32, #tpu.memory_space<vmem>>, vector<1x1x64x8xf32>
    %9 = vector.shape_cast %8 : vector<1x1x64x8xf32> to vector<64x8xf32>
    %c0_16 = arith.constant 0 : index
    %c0_17 = arith.constant 0 : index
    %c0_18 = arith.constant 0 : index
    %c0_19 = arith.constant 0 : index
    %10 = vector.load %arg4[%c0_16, %c0_17, %c0_18, %c0_19] : memref<3x3x1x8xf32, #tpu.memory_space<vmem>>, vector<3x3x1x8xf32>
    %c0_20 = arith.constant 0 : index
    %c0_21 = arith.constant 0 : index
    %11 = vector.load %arg5[%c0_20, %c0_21] : memref<1x8xf32, #tpu.memory_space<vmem>>, vector<1x8xf32>
    %c0_22 = arith.constant 0 : index
    %c0_23 = arith.constant 0 : index
    %12 = vector.load %arg6[%c0_22, %c0_23] : memref<1x8xf32, #tpu.memory_space<vmem>>, vector<1x8xf32>
    %c0_24 = arith.constant 0 : index
    %c0_25 = arith.constant 0 : index
    %13 = vector.load %arg7[%c0_24, %c0_25] : memref<1x8xf32, #tpu.memory_space<vmem>>, vector<1x8xf32>
    %cst = arith.constant 0.000000e+00 : f32
    %14 = vector.broadcast %cst : f32 to vector<9x8xf32>
    %15 = vector.extract_strided_slice %9 {offsets = [0, 0], sizes = [55, 8], strides = [1, 1]} : vector<64x8xf32> to vector<55x8xf32>
    %16 = tpu.concatenate %14, %15 in 0 : vector<9x8xf32>, vector<55x8xf32> -> vector<64x8xf32>
    %17 = vector.broadcast %0 : vector<64x1xf32> to vector<64x8xf32>
    %18 = arith.mulf %16, %17 : vector<64x8xf32>
    %19 = vector.extract_strided_slice %10 {offsets = [0, 0, 0, 0], sizes = [1, 1, 1, 8], strides = [1, 1, 1, 1]} : vector<3x3x1x8xf32> to vector<1x1x1x8xf32>
    %20 = vector.shape_cast %19 : vector<1x1x1x8xf32> to vector<1x8xf32>
    %21 = vector.broadcast %20 : vector<1x8xf32> to vector<64x8xf32>
    %22 = arith.mulf %18, %21 : vector<64x8xf32>
    %cst_26 = arith.constant 0.000000e+00 : f32
    %23 = vector.broadcast %cst_26 : f32 to vector<8x8xf32>
    %24 = vector.extract_strided_slice %7 {offsets = [0, 0], sizes = [56, 8], strides = [1, 1]} : vector<64x8xf32> to vector<56x8xf32>
    %25 = tpu.concatenate %23, %24 in 0 : vector<8x8xf32>, vector<56x8xf32> -> vector<64x8xf32>
    %26 = vector.extract_strided_slice %10 {offsets = [0, 1, 0, 0], sizes = [1, 1, 1, 8], strides = [1, 1, 1, 1]} : vector<3x3x1x8xf32> to vector<1x1x1x8xf32>
    %27 = vector.shape_cast %26 : vector<1x1x1x8xf32> to vector<1x8xf32>
    %28 = vector.broadcast %27 : vector<1x8xf32> to vector<64x8xf32>
    %29 = arith.mulf %25, %28 : vector<64x8xf32>
    %30 = arith.addf %22, %29 : vector<64x8xf32>
    %cst_27 = arith.constant 0.000000e+00 : f32
    %31 = vector.broadcast %cst_27 : f32 to vector<8x8xf32>
    %32 = vector.extract_strided_slice %9 {offsets = [0, 0], sizes = [56, 8], strides = [1, 1]} : vector<64x8xf32> to vector<56x8xf32>
    %33 = tpu.concatenate %31, %32 in 0 : vector<8x8xf32>, vector<56x8xf32> -> vector<64x8xf32>
    %34 = vector.extract_strided_slice %10 {offsets = [0, 2, 0, 0], sizes = [1, 1, 1, 8], strides = [1, 1, 1, 1]} : vector<3x3x1x8xf32> to vector<1x1x1x8xf32>
    %35 = vector.shape_cast %34 : vector<1x1x1x8xf32> to vector<1x8xf32>
    %36 = vector.broadcast %35 : vector<1x8xf32> to vector<64x8xf32>
    %37 = arith.mulf %33, %36 : vector<64x8xf32>
    %38 = arith.addf %30, %37 : vector<64x8xf32>
    %cst_28 = arith.constant 0.000000e+00 : f32
    %39 = vector.broadcast %cst_28 : f32 to vector<1x8xf32>
    %40 = vector.extract_strided_slice %5 {offsets = [0, 0], sizes = [63, 8], strides = [1, 1]} : vector<64x8xf32> to vector<63x8xf32>
    %41 = tpu.concatenate %39, %40 in 0 : vector<1x8xf32>, vector<63x8xf32> -> vector<64x8xf32>
    %42 = vector.broadcast %0 : vector<64x1xf32> to vector<64x8xf32>
    %43 = arith.mulf %41, %42 : vector<64x8xf32>
    %44 = vector.extract_strided_slice %10 {offsets = [1, 0, 0, 0], sizes = [1, 1, 1, 8], strides = [1, 1, 1, 1]} : vector<3x3x1x8xf32> to vector<1x1x1x8xf32>
    %45 = vector.shape_cast %44 : vector<1x1x1x8xf32> to vector<1x8xf32>
    %46 = vector.broadcast %45 : vector<1x8xf32> to vector<64x8xf32>
    %47 = arith.mulf %43, %46 : vector<64x8xf32>
    %48 = arith.addf %38, %47 : vector<64x8xf32>
    %49 = vector.extract_strided_slice %10 {offsets = [1, 1, 0, 0], sizes = [1, 1, 1, 8], strides = [1, 1, 1, 1]} : vector<3x3x1x8xf32> to vector<1x1x1x8xf32>
    %50 = vector.shape_cast %49 : vector<1x1x1x8xf32> to vector<1x8xf32>
    %51 = vector.broadcast %50 : vector<1x8xf32> to vector<64x8xf32>
    %52 = arith.mulf %3, %51 : vector<64x8xf32>
    %53 = arith.addf %48, %52 : vector<64x8xf32>
    %54 = vector.extract_strided_slice %10 {offsets = [1, 2, 0, 0], sizes = [1, 1, 1, 8], strides = [1, 1, 1, 1]} : vector<3x3x1x8xf32> to vector<1x1x1x8xf32>
    %55 = vector.shape_cast %54 : vector<1x1x1x8xf32> to vector<1x8xf32>
    %56 = vector.broadcast %55 : vector<1x8xf32> to vector<64x8xf32>
    %57 = arith.mulf %5, %56 : vector<64x8xf32>
    %58 = arith.addf %53, %57 : vector<64x8xf32>
    %cst_29 = arith.constant 0.000000e+00 : f32
    %59 = vector.broadcast %cst_29 : f32 to vector<1x8xf32>
    %60 = vector.extract_strided_slice %9 {offsets = [0, 0], sizes = [63, 8], strides = [1, 1]} : vector<64x8xf32> to vector<63x8xf32>
    %61 = tpu.concatenate %59, %60 in 0 : vector<1x8xf32>, vector<63x8xf32> -> vector<64x8xf32>
    %62 = vector.broadcast %0 : vector<64x1xf32> to vector<64x8xf32>
    %63 = arith.mulf %61, %62 : vector<64x8xf32>
    %64 = vector.extract_strided_slice %10 {offsets = [2, 0, 0, 0], sizes = [1, 1, 1, 8], strides = [1, 1, 1, 1]} : vector<3x3x1x8xf32> to vector<1x1x1x8xf32>
    %65 = vector.shape_cast %64 : vector<1x1x1x8xf32> to vector<1x8xf32>
    %66 = vector.broadcast %65 : vector<1x8xf32> to vector<64x8xf32>
    %67 = arith.mulf %63, %66 : vector<64x8xf32>
    %68 = arith.addf %58, %67 : vector<64x8xf32>
    %69 = vector.extract_strided_slice %10 {offsets = [2, 1, 0, 0], sizes = [1, 1, 1, 8], strides = [1, 1, 1, 1]} : vector<3x3x1x8xf32> to vector<1x1x1x8xf32>
    %70 = vector.shape_cast %69 : vector<1x1x1x8xf32> to vector<1x8xf32>
    %71 = vector.broadcast %70 : vector<1x8xf32> to vector<64x8xf32>
    %72 = arith.mulf %7, %71 : vector<64x8xf32>
    %73 = arith.addf %68, %72 : vector<64x8xf32>
    %74 = vector.extract_strided_slice %10 {offsets = [2, 2, 0, 0], sizes = [1, 1, 1, 8], strides = [1, 1, 1, 1]} : vector<3x3x1x8xf32> to vector<1x1x1x8xf32>
    %75 = vector.shape_cast %74 : vector<1x1x1x8xf32> to vector<1x8xf32>
    %76 = vector.broadcast %75 : vector<1x8xf32> to vector<64x8xf32>
    %77 = arith.mulf %9, %76 : vector<64x8xf32>
    %78 = arith.addf %73, %77 : vector<64x8xf32>
    %79 = vector.broadcast %11 : vector<1x8xf32> to vector<64x8xf32>
    %80 = arith.addf %78, %79 : vector<64x8xf32>
    %cst_30 = arith.constant 0.000000e+00 : f32
    %81 = vector.broadcast %cst_30 : f32 to vector<64x8xf32>
    %82 = arith.maximumf %80, %81 : vector<64x8xf32>
    %83 = vector.broadcast %12 : vector<1x8xf32> to vector<64x8xf32>
    %84 = arith.mulf %82, %83 : vector<64x8xf32>
    %85 = vector.broadcast %13 : vector<1x8xf32> to vector<64x8xf32>
    %86 = arith.addf %84, %85 : vector<64x8xf32>
    %87 = vector.extract_strided_slice %10 {offsets = [0, 0, 0, 0], sizes = [1, 1, 1, 8], strides = [1, 1, 1, 1]} : vector<3x3x1x8xf32> to vector<1x1x1x8xf32>
    %88 = vector.shape_cast %87 : vector<1x1x1x8xf32> to vector<1x8xf32>
    %89 = vector.broadcast %88 : vector<1x8xf32> to vector<64x8xf32>
    %90 = arith.mulf %25, %89 : vector<64x8xf32>
    %91 = vector.extract_strided_slice %10 {offsets = [0, 1, 0, 0], sizes = [1, 1, 1, 8], strides = [1, 1, 1, 1]} : vector<3x3x1x8xf32> to vector<1x1x1x8xf32>
    %92 = vector.shape_cast %91 : vector<1x1x1x8xf32> to vector<1x8xf32>
    %93 = vector.broadcast %92 : vector<1x8xf32> to vector<64x8xf32>
    %94 = arith.mulf %33, %93 : vector<64x8xf32>
    %95 = arith.addf %90, %94 : vector<64x8xf32>
    %cst_31 = arith.constant 0.000000e+00 : f32
    %96 = vector.broadcast %cst_31 : f32 to vector<7x8xf32>
    %97 = vector.extract_strided_slice %7 {offsets = [0, 0], sizes = [57, 8], strides = [1, 1]} : vector<64x8xf32> to vector<57x8xf32>
    %98 = tpu.concatenate %96, %97 in 0 : vector<7x8xf32>, vector<57x8xf32> -> vector<64x8xf32>
    %99 = vector.broadcast %1 : vector<64x1xf32> to vector<64x8xf32>
    %100 = arith.mulf %98, %99 : vector<64x8xf32>
    %101 = vector.extract_strided_slice %10 {offsets = [0, 2, 0, 0], sizes = [1, 1, 1, 8], strides = [1, 1, 1, 1]} : vector<3x3x1x8xf32> to vector<1x1x1x8xf32>
    %102 = vector.shape_cast %101 : vector<1x1x1x8xf32> to vector<1x8xf32>
    %103 = vector.broadcast %102 : vector<1x8xf32> to vector<64x8xf32>
    %104 = arith.mulf %100, %103 : vector<64x8xf32>
    %105 = arith.addf %95, %104 : vector<64x8xf32>
    %106 = vector.extract_strided_slice %10 {offsets = [1, 0, 0, 0], sizes = [1, 1, 1, 8], strides = [1, 1, 1, 1]} : vector<3x3x1x8xf32> to vector<1x1x1x8xf32>
    %107 = vector.shape_cast %106 : vector<1x1x1x8xf32> to vector<1x8xf32>
    %108 = vector.broadcast %107 : vector<1x8xf32> to vector<64x8xf32>
    %109 = arith.mulf %3, %108 : vector<64x8xf32>
    %110 = arith.addf %105, %109 : vector<64x8xf32>
    %111 = vector.extract_strided_slice %10 {offsets = [1, 1, 0, 0], sizes = [1, 1, 1, 8], strides = [1, 1, 1, 1]} : vector<3x3x1x8xf32> to vector<1x1x1x8xf32>
    %112 = vector.shape_cast %111 : vector<1x1x1x8xf32> to vector<1x8xf32>
    %113 = vector.broadcast %112 : vector<1x8xf32> to vector<64x8xf32>
    %114 = arith.mulf %5, %113 : vector<64x8xf32>
    %115 = arith.addf %110, %114 : vector<64x8xf32>
    %cst_32 = arith.constant 0.000000e+00 : f32
    %116 = vector.broadcast %cst_32 : f32 to vector<1x8xf32>
    %117 = vector.extract_strided_slice %3 {offsets = [1, 0], sizes = [63, 8], strides = [1, 1]} : vector<64x8xf32> to vector<63x8xf32>
    %118 = tpu.concatenate %117, %116 in 0 : vector<63x8xf32>, vector<1x8xf32> -> vector<64x8xf32>
    %119 = vector.broadcast %1 : vector<64x1xf32> to vector<64x8xf32>
    %120 = arith.mulf %118, %119 : vector<64x8xf32>
    %121 = vector.extract_strided_slice %10 {offsets = [1, 2, 0, 0], sizes = [1, 1, 1, 8], strides = [1, 1, 1, 1]} : vector<3x3x1x8xf32> to vector<1x1x1x8xf32>
    %122 = vector.shape_cast %121 : vector<1x1x1x8xf32> to vector<1x8xf32>
    %123 = vector.broadcast %122 : vector<1x8xf32> to vector<64x8xf32>
    %124 = arith.mulf %120, %123 : vector<64x8xf32>
    %125 = arith.addf %115, %124 : vector<64x8xf32>
    %126 = vector.extract_strided_slice %10 {offsets = [2, 0, 0, 0], sizes = [1, 1, 1, 8], strides = [1, 1, 1, 1]} : vector<3x3x1x8xf32> to vector<1x1x1x8xf32>
    %127 = vector.shape_cast %126 : vector<1x1x1x8xf32> to vector<1x8xf32>
    %128 = vector.broadcast %127 : vector<1x8xf32> to vector<64x8xf32>
    %129 = arith.mulf %7, %128 : vector<64x8xf32>
    %130 = arith.addf %125, %129 : vector<64x8xf32>
    %131 = vector.extract_strided_slice %10 {offsets = [2, 1, 0, 0], sizes = [1, 1, 1, 8], strides = [1, 1, 1, 1]} : vector<3x3x1x8xf32> to vector<1x1x1x8xf32>
    %132 = vector.shape_cast %131 : vector<1x1x1x8xf32> to vector<1x8xf32>
    %133 = vector.broadcast %132 : vector<1x8xf32> to vector<64x8xf32>
    %134 = arith.mulf %9, %133 : vector<64x8xf32>
    %135 = arith.addf %130, %134 : vector<64x8xf32>
    %cst_33 = arith.constant 0.000000e+00 : f32
    %136 = vector.broadcast %cst_33 : f32 to vector<1x8xf32>
    %137 = vector.extract_strided_slice %7 {offsets = [1, 0], sizes = [63, 8], strides = [1, 1]} : vector<64x8xf32> to vector<63x8xf32>
    %138 = tpu.concatenate %137, %136 in 0 : vector<63x8xf32>, vector<1x8xf32> -> vector<64x8xf32>
    %139 = vector.broadcast %1 : vector<64x1xf32> to vector<64x8xf32>
    %140 = arith.mulf %138, %139 : vector<64x8xf32>
    %141 = vector.extract_strided_slice %10 {offsets = [2, 2, 0, 0], sizes = [1, 1, 1, 8], strides = [1, 1, 1, 1]} : vector<3x3x1x8xf32> to vector<1x1x1x8xf32>
    %142 = vector.shape_cast %141 : vector<1x1x1x8xf32> to vector<1x8xf32>
    %143 = vector.broadcast %142 : vector<1x8xf32> to vector<64x8xf32>
    %144 = arith.mulf %140, %143 : vector<64x8xf32>
    %145 = arith.addf %135, %144 : vector<64x8xf32>
    %146 = vector.broadcast %11 : vector<1x8xf32> to vector<64x8xf32>
    %147 = arith.addf %145, %146 : vector<64x8xf32>
    %cst_34 = arith.constant 0.000000e+00 : f32
    %148 = vector.broadcast %cst_34 : f32 to vector<64x8xf32>
    %149 = arith.maximumf %147, %148 : vector<64x8xf32>
    %150 = vector.broadcast %12 : vector<1x8xf32> to vector<64x8xf32>
    %151 = arith.mulf %149, %150 : vector<64x8xf32>
    %152 = vector.broadcast %13 : vector<1x8xf32> to vector<64x8xf32>
    %153 = arith.addf %151, %152 : vector<64x8xf32>
    %154 = vector.extract_strided_slice %10 {offsets = [0, 0, 0, 0], sizes = [1, 1, 1, 8], strides = [1, 1, 1, 1]} : vector<3x3x1x8xf32> to vector<1x1x1x8xf32>
    %155 = vector.shape_cast %154 : vector<1x1x1x8xf32> to vector<1x8xf32>
    %156 = vector.broadcast %155 : vector<1x8xf32> to vector<64x8xf32>
    %157 = arith.mulf %43, %156 : vector<64x8xf32>
    %158 = vector.extract_strided_slice %10 {offsets = [0, 1, 0, 0], sizes = [1, 1, 1, 8], strides = [1, 1, 1, 1]} : vector<3x3x1x8xf32> to vector<1x1x1x8xf32>
    %159 = vector.shape_cast %158 : vector<1x1x1x8xf32> to vector<1x8xf32>
    %160 = vector.broadcast %159 : vector<1x8xf32> to vector<64x8xf32>
    %161 = arith.mulf %3, %160 : vector<64x8xf32>
    %162 = arith.addf %157, %161 : vector<64x8xf32>
    %163 = vector.extract_strided_slice %10 {offsets = [0, 2, 0, 0], sizes = [1, 1, 1, 8], strides = [1, 1, 1, 1]} : vector<3x3x1x8xf32> to vector<1x1x1x8xf32>
    %164 = vector.shape_cast %163 : vector<1x1x1x8xf32> to vector<1x8xf32>
    %165 = vector.broadcast %164 : vector<1x8xf32> to vector<64x8xf32>
    %166 = arith.mulf %5, %165 : vector<64x8xf32>
    %167 = arith.addf %162, %166 : vector<64x8xf32>
    %168 = vector.extract_strided_slice %10 {offsets = [1, 0, 0, 0], sizes = [1, 1, 1, 8], strides = [1, 1, 1, 1]} : vector<3x3x1x8xf32> to vector<1x1x1x8xf32>
    %169 = vector.shape_cast %168 : vector<1x1x1x8xf32> to vector<1x8xf32>
    %170 = vector.broadcast %169 : vector<1x8xf32> to vector<64x8xf32>
    %171 = arith.mulf %63, %170 : vector<64x8xf32>
    %172 = arith.addf %167, %171 : vector<64x8xf32>
    %173 = vector.extract_strided_slice %10 {offsets = [1, 1, 0, 0], sizes = [1, 1, 1, 8], strides = [1, 1, 1, 1]} : vector<3x3x1x8xf32> to vector<1x1x1x8xf32>
    %174 = vector.shape_cast %173 : vector<1x1x1x8xf32> to vector<1x8xf32>
    %175 = vector.broadcast %174 : vector<1x8xf32> to vector<64x8xf32>
    %176 = arith.mulf %7, %175 : vector<64x8xf32>
    %177 = arith.addf %172, %176 : vector<64x8xf32>
    %178 = vector.extract_strided_slice %10 {offsets = [1, 2, 0, 0], sizes = [1, 1, 1, 8], strides = [1, 1, 1, 1]} : vector<3x3x1x8xf32> to vector<1x1x1x8xf32>
    %179 = vector.shape_cast %178 : vector<1x1x1x8xf32> to vector<1x8xf32>
    %180 = vector.broadcast %179 : vector<1x8xf32> to vector<64x8xf32>
    %181 = arith.mulf %9, %180 : vector<64x8xf32>
    %182 = arith.addf %177, %181 : vector<64x8xf32>
    %cst_35 = arith.constant 0.000000e+00 : f32
    %183 = vector.broadcast %cst_35 : f32 to vector<7x8xf32>
    %184 = vector.extract_strided_slice %5 {offsets = [7, 0], sizes = [57, 8], strides = [1, 1]} : vector<64x8xf32> to vector<57x8xf32>
    %185 = tpu.concatenate %184, %183 in 0 : vector<57x8xf32>, vector<7x8xf32> -> vector<64x8xf32>
    %186 = vector.broadcast %0 : vector<64x1xf32> to vector<64x8xf32>
    %187 = arith.mulf %185, %186 : vector<64x8xf32>
    %188 = vector.extract_strided_slice %10 {offsets = [2, 0, 0, 0], sizes = [1, 1, 1, 8], strides = [1, 1, 1, 1]} : vector<3x3x1x8xf32> to vector<1x1x1x8xf32>
    %189 = vector.shape_cast %188 : vector<1x1x1x8xf32> to vector<1x8xf32>
    %190 = vector.broadcast %189 : vector<1x8xf32> to vector<64x8xf32>
    %191 = arith.mulf %187, %190 : vector<64x8xf32>
    %192 = arith.addf %182, %191 : vector<64x8xf32>
    %cst_36 = arith.constant 0.000000e+00 : f32
    %193 = vector.broadcast %cst_36 : f32 to vector<8x8xf32>
    %194 = vector.extract_strided_slice %3 {offsets = [8, 0], sizes = [56, 8], strides = [1, 1]} : vector<64x8xf32> to vector<56x8xf32>
    %195 = tpu.concatenate %194, %193 in 0 : vector<56x8xf32>, vector<8x8xf32> -> vector<64x8xf32>
    %196 = vector.extract_strided_slice %10 {offsets = [2, 1, 0, 0], sizes = [1, 1, 1, 8], strides = [1, 1, 1, 1]} : vector<3x3x1x8xf32> to vector<1x1x1x8xf32>
    %197 = vector.shape_cast %196 : vector<1x1x1x8xf32> to vector<1x8xf32>
    %198 = vector.broadcast %197 : vector<1x8xf32> to vector<64x8xf32>
    %199 = arith.mulf %195, %198 : vector<64x8xf32>
    %200 = arith.addf %192, %199 : vector<64x8xf32>
    %cst_37 = arith.constant 0.000000e+00 : f32
    %201 = vector.broadcast %cst_37 : f32 to vector<8x8xf32>
    %202 = vector.extract_strided_slice %5 {offsets = [8, 0], sizes = [56, 8], strides = [1, 1]} : vector<64x8xf32> to vector<56x8xf32>
    %203 = tpu.concatenate %202, %201 in 0 : vector<56x8xf32>, vector<8x8xf32> -> vector<64x8xf32>
    %204 = vector.extract_strided_slice %10 {offsets = [2, 2, 0, 0], sizes = [1, 1, 1, 8], strides = [1, 1, 1, 1]} : vector<3x3x1x8xf32> to vector<1x1x1x8xf32>
    %205 = vector.shape_cast %204 : vector<1x1x1x8xf32> to vector<1x8xf32>
    %206 = vector.broadcast %205 : vector<1x8xf32> to vector<64x8xf32>
    %207 = arith.mulf %203, %206 : vector<64x8xf32>
    %208 = arith.addf %200, %207 : vector<64x8xf32>
    %209 = vector.broadcast %11 : vector<1x8xf32> to vector<64x8xf32>
    %210 = arith.addf %208, %209 : vector<64x8xf32>
    %cst_38 = arith.constant 0.000000e+00 : f32
    %211 = vector.broadcast %cst_38 : f32 to vector<64x8xf32>
    %212 = arith.maximumf %210, %211 : vector<64x8xf32>
    %213 = vector.broadcast %12 : vector<1x8xf32> to vector<64x8xf32>
    %214 = arith.mulf %212, %213 : vector<64x8xf32>
    %215 = vector.broadcast %13 : vector<1x8xf32> to vector<64x8xf32>
    %216 = arith.addf %214, %215 : vector<64x8xf32>
    %217 = vector.extract_strided_slice %10 {offsets = [0, 0, 0, 0], sizes = [1, 1, 1, 8], strides = [1, 1, 1, 1]} : vector<3x3x1x8xf32> to vector<1x1x1x8xf32>
    %218 = vector.shape_cast %217 : vector<1x1x1x8xf32> to vector<1x8xf32>
    %219 = vector.broadcast %218 : vector<1x8xf32> to vector<64x8xf32>
    %220 = arith.mulf %3, %219 : vector<64x8xf32>
    %221 = vector.extract_strided_slice %10 {offsets = [0, 1, 0, 0], sizes = [1, 1, 1, 8], strides = [1, 1, 1, 1]} : vector<3x3x1x8xf32> to vector<1x1x1x8xf32>
    %222 = vector.shape_cast %221 : vector<1x1x1x8xf32> to vector<1x8xf32>
    %223 = vector.broadcast %222 : vector<1x8xf32> to vector<64x8xf32>
    %224 = arith.mulf %5, %223 : vector<64x8xf32>
    %225 = arith.addf %220, %224 : vector<64x8xf32>
    %226 = vector.extract_strided_slice %10 {offsets = [0, 2, 0, 0], sizes = [1, 1, 1, 8], strides = [1, 1, 1, 1]} : vector<3x3x1x8xf32> to vector<1x1x1x8xf32>
    %227 = vector.shape_cast %226 : vector<1x1x1x8xf32> to vector<1x8xf32>
    %228 = vector.broadcast %227 : vector<1x8xf32> to vector<64x8xf32>
    %229 = arith.mulf %120, %228 : vector<64x8xf32>
    %230 = arith.addf %225, %229 : vector<64x8xf32>
    %231 = vector.extract_strided_slice %10 {offsets = [1, 0, 0, 0], sizes = [1, 1, 1, 8], strides = [1, 1, 1, 1]} : vector<3x3x1x8xf32> to vector<1x1x1x8xf32>
    %232 = vector.shape_cast %231 : vector<1x1x1x8xf32> to vector<1x8xf32>
    %233 = vector.broadcast %232 : vector<1x8xf32> to vector<64x8xf32>
    %234 = arith.mulf %7, %233 : vector<64x8xf32>
    %235 = arith.addf %230, %234 : vector<64x8xf32>
    %236 = vector.extract_strided_slice %10 {offsets = [1, 1, 0, 0], sizes = [1, 1, 1, 8], strides = [1, 1, 1, 1]} : vector<3x3x1x8xf32> to vector<1x1x1x8xf32>
    %237 = vector.shape_cast %236 : vector<1x1x1x8xf32> to vector<1x8xf32>
    %238 = vector.broadcast %237 : vector<1x8xf32> to vector<64x8xf32>
    %239 = arith.mulf %9, %238 : vector<64x8xf32>
    %240 = arith.addf %235, %239 : vector<64x8xf32>
    %241 = vector.extract_strided_slice %10 {offsets = [1, 2, 0, 0], sizes = [1, 1, 1, 8], strides = [1, 1, 1, 1]} : vector<3x3x1x8xf32> to vector<1x1x1x8xf32>
    %242 = vector.shape_cast %241 : vector<1x1x1x8xf32> to vector<1x8xf32>
    %243 = vector.broadcast %242 : vector<1x8xf32> to vector<64x8xf32>
    %244 = arith.mulf %140, %243 : vector<64x8xf32>
    %245 = arith.addf %240, %244 : vector<64x8xf32>
    %246 = vector.extract_strided_slice %10 {offsets = [2, 0, 0, 0], sizes = [1, 1, 1, 8], strides = [1, 1, 1, 1]} : vector<3x3x1x8xf32> to vector<1x1x1x8xf32>
    %247 = vector.shape_cast %246 : vector<1x1x1x8xf32> to vector<1x8xf32>
    %248 = vector.broadcast %247 : vector<1x8xf32> to vector<64x8xf32>
    %249 = arith.mulf %195, %248 : vector<64x8xf32>
    %250 = arith.addf %245, %249 : vector<64x8xf32>
    %251 = vector.extract_strided_slice %10 {offsets = [2, 1, 0, 0], sizes = [1, 1, 1, 8], strides = [1, 1, 1, 1]} : vector<3x3x1x8xf32> to vector<1x1x1x8xf32>
    %252 = vector.shape_cast %251 : vector<1x1x1x8xf32> to vector<1x8xf32>
    %253 = vector.broadcast %252 : vector<1x8xf32> to vector<64x8xf32>
    %254 = arith.mulf %203, %253 : vector<64x8xf32>
    %255 = arith.addf %250, %254 : vector<64x8xf32>
    %cst_39 = arith.constant 0.000000e+00 : f32
    %256 = vector.broadcast %cst_39 : f32 to vector<9x8xf32>
    %257 = vector.extract_strided_slice %3 {offsets = [9, 0], sizes = [55, 8], strides = [1, 1]} : vector<64x8xf32> to vector<55x8xf32>
    %258 = tpu.concatenate %257, %256 in 0 : vector<55x8xf32>, vector<9x8xf32> -> vector<64x8xf32>
    %259 = vector.broadcast %1 : vector<64x1xf32> to vector<64x8xf32>
    %260 = arith.mulf %258, %259 : vector<64x8xf32>
    %261 = vector.extract_strided_slice %10 {offsets = [2, 2, 0, 0], sizes = [1, 1, 1, 8], strides = [1, 1, 1, 1]} : vector<3x3x1x8xf32> to vector<1x1x1x8xf32>
    %262 = vector.shape_cast %261 : vector<1x1x1x8xf32> to vector<1x8xf32>
    %263 = vector.broadcast %262 : vector<1x8xf32> to vector<64x8xf32>
    %264 = arith.mulf %260, %263 : vector<64x8xf32>
    %265 = arith.addf %255, %264 : vector<64x8xf32>
    %266 = vector.broadcast %11 : vector<1x8xf32> to vector<64x8xf32>
    %267 = arith.addf %265, %266 : vector<64x8xf32>
    %cst_40 = arith.constant 0.000000e+00 : f32
    %268 = vector.broadcast %cst_40 : f32 to vector<64x8xf32>
    %269 = arith.maximumf %267, %268 : vector<64x8xf32>
    %270 = vector.broadcast %12 : vector<1x8xf32> to vector<64x8xf32>
    %271 = arith.mulf %269, %270 : vector<64x8xf32>
    %272 = vector.broadcast %13 : vector<1x8xf32> to vector<64x8xf32>
    %273 = arith.addf %271, %272 : vector<64x8xf32>
    %cst_41 = arith.constant 5.000000e-01 : f32
    %274 = vector.broadcast %cst_41 : f32 to vector<64x8xf32>
    %275 = arith.mulf %274, %86 : vector<64x8xf32>
    %cst_42 = arith.constant 5.000000e-01 : f32
    %276 = vector.broadcast %cst_42 : f32 to vector<64x8xf32>
    %277 = arith.mulf %276, %153 : vector<64x8xf32>
    %278 = arith.addf %275, %277 : vector<64x8xf32>
    %cst_43 = arith.constant 5.000000e-01 : f32
    %279 = vector.broadcast %cst_43 : f32 to vector<64x8xf32>
    %280 = arith.mulf %279, %216 : vector<64x8xf32>
    %281 = arith.addf %278, %280 : vector<64x8xf32>
    %cst_44 = arith.constant 5.000000e-01 : f32
    %282 = vector.broadcast %cst_44 : f32 to vector<64x8xf32>
    %283 = arith.mulf %282, %273 : vector<64x8xf32>
    %284 = arith.addf %281, %283 : vector<64x8xf32>
    %cst_45 = arith.constant 5.000000e-01 : f32
    %285 = vector.broadcast %cst_45 : f32 to vector<64x8xf32>
    %286 = arith.mulf %285, %86 : vector<64x8xf32>
    %cst_46 = arith.constant 5.000000e-01 : f32
    %287 = vector.broadcast %cst_46 : f32 to vector<64x8xf32>
    %288 = arith.mulf %287, %153 : vector<64x8xf32>
    %289 = arith.addf %286, %288 : vector<64x8xf32>
    %cst_47 = arith.constant -5.000000e-01 : f32
    %290 = vector.broadcast %cst_47 : f32 to vector<64x8xf32>
    %291 = arith.mulf %290, %216 : vector<64x8xf32>
    %292 = arith.addf %289, %291 : vector<64x8xf32>
    %cst_48 = arith.constant -5.000000e-01 : f32
    %293 = vector.broadcast %cst_48 : f32 to vector<64x8xf32>
    %294 = arith.mulf %293, %273 : vector<64x8xf32>
    %295 = arith.addf %292, %294 : vector<64x8xf32>
    %c0_49 = arith.constant 0 : index
    %c0_50 = arith.constant 0 : index
    %c0_51 = arith.constant 0 : index
    %c0_52 = arith.constant 0 : index
    %296 = vector.load %arg8[%c0_49, %c0_50, %c0_51, %c0_52] : memref<3x3x1x8xf32, #tpu.memory_space<vmem>>, vector<3x3x1x8xf32>
    %297 = vector.extract_strided_slice %296 {offsets = [1, 1, 0, 0], sizes = [1, 1, 1, 8], strides = [1, 1, 1, 1]} : vector<3x3x1x8xf32> to vector<1x1x1x8xf32>
    %298 = vector.shape_cast %297 : vector<1x1x1x8xf32> to vector<1x8xf32>
    %299 = vector.broadcast %298 : vector<1x8xf32> to vector<64x8xf32>
    %300 = arith.mulf %284, %299 : vector<64x8xf32>
    %cst_53 = arith.constant 0.000000e+00 : f32
    %301 = vector.broadcast %cst_53 : f32 to vector<9x8xf32>
    %302 = vector.extract_strided_slice %284 {offsets = [0, 0], sizes = [55, 8], strides = [1, 1]} : vector<64x8xf32> to vector<55x8xf32>
    %303 = tpu.concatenate %301, %302 in 0 : vector<9x8xf32>, vector<55x8xf32> -> vector<64x8xf32>
    %304 = vector.broadcast %0 : vector<64x1xf32> to vector<64x8xf32>
    %305 = arith.mulf %303, %304 : vector<64x8xf32>
    %306 = vector.extract_strided_slice %296 {offsets = [0, 0, 0, 0], sizes = [1, 1, 1, 8], strides = [1, 1, 1, 1]} : vector<3x3x1x8xf32> to vector<1x1x1x8xf32>
    %307 = vector.shape_cast %306 : vector<1x1x1x8xf32> to vector<1x8xf32>
    %308 = vector.broadcast %307 : vector<1x8xf32> to vector<64x8xf32>
    %309 = arith.mulf %305, %308 : vector<64x8xf32>
    %310 = arith.addf %300, %309 : vector<64x8xf32>
    %cst_54 = arith.constant 0.000000e+00 : f32
    %311 = vector.broadcast %cst_54 : f32 to vector<8x8xf32>
    %312 = vector.extract_strided_slice %284 {offsets = [0, 0], sizes = [56, 8], strides = [1, 1]} : vector<64x8xf32> to vector<56x8xf32>
    %313 = tpu.concatenate %311, %312 in 0 : vector<8x8xf32>, vector<56x8xf32> -> vector<64x8xf32>
    %314 = vector.extract_strided_slice %296 {offsets = [0, 1, 0, 0], sizes = [1, 1, 1, 8], strides = [1, 1, 1, 1]} : vector<3x3x1x8xf32> to vector<1x1x1x8xf32>
    %315 = vector.shape_cast %314 : vector<1x1x1x8xf32> to vector<1x8xf32>
    %316 = vector.broadcast %315 : vector<1x8xf32> to vector<64x8xf32>
    %317 = arith.mulf %313, %316 : vector<64x8xf32>
    %318 = arith.addf %310, %317 : vector<64x8xf32>
    %cst_55 = arith.constant 0.000000e+00 : f32
    %319 = vector.broadcast %cst_55 : f32 to vector<7x8xf32>
    %320 = vector.extract_strided_slice %284 {offsets = [0, 0], sizes = [57, 8], strides = [1, 1]} : vector<64x8xf32> to vector<57x8xf32>
    %321 = tpu.concatenate %319, %320 in 0 : vector<7x8xf32>, vector<57x8xf32> -> vector<64x8xf32>
    %322 = vector.broadcast %1 : vector<64x1xf32> to vector<64x8xf32>
    %323 = arith.mulf %321, %322 : vector<64x8xf32>
    %324 = vector.extract_strided_slice %296 {offsets = [0, 2, 0, 0], sizes = [1, 1, 1, 8], strides = [1, 1, 1, 1]} : vector<3x3x1x8xf32> to vector<1x1x1x8xf32>
    %325 = vector.shape_cast %324 : vector<1x1x1x8xf32> to vector<1x8xf32>
    %326 = vector.broadcast %325 : vector<1x8xf32> to vector<64x8xf32>
    %327 = arith.mulf %323, %326 : vector<64x8xf32>
    %328 = arith.addf %318, %327 : vector<64x8xf32>
    %cst_56 = arith.constant 0.000000e+00 : f32
    %329 = vector.broadcast %cst_56 : f32 to vector<1x8xf32>
    %330 = vector.extract_strided_slice %284 {offsets = [0, 0], sizes = [63, 8], strides = [1, 1]} : vector<64x8xf32> to vector<63x8xf32>
    %331 = tpu.concatenate %329, %330 in 0 : vector<1x8xf32>, vector<63x8xf32> -> vector<64x8xf32>
    %332 = vector.broadcast %0 : vector<64x1xf32> to vector<64x8xf32>
    %333 = arith.mulf %331, %332 : vector<64x8xf32>
    %334 = vector.extract_strided_slice %296 {offsets = [1, 0, 0, 0], sizes = [1, 1, 1, 8], strides = [1, 1, 1, 1]} : vector<3x3x1x8xf32> to vector<1x1x1x8xf32>
    %335 = vector.shape_cast %334 : vector<1x1x1x8xf32> to vector<1x8xf32>
    %336 = vector.broadcast %335 : vector<1x8xf32> to vector<64x8xf32>
    %337 = arith.mulf %333, %336 : vector<64x8xf32>
    %338 = arith.addf %328, %337 : vector<64x8xf32>
    %cst_57 = arith.constant 0.000000e+00 : f32
    %339 = vector.broadcast %cst_57 : f32 to vector<1x8xf32>
    %340 = vector.extract_strided_slice %284 {offsets = [1, 0], sizes = [63, 8], strides = [1, 1]} : vector<64x8xf32> to vector<63x8xf32>
    %341 = tpu.concatenate %340, %339 in 0 : vector<63x8xf32>, vector<1x8xf32> -> vector<64x8xf32>
    %342 = vector.broadcast %1 : vector<64x1xf32> to vector<64x8xf32>
    %343 = arith.mulf %341, %342 : vector<64x8xf32>
    %344 = vector.extract_strided_slice %296 {offsets = [1, 2, 0, 0], sizes = [1, 1, 1, 8], strides = [1, 1, 1, 1]} : vector<3x3x1x8xf32> to vector<1x1x1x8xf32>
    %345 = vector.shape_cast %344 : vector<1x1x1x8xf32> to vector<1x8xf32>
    %346 = vector.broadcast %345 : vector<1x8xf32> to vector<64x8xf32>
    %347 = arith.mulf %343, %346 : vector<64x8xf32>
    %348 = arith.addf %338, %347 : vector<64x8xf32>
    %cst_58 = arith.constant 0.000000e+00 : f32
    %349 = vector.broadcast %cst_58 : f32 to vector<7x8xf32>
    %350 = vector.extract_strided_slice %284 {offsets = [7, 0], sizes = [57, 8], strides = [1, 1]} : vector<64x8xf32> to vector<57x8xf32>
    %351 = tpu.concatenate %350, %349 in 0 : vector<57x8xf32>, vector<7x8xf32> -> vector<64x8xf32>
    %352 = vector.broadcast %0 : vector<64x1xf32> to vector<64x8xf32>
    %353 = arith.mulf %351, %352 : vector<64x8xf32>
    %354 = vector.extract_strided_slice %296 {offsets = [2, 0, 0, 0], sizes = [1, 1, 1, 8], strides = [1, 1, 1, 1]} : vector<3x3x1x8xf32> to vector<1x1x1x8xf32>
    %355 = vector.shape_cast %354 : vector<1x1x1x8xf32> to vector<1x8xf32>
    %356 = vector.broadcast %355 : vector<1x8xf32> to vector<64x8xf32>
    %357 = arith.mulf %353, %356 : vector<64x8xf32>
    %358 = arith.addf %348, %357 : vector<64x8xf32>
    %cst_59 = arith.constant 0.000000e+00 : f32
    %359 = vector.broadcast %cst_59 : f32 to vector<8x8xf32>
    %360 = vector.extract_strided_slice %284 {offsets = [8, 0], sizes = [56, 8], strides = [1, 1]} : vector<64x8xf32> to vector<56x8xf32>
    %361 = tpu.concatenate %360, %359 in 0 : vector<56x8xf32>, vector<8x8xf32> -> vector<64x8xf32>
    %362 = vector.extract_strided_slice %296 {offsets = [2, 1, 0, 0], sizes = [1, 1, 1, 8], strides = [1, 1, 1, 1]} : vector<3x3x1x8xf32> to vector<1x1x1x8xf32>
    %363 = vector.shape_cast %362 : vector<1x1x1x8xf32> to vector<1x8xf32>
    %364 = vector.broadcast %363 : vector<1x8xf32> to vector<64x8xf32>
    %365 = arith.mulf %361, %364 : vector<64x8xf32>
    %366 = arith.addf %358, %365 : vector<64x8xf32>
    %cst_60 = arith.constant 0.000000e+00 : f32
    %367 = vector.broadcast %cst_60 : f32 to vector<9x8xf32>
    %368 = vector.extract_strided_slice %284 {offsets = [9, 0], sizes = [55, 8], strides = [1, 1]} : vector<64x8xf32> to vector<55x8xf32>
    %369 = tpu.concatenate %368, %367 in 0 : vector<55x8xf32>, vector<9x8xf32> -> vector<64x8xf32>
    %370 = vector.broadcast %1 : vector<64x1xf32> to vector<64x8xf32>
    %371 = arith.mulf %369, %370 : vector<64x8xf32>
    %372 = vector.extract_strided_slice %296 {offsets = [2, 2, 0, 0], sizes = [1, 1, 1, 8], strides = [1, 1, 1, 1]} : vector<3x3x1x8xf32> to vector<1x1x1x8xf32>
    %373 = vector.shape_cast %372 : vector<1x1x1x8xf32> to vector<1x8xf32>
    %374 = vector.broadcast %373 : vector<1x8xf32> to vector<64x8xf32>
    %375 = arith.mulf %371, %374 : vector<64x8xf32>
    %376 = arith.addf %366, %375 : vector<64x8xf32>
    %377 = arith.truncf %376 : vector<64x8xf32> to vector<64x8xbf16>
    %c0_61 = arith.constant 0 : index
    %c0_62 = arith.constant 0 : index
    %378 = vector.load %arg9[%c0_61, %c0_62] : memref<8x8xbf16, #tpu.memory_space<vmem>>, vector<8x8xbf16>
    %cst_63 = arith.constant dense<0.000000e+00> : vector<64x8xf32>
    %379 = tpu.matmul %377, %378, %cst_63 {dimension_numbers = #tpu.dot_dimension_numbers<[1], [0], [0], [1], [0, 0, 1, 1], [], []>} : vector<64x8xbf16>, vector<8x8xbf16>, vector<64x8xf32> -> vector<64x8xf32>
    %c0_64 = arith.constant 0 : index
    %c0_65 = arith.constant 0 : index
    %380 = vector.load %arg10[%c0_64, %c0_65] : memref<1x8xf32, #tpu.memory_space<vmem>>, vector<1x8xf32>
    %381 = vector.broadcast %380 : vector<1x8xf32> to vector<64x8xf32>
    %382 = arith.addf %379, %381 : vector<64x8xf32>
    %c0_66 = arith.constant 0 : index
    %c0_67 = arith.constant 0 : index
    %c0_68 = arith.constant 0 : index
    %c0_69 = arith.constant 0 : index
    %383 = vector.load %arg11[%c0_66, %c0_67, %c0_68, %c0_69] : memref<3x3x1x8xf32, #tpu.memory_space<vmem>>, vector<3x3x1x8xf32>
    %384 = vector.extract_strided_slice %383 {offsets = [1, 1, 0, 0], sizes = [1, 1, 1, 8], strides = [1, 1, 1, 1]} : vector<3x3x1x8xf32> to vector<1x1x1x8xf32>
    %385 = vector.shape_cast %384 : vector<1x1x1x8xf32> to vector<1x8xf32>
    %386 = vector.broadcast %385 : vector<1x8xf32> to vector<64x8xf32>
    %387 = arith.mulf %295, %386 : vector<64x8xf32>
    %cst_70 = arith.constant 0.000000e+00 : f32
    %388 = vector.broadcast %cst_70 : f32 to vector<9x8xf32>
    %389 = vector.extract_strided_slice %295 {offsets = [0, 0], sizes = [55, 8], strides = [1, 1]} : vector<64x8xf32> to vector<55x8xf32>
    %390 = tpu.concatenate %388, %389 in 0 : vector<9x8xf32>, vector<55x8xf32> -> vector<64x8xf32>
    %391 = vector.broadcast %0 : vector<64x1xf32> to vector<64x8xf32>
    %392 = arith.mulf %390, %391 : vector<64x8xf32>
    %393 = vector.extract_strided_slice %383 {offsets = [0, 0, 0, 0], sizes = [1, 1, 1, 8], strides = [1, 1, 1, 1]} : vector<3x3x1x8xf32> to vector<1x1x1x8xf32>
    %394 = vector.shape_cast %393 : vector<1x1x1x8xf32> to vector<1x8xf32>
    %395 = vector.broadcast %394 : vector<1x8xf32> to vector<64x8xf32>
    %396 = arith.mulf %392, %395 : vector<64x8xf32>
    %397 = arith.addf %387, %396 : vector<64x8xf32>
    %cst_71 = arith.constant 0.000000e+00 : f32
    %398 = vector.broadcast %cst_71 : f32 to vector<8x8xf32>
    %399 = vector.extract_strided_slice %295 {offsets = [0, 0], sizes = [56, 8], strides = [1, 1]} : vector<64x8xf32> to vector<56x8xf32>
    %400 = tpu.concatenate %398, %399 in 0 : vector<8x8xf32>, vector<56x8xf32> -> vector<64x8xf32>
    %401 = vector.extract_strided_slice %383 {offsets = [0, 1, 0, 0], sizes = [1, 1, 1, 8], strides = [1, 1, 1, 1]} : vector<3x3x1x8xf32> to vector<1x1x1x8xf32>
    %402 = vector.shape_cast %401 : vector<1x1x1x8xf32> to vector<1x8xf32>
    %403 = vector.broadcast %402 : vector<1x8xf32> to vector<64x8xf32>
    %404 = arith.mulf %400, %403 : vector<64x8xf32>
    %405 = arith.addf %397, %404 : vector<64x8xf32>
    %cst_72 = arith.constant 0.000000e+00 : f32
    %406 = vector.broadcast %cst_72 : f32 to vector<7x8xf32>
    %407 = vector.extract_strided_slice %295 {offsets = [0, 0], sizes = [57, 8], strides = [1, 1]} : vector<64x8xf32> to vector<57x8xf32>
    %408 = tpu.concatenate %406, %407 in 0 : vector<7x8xf32>, vector<57x8xf32> -> vector<64x8xf32>
    %409 = vector.broadcast %1 : vector<64x1xf32> to vector<64x8xf32>
    %410 = arith.mulf %408, %409 : vector<64x8xf32>
    %411 = vector.extract_strided_slice %383 {offsets = [0, 2, 0, 0], sizes = [1, 1, 1, 8], strides = [1, 1, 1, 1]} : vector<3x3x1x8xf32> to vector<1x1x1x8xf32>
    %412 = vector.shape_cast %411 : vector<1x1x1x8xf32> to vector<1x8xf32>
    %413 = vector.broadcast %412 : vector<1x8xf32> to vector<64x8xf32>
    %414 = arith.mulf %410, %413 : vector<64x8xf32>
    %415 = arith.addf %405, %414 : vector<64x8xf32>
    %cst_73 = arith.constant 0.000000e+00 : f32
    %416 = vector.broadcast %cst_73 : f32 to vector<1x8xf32>
    %417 = vector.extract_strided_slice %295 {offsets = [0, 0], sizes = [63, 8], strides = [1, 1]} : vector<64x8xf32> to vector<63x8xf32>
    %418 = tpu.concatenate %416, %417 in 0 : vector<1x8xf32>, vector<63x8xf32> -> vector<64x8xf32>
    %419 = vector.broadcast %0 : vector<64x1xf32> to vector<64x8xf32>
    %420 = arith.mulf %418, %419 : vector<64x8xf32>
    %421 = vector.extract_strided_slice %383 {offsets = [1, 0, 0, 0], sizes = [1, 1, 1, 8], strides = [1, 1, 1, 1]} : vector<3x3x1x8xf32> to vector<1x1x1x8xf32>
    %422 = vector.shape_cast %421 : vector<1x1x1x8xf32> to vector<1x8xf32>
    %423 = vector.broadcast %422 : vector<1x8xf32> to vector<64x8xf32>
    %424 = arith.mulf %420, %423 : vector<64x8xf32>
    %425 = arith.addf %415, %424 : vector<64x8xf32>
    %cst_74 = arith.constant 0.000000e+00 : f32
    %426 = vector.broadcast %cst_74 : f32 to vector<1x8xf32>
    %427 = vector.extract_strided_slice %295 {offsets = [1, 0], sizes = [63, 8], strides = [1, 1]} : vector<64x8xf32> to vector<63x8xf32>
    %428 = tpu.concatenate %427, %426 in 0 : vector<63x8xf32>, vector<1x8xf32> -> vector<64x8xf32>
    %429 = vector.broadcast %1 : vector<64x1xf32> to vector<64x8xf32>
    %430 = arith.mulf %428, %429 : vector<64x8xf32>
    %431 = vector.extract_strided_slice %383 {offsets = [1, 2, 0, 0], sizes = [1, 1, 1, 8], strides = [1, 1, 1, 1]} : vector<3x3x1x8xf32> to vector<1x1x1x8xf32>
    %432 = vector.shape_cast %431 : vector<1x1x1x8xf32> to vector<1x8xf32>
    %433 = vector.broadcast %432 : vector<1x8xf32> to vector<64x8xf32>
    %434 = arith.mulf %430, %433 : vector<64x8xf32>
    %435 = arith.addf %425, %434 : vector<64x8xf32>
    %cst_75 = arith.constant 0.000000e+00 : f32
    %436 = vector.broadcast %cst_75 : f32 to vector<7x8xf32>
    %437 = vector.extract_strided_slice %295 {offsets = [7, 0], sizes = [57, 8], strides = [1, 1]} : vector<64x8xf32> to vector<57x8xf32>
    %438 = tpu.concatenate %437, %436 in 0 : vector<57x8xf32>, vector<7x8xf32> -> vector<64x8xf32>
    %439 = vector.broadcast %0 : vector<64x1xf32> to vector<64x8xf32>
    %440 = arith.mulf %438, %439 : vector<64x8xf32>
    %441 = vector.extract_strided_slice %383 {offsets = [2, 0, 0, 0], sizes = [1, 1, 1, 8], strides = [1, 1, 1, 1]} : vector<3x3x1x8xf32> to vector<1x1x1x8xf32>
    %442 = vector.shape_cast %441 : vector<1x1x1x8xf32> to vector<1x8xf32>
    %443 = vector.broadcast %442 : vector<1x8xf32> to vector<64x8xf32>
    %444 = arith.mulf %440, %443 : vector<64x8xf32>
    %445 = arith.addf %435, %444 : vector<64x8xf32>
    %cst_76 = arith.constant 0.000000e+00 : f32
    %446 = vector.broadcast %cst_76 : f32 to vector<8x8xf32>
    %447 = vector.extract_strided_slice %295 {offsets = [8, 0], sizes = [56, 8], strides = [1, 1]} : vector<64x8xf32> to vector<56x8xf32>
    %448 = tpu.concatenate %447, %446 in 0 : vector<56x8xf32>, vector<8x8xf32> -> vector<64x8xf32>
    %449 = vector.extract_strided_slice %383 {offsets = [2, 1, 0, 0], sizes = [1, 1, 1, 8], strides = [1, 1, 1, 1]} : vector<3x3x1x8xf32> to vector<1x1x1x8xf32>
    %450 = vector.shape_cast %449 : vector<1x1x1x8xf32> to vector<1x8xf32>
    %451 = vector.broadcast %450 : vector<1x8xf32> to vector<64x8xf32>
    %452 = arith.mulf %448, %451 : vector<64x8xf32>
    %453 = arith.addf %445, %452 : vector<64x8xf32>
    %cst_77 = arith.constant 0.000000e+00 : f32
    %454 = vector.broadcast %cst_77 : f32 to vector<9x8xf32>
    %455 = vector.extract_strided_slice %295 {offsets = [9, 0], sizes = [55, 8], strides = [1, 1]} : vector<64x8xf32> to vector<55x8xf32>
    %456 = tpu.concatenate %455, %454 in 0 : vector<55x8xf32>, vector<9x8xf32> -> vector<64x8xf32>
    %457 = vector.broadcast %1 : vector<64x1xf32> to vector<64x8xf32>
    %458 = arith.mulf %456, %457 : vector<64x8xf32>
    %459 = vector.extract_strided_slice %383 {offsets = [2, 2, 0, 0], sizes = [1, 1, 1, 8], strides = [1, 1, 1, 1]} : vector<3x3x1x8xf32> to vector<1x1x1x8xf32>
    %460 = vector.shape_cast %459 : vector<1x1x1x8xf32> to vector<1x8xf32>
    %461 = vector.broadcast %460 : vector<1x8xf32> to vector<64x8xf32>
    %462 = arith.mulf %458, %461 : vector<64x8xf32>
    %463 = arith.addf %453, %462 : vector<64x8xf32>
    %cst_78 = arith.constant 0.000000e+00 : f32
    %464 = vector.broadcast %cst_78 : f32 to vector<9x8xf32>
    %465 = vector.extract_strided_slice %463 {offsets = [0, 0], sizes = [55, 8], strides = [1, 1]} : vector<64x8xf32> to vector<55x8xf32>
    %466 = tpu.concatenate %464, %465 in 0 : vector<9x8xf32>, vector<55x8xf32> -> vector<64x8xf32>
    %467 = vector.broadcast %0 : vector<64x1xf32> to vector<64x8xf32>
    %468 = arith.mulf %466, %467 : vector<64x8xf32>
    %cst_79 = arith.constant 0.000000e+00 : f32
    %469 = vector.broadcast %cst_79 : f32 to vector<8x8xf32>
    %470 = vector.extract_strided_slice %463 {offsets = [0, 0], sizes = [56, 8], strides = [1, 1]} : vector<64x8xf32> to vector<56x8xf32>
    %471 = tpu.concatenate %469, %470 in 0 : vector<8x8xf32>, vector<56x8xf32> -> vector<64x8xf32>
    %cst_80 = arith.constant 0.000000e+00 : f32
    %472 = vector.broadcast %cst_80 : f32 to vector<7x8xf32>
    %473 = vector.extract_strided_slice %463 {offsets = [0, 0], sizes = [57, 8], strides = [1, 1]} : vector<64x8xf32> to vector<57x8xf32>
    %474 = tpu.concatenate %472, %473 in 0 : vector<7x8xf32>, vector<57x8xf32> -> vector<64x8xf32>
    %475 = vector.broadcast %1 : vector<64x1xf32> to vector<64x8xf32>
    %476 = arith.mulf %474, %475 : vector<64x8xf32>
    %cst_81 = arith.constant 0.000000e+00 : f32
    %477 = vector.broadcast %cst_81 : f32 to vector<1x8xf32>
    %478 = vector.extract_strided_slice %463 {offsets = [0, 0], sizes = [63, 8], strides = [1, 1]} : vector<64x8xf32> to vector<63x8xf32>
    %479 = tpu.concatenate %477, %478 in 0 : vector<1x8xf32>, vector<63x8xf32> -> vector<64x8xf32>
    %480 = vector.broadcast %0 : vector<64x1xf32> to vector<64x8xf32>
    %481 = arith.mulf %479, %480 : vector<64x8xf32>
    %cst_82 = arith.constant 0.000000e+00 : f32
    %482 = vector.broadcast %cst_82 : f32 to vector<1x8xf32>
    %483 = vector.extract_strided_slice %463 {offsets = [1, 0], sizes = [63, 8], strides = [1, 1]} : vector<64x8xf32> to vector<63x8xf32>
    %484 = tpu.concatenate %483, %482 in 0 : vector<63x8xf32>, vector<1x8xf32> -> vector<64x8xf32>
    %485 = vector.broadcast %1 : vector<64x1xf32> to vector<64x8xf32>
    %486 = arith.mulf %484, %485 : vector<64x8xf32>
    %cst_83 = arith.constant 0.000000e+00 : f32
    %487 = vector.broadcast %cst_83 : f32 to vector<7x8xf32>
    %488 = vector.extract_strided_slice %463 {offsets = [7, 0], sizes = [57, 8], strides = [1, 1]} : vector<64x8xf32> to vector<57x8xf32>
    %489 = tpu.concatenate %488, %487 in 0 : vector<57x8xf32>, vector<7x8xf32> -> vector<64x8xf32>
    %490 = vector.broadcast %0 : vector<64x1xf32> to vector<64x8xf32>
    %491 = arith.mulf %489, %490 : vector<64x8xf32>
    %cst_84 = arith.constant 0.000000e+00 : f32
    %492 = vector.broadcast %cst_84 : f32 to vector<8x8xf32>
    %493 = vector.extract_strided_slice %463 {offsets = [8, 0], sizes = [56, 8], strides = [1, 1]} : vector<64x8xf32> to vector<56x8xf32>
    %494 = tpu.concatenate %493, %492 in 0 : vector<56x8xf32>, vector<8x8xf32> -> vector<64x8xf32>
    %cst_85 = arith.constant 0.000000e+00 : f32
    %495 = vector.broadcast %cst_85 : f32 to vector<9x8xf32>
    %496 = vector.extract_strided_slice %463 {offsets = [9, 0], sizes = [55, 8], strides = [1, 1]} : vector<64x8xf32> to vector<55x8xf32>
    %497 = tpu.concatenate %496, %495 in 0 : vector<55x8xf32>, vector<9x8xf32> -> vector<64x8xf32>
    %498 = vector.broadcast %1 : vector<64x1xf32> to vector<64x8xf32>
    %499 = arith.mulf %497, %498 : vector<64x8xf32>
    %500 = tpu.concatenate %468, %471, %476, %481, %463, %486, %491, %494, %499 in 1 : vector<64x8xf32>, vector<64x8xf32>, vector<64x8xf32>, vector<64x8xf32>, vector<64x8xf32>, vector<64x8xf32>, vector<64x8xf32>, vector<64x8xf32>, vector<64x8xf32> -> vector<64x72xf32>
    %501 = arith.truncf %500 : vector<64x72xf32> to vector<64x72xbf16>
    %c0_86 = arith.constant 0 : index
    %c0_87 = arith.constant 0 : index
    %502 = vector.load %arg12[%c0_86, %c0_87] : memref<72x32xbf16, #tpu.memory_space<vmem>>, vector<72x32xbf16>
    %cst_88 = arith.constant dense<0.000000e+00> : vector<64x32xf32>
    %503 = tpu.matmul %501, %502, %cst_88 {dimension_numbers = #tpu.dot_dimension_numbers<[1], [0], [0], [1], [0, 0, 1, 1], [], []>} : vector<64x72xbf16>, vector<72x32xbf16>, vector<64x32xf32> -> vector<64x32xf32>
    %c0_89 = arith.constant 0 : index
    %c0_90 = arith.constant 0 : index
    %504 = vector.load %arg13[%c0_89, %c0_90] : memref<1x32xf32, #tpu.memory_space<vmem>>, vector<1x32xf32>
    %505 = vector.broadcast %504 : vector<1x32xf32> to vector<64x32xf32>
    %506 = arith.addf %503, %505 : vector<64x32xf32>
    %cst_91 = arith.constant 5.000000e-01 : f32
    %507 = vector.broadcast %cst_91 : f32 to vector<64x8xf32>
    %508 = arith.mulf %507, %382 : vector<64x8xf32>
    %509 = vector.extract_strided_slice %506 {offsets = [0, 0], sizes = [64, 8], strides = [1, 1]} : vector<64x32xf32> to vector<64x8xf32>
    %510 = arith.addf %508, %509 : vector<64x8xf32>
    %cst_92 = arith.constant 5.000000e-01 : f32
    %511 = vector.broadcast %cst_92 : f32 to vector<64x8xf32>
    %512 = arith.mulf %511, %382 : vector<64x8xf32>
    %513 = vector.extract_strided_slice %506 {offsets = [0, 8], sizes = [64, 8], strides = [1, 1]} : vector<64x32xf32> to vector<64x8xf32>
    %514 = arith.addf %512, %513 : vector<64x8xf32>
    %cst_93 = arith.constant 5.000000e-01 : f32
    %515 = vector.broadcast %cst_93 : f32 to vector<64x8xf32>
    %516 = arith.mulf %515, %382 : vector<64x8xf32>
    %517 = vector.extract_strided_slice %506 {offsets = [0, 16], sizes = [64, 8], strides = [1, 1]} : vector<64x32xf32> to vector<64x8xf32>
    %518 = arith.addf %516, %517 : vector<64x8xf32>
    %cst_94 = arith.constant 5.000000e-01 : f32
    %519 = vector.broadcast %cst_94 : f32 to vector<64x8xf32>
    %520 = arith.mulf %519, %382 : vector<64x8xf32>
    %521 = vector.extract_strided_slice %506 {offsets = [0, 24], sizes = [64, 8], strides = [1, 1]} : vector<64x32xf32> to vector<64x8xf32>
    %522 = arith.addf %520, %521 : vector<64x8xf32>
    %523 = tpu.concatenate %510, %514, %518, %522 in 0 : vector<64x8xf32>, vector<64x8xf32>, vector<64x8xf32>, vector<64x8xf32> -> vector<256x8xf32>
    %cst_95 = arith.constant 0.000000e+00 : f32
    %524 = vector.broadcast %cst_95 : f32 to vector<256x8xf32>
    %525 = arith.maximumf %523, %524 : vector<256x8xf32>
    %526 = arith.truncf %525 : vector<256x8xf32> to vector<256x8xbf16>
    %c0_96 = arith.constant 0 : index
    %c0_97 = arith.constant 0 : index
    %527 = vector.load %arg14[%c0_96, %c0_97] : memref<8x8xbf16, #tpu.memory_space<vmem>>, vector<8x8xbf16>
    %cst_98 = arith.constant dense<0.000000e+00> : vector<256x8xf32>
    %528 = tpu.matmul %526, %527, %cst_98 {dimension_numbers = #tpu.dot_dimension_numbers<[1], [0], [0], [1], [0, 0, 1, 1], [], []>} : vector<256x8xbf16>, vector<8x8xbf16>, vector<256x8xf32> -> vector<256x8xf32>
    %c0_99 = arith.constant 0 : index
    %c0_100 = arith.constant 0 : index
    %529 = vector.load %arg15[%c0_99, %c0_100] : memref<1x8xf32, #tpu.memory_space<vmem>>, vector<1x8xf32>
    %530 = vector.broadcast %529 : vector<1x8xf32> to vector<256x8xf32>
    %531 = arith.addf %528, %530 : vector<256x8xf32>
    %532 = vector.extract_strided_slice %531 {offsets = [0, 0], sizes = [64, 8], strides = [1, 1]} : vector<256x8xf32> to vector<64x8xf32>
    %c0_101 = arith.constant 0 : index
    %c0_102 = arith.constant 0 : index
    %c0_103 = arith.constant 0 : index
    %c0_104 = arith.constant 0 : index
    %533 = vector.load %arg16[%c0_101, %c0_102, %c0_103, %c0_104] : memref<1x4x64x8xf32, #tpu.memory_space<vmem>>, vector<1x1x64x8xf32>
    %534 = vector.shape_cast %533 : vector<1x1x64x8xf32> to vector<64x8xf32>
    %535 = vector.shape_cast %532 : vector<64x8xf32> to vector<1x1x64x8xf32>
    tpu.vector_store %arg16[%c0_101, %c0_102, %c0_103, %c0_104], %535 {strides = array<i32>} : memref<1x4x64x8xf32, #tpu.memory_space<vmem>>, vector<1x1x64x8xf32>,
    %536 = vector.extract_strided_slice %531 {offsets = [64, 0], sizes = [64, 8], strides = [1, 1]} : vector<256x8xf32> to vector<64x8xf32>
    %c0_105 = arith.constant 0 : index
    %c1_106 = arith.constant 1 : index
    %c0_107 = arith.constant 0 : index
    %c0_108 = arith.constant 0 : index
    %537 = vector.load %arg16[%c0_105, %c1_106, %c0_107, %c0_108] : memref<1x4x64x8xf32, #tpu.memory_space<vmem>>, vector<1x1x64x8xf32>
    %538 = vector.shape_cast %537 : vector<1x1x64x8xf32> to vector<64x8xf32>
    %539 = vector.shape_cast %536 : vector<64x8xf32> to vector<1x1x64x8xf32>
    tpu.vector_store %arg16[%c0_105, %c1_106, %c0_107, %c0_108], %539 {strides = array<i32>} : memref<1x4x64x8xf32, #tpu.memory_space<vmem>>, vector<1x1x64x8xf32>,
    %540 = vector.extract_strided_slice %531 {offsets = [128, 0], sizes = [64, 8], strides = [1, 1]} : vector<256x8xf32> to vector<64x8xf32>
    %c0_109 = arith.constant 0 : index
    %c2_110 = arith.constant 2 : index
    %c0_111 = arith.constant 0 : index
    %c0_112 = arith.constant 0 : index
    %541 = vector.load %arg16[%c0_109, %c2_110, %c0_111, %c0_112] : memref<1x4x64x8xf32, #tpu.memory_space<vmem>>, vector<1x1x64x8xf32>
    %542 = vector.shape_cast %541 : vector<1x1x64x8xf32> to vector<64x8xf32>
    %543 = vector.shape_cast %540 : vector<64x8xf32> to vector<1x1x64x8xf32>
    tpu.vector_store %arg16[%c0_109, %c2_110, %c0_111, %c0_112], %543 {strides = array<i32>} : memref<1x4x64x8xf32, #tpu.memory_space<vmem>>, vector<1x1x64x8xf32>,
    %544 = vector.extract_strided_slice %531 {offsets = [192, 0], sizes = [64, 8], strides = [1, 1]} : vector<256x8xf32> to vector<64x8xf32>
    %c0_113 = arith.constant 0 : index
    %c3_114 = arith.constant 3 : index
    %c0_115 = arith.constant 0 : index
    %c0_116 = arith.constant 0 : index
    %545 = vector.load %arg16[%c0_113, %c3_114, %c0_115, %c0_116] : memref<1x4x64x8xf32, #tpu.memory_space<vmem>>, vector<1x1x64x8xf32>
    %546 = vector.shape_cast %545 : vector<1x1x64x8xf32> to vector<64x8xf32>
    %547 = vector.shape_cast %544 : vector<64x8xf32> to vector<1x1x64x8xf32>
    tpu.vector_store %arg16[%c0_113, %c3_114, %c0_115, %c0_116], %547 {strides = array<i32>} : memref<1x4x64x8xf32, #tpu.memory_space<vmem>>, vector<1x1x64x8xf32>,
    return
  }
  func.func @transform_0(%arg0: i32) -> (i32, i32, i32, i32) {
    %c0_i32 = arith.constant 0 : i32
    %c0_i32_0 = arith.constant 0 : i32
    %c0_i32_1 = arith.constant 0 : i32
    %c0_i32_2 = arith.constant 0 : i32
    return %arg0, %c0_i32, %c0_i32_0, %c0_i32_1 : i32, i32, i32, i32
  }
  func.func @transform_1(%arg0: i32) -> (i32, i32) {
    %c0_i32 = arith.constant 0 : i32
    %c0_i32_0 = arith.constant 0 : i32
    %c0_i32_1 = arith.constant 0 : i32
    return %c0_i32, %c0_i32_0 : i32, i32
  }
  func.func @transform_2(%arg0: i32) -> (i32, i32) {
    %c0_i32 = arith.constant 0 : i32
    %c0_i32_0 = arith.constant 0 : i32
    %c0_i32_1 = arith.constant 0 : i32
    return %c0_i32, %c0_i32_0 : i32, i32
  }
  func.func @transform_3(%arg0: i32) -> (i32, i32, i32, i32) {
    %c0_i32 = arith.constant 0 : i32
    %c0_i32_0 = arith.constant 0 : i32
    %c0_i32_1 = arith.constant 0 : i32
    %c0_i32_2 = arith.constant 0 : i32
    %c0_i32_3 = arith.constant 0 : i32
    return %c0_i32, %c0_i32_0, %c0_i32_1, %c0_i32_2 : i32, i32, i32, i32
  }
  func.func @transform_4(%arg0: i32) -> (i32, i32) {
    %c0_i32 = arith.constant 0 : i32
    %c0_i32_0 = arith.constant 0 : i32
    %c0_i32_1 = arith.constant 0 : i32
    return %c0_i32, %c0_i32_0 : i32, i32
  }
  func.func @transform_5(%arg0: i32) -> (i32, i32) {
    %c0_i32 = arith.constant 0 : i32
    %c0_i32_0 = arith.constant 0 : i32
    %c0_i32_1 = arith.constant 0 : i32
    return %c0_i32, %c0_i32_0 : i32, i32
  }
  func.func @transform_6(%arg0: i32) -> (i32, i32) {
    %c0_i32 = arith.constant 0 : i32
    %c0_i32_0 = arith.constant 0 : i32
    %c0_i32_1 = arith.constant 0 : i32
    return %c0_i32, %c0_i32_0 : i32, i32
  }
  func.func @transform_7(%arg0: i32) -> (i32, i32, i32, i32) {
    %c0_i32 = arith.constant 0 : i32
    %c0_i32_0 = arith.constant 0 : i32
    %c0_i32_1 = arith.constant 0 : i32
    %c0_i32_2 = arith.constant 0 : i32
    %c0_i32_3 = arith.constant 0 : i32
    return %c0_i32, %c0_i32_0, %c0_i32_1, %c0_i32_2 : i32, i32, i32, i32
  }
  func.func @transform_8(%arg0: i32) -> (i32, i32) {
    %c0_i32 = arith.constant 0 : i32
    %c0_i32_0 = arith.constant 0 : i32
    %c0_i32_1 = arith.constant 0 : i32
    return %c0_i32, %c0_i32_0 : i32, i32
  }
  func.func @transform_9(%arg0: i32) -> (i32, i32) {
    %c0_i32 = arith.constant 0 : i32
    %c0_i32_0 = arith.constant 0 : i32
    %c0_i32_1 = arith.constant 0 : i32
    return %c0_i32, %c0_i32_0 : i32, i32
  }
  func.func @transform_10(%arg0: i32) -> (i32, i32, i32, i32) {
    %c0_i32 = arith.constant 0 : i32
    %c0_i32_0 = arith.constant 0 : i32
    %c0_i32_1 = arith.constant 0 : i32
    %c0_i32_2 = arith.constant 0 : i32
    %c0_i32_3 = arith.constant 0 : i32
    return %c0_i32, %c0_i32_0, %c0_i32_1, %c0_i32_2 : i32, i32, i32, i32
  }
  func.func @transform_11(%arg0: i32) -> (i32, i32) {
    %c0_i32 = arith.constant 0 : i32
    %c0_i32_0 = arith.constant 0 : i32
    %c0_i32_1 = arith.constant 0 : i32
    return %c0_i32, %c0_i32_0 : i32, i32
  }
  func.func @transform_12(%arg0: i32) -> (i32, i32) {
    %c0_i32 = arith.constant 0 : i32
    %c0_i32_0 = arith.constant 0 : i32
    %c0_i32_1 = arith.constant 0 : i32
    return %c0_i32, %c0_i32_0 : i32, i32
  }
  func.func @transform_13(%arg0: i32) -> (i32, i32) {
    %c0_i32 = arith.constant 0 : i32
    %c0_i32_0 = arith.constant 0 : i32
    %c0_i32_1 = arith.constant 0 : i32
    return %c0_i32, %c0_i32_0 : i32, i32
  }
  func.func @transform_14(%arg0: i32) -> (i32, i32) {
    %c0_i32 = arith.constant 0 : i32
    %c0_i32_0 = arith.constant 0 : i32
    %c0_i32_1 = arith.constant 0 : i32
    return %c0_i32, %c0_i32_0 : i32, i32
  }
  func.func @transform_15(%arg0: i32) -> (i32, i32, i32, i32) {
    %c0_i32 = arith.constant 0 : i32
    %c0_i32_0 = arith.constant 0 : i32
    %c0_i32_1 = arith.constant 0 : i32
    %c0_i32_2 = arith.constant 0 : i32
    return %arg0, %c0_i32, %c0_i32_0, %c0_i32_1 : i32, i32, i32, i32
  }
}

</mosaic_0001>

<llo_original>
// kernel: a_call__.1
$region0: #{a_call__.1}
  #allocation0 [shape = 'u32[]', space=smem, size = 0x4, offset = 0x4, fixed_abs, tag = 'smem constant byte address 0x4 - core index']
  #allocation1 [shape = 'u32[144,128]{1,0:T(1,128)}', space=vmem, size = 0x12000, scoped, tag = 'internal scratch']
  %s0 = inlined_call_operand.vmem [shape: f32[2,4,64,8], index: 0, kind: input, shape index: {}]
  %s1 = inlined_call_operand.vmem [shape: f32[64,1], index: 1, kind: input, shape index: {}]
  %s2 = inlined_call_operand.vmem [shape: f32[64,1], index: 2, kind: input, shape index: {}]
  %s3 = inlined_call_operand.vmem [shape: f32[3,3,1,8], index: 3, kind: input, shape index: {}]
  %s4 = inlined_call_operand.vmem [shape: f32[1,8], index: 4, kind: input, shape index: {}]
  %s5 = inlined_call_operand.vmem [shape: f32[1,8], index: 5, kind: input, shape index: {}]
  %s6 = inlined_call_operand.vmem [shape: f32[1,8], index: 6, kind: input, shape index: {}]
  %s7 = inlined_call_operand.vmem [shape: f32[3,3,1,8], index: 7, kind: input, shape index: {}]
  %s8 = inlined_call_operand.vmem [shape: bf16[8,8], index: 8, kind: input, shape index: {}]
  %s9 = inlined_call_operand.vmem [shape: f32[1,8], index: 9, kind: input, shape index: {}]
  %s10 = inlined_call_operand.vmem [shape: f32[3,3,1,8], index: 10, kind: input, shape index: {}]
  %s11 = inlined_call_operand.vmem [shape: bf16[72,32], index: 11, kind: input, shape index: {}]
  %s12 = inlined_call_operand.vmem [shape: f32[1,32], index: 12, kind: input, shape index: {}]
  %s13 = inlined_call_operand.vmem [shape: bf16[8,8], index: 13, kind: input, shape index: {}]
  %s14 = inlined_call_operand.vmem [shape: f32[1,8], index: 14, kind: input, shape index: {}]
  %s15 = inlined_call_operand.vmem [shape: f32[2,4,64,8], index: 15, kind: output, shape index: {}]
  %s16 = sld [smem:[#allocation0]]
  $region93: #{a_call__.1} parent=0
    _
  %s18 = ssub.s32 1, %s16
  %s19 = scalar_select 0, %s18, %s16
  loop: start=0, step=1, limit=4
  $region2: #{a_call__.1} parent=0 // loop_pre_header
    _
  $region3: #{a_call__.1} parent=0 // loop_header
    %s21 = sphi 0, %s25
    %p22 = scmp.ge.s32.totalorder %s21, 4
    %s31 = sphi 0, %s33
    %s34 = sphi 0, %s31
    %s35 = sphi 0, %s34
    %s51 = sphi 0, %s35
    %s55 = sphi 0, %s55
    %s57 = sphi 0, %s55
    %s58 = sphi 0, %s57
    %s72 = sphi 0, %s58
    %s76 = sphi 0, %s76
    %s78 = sphi 0, %s76
    %s79 = sphi 0, %s78
    %s93 = sphi 0, %s79
    %s97 = sphi 0, %s97
    %s99 = sphi 0, %s97
    %s100 = sphi 0, %s99
    %s114 = sphi 0, %s100
    %s118 = sphi 0, %s118
    %s120 = sphi 0, %s118
    %s121 = sphi 0, %s120
    %s135 = sphi 0, %s121
    %s139 = sphi 0, %s139
    %s141 = sphi 0, %s139
    %s142 = sphi 0, %s141
    %s156 = sphi 0, %s142
    %s160 = sphi 0, %s160
    %s162 = sphi 0, %s160
    %s163 = sphi 0, %s162
    %s177 = sphi 0, %s163
    %s181 = sphi 0, %s181
    %s183 = sphi 0, %s181
    %s184 = sphi 0, %s183
    %s198 = sphi 0, %s184
    %s202 = sphi 0, %s202
    %s204 = sphi 0, %s202
    %s205 = sphi 0, %s204
    %s219 = sphi 0, %s205
    %s223 = sphi 0, %s223
    %s225 = sphi 0, %s223
    %s226 = sphi 0, %s225
    %s240 = sphi 0, %s226
    %s244 = sphi 0, %s244
    %s246 = sphi 0, %s244
    %s247 = sphi 0, %s246
    %s261 = sphi 0, %s247
    %s265 = sphi 0, %s265
    %s267 = sphi 0, %s265
    %s268 = sphi 0, %s267
    %s282 = sphi 0, %s268
    %s286 = sphi 0, %s286
    %s288 = sphi 0, %s286
    %s289 = sphi 0, %s288
    %s303 = sphi 0, %s289
    %s307 = sphi 0, %s307
    %s309 = sphi 0, %s307
    %s310 = sphi 0, %s309
    %s324 = sphi 0, %s310
    %s328 = sphi 0, %s328
    %s330 = sphi 0, %s328
    %s331 = sphi 0, %s330
    %s345 = sphi 0, %s331
    %s351 = sphi 0, %s353
    %s354 = sphi 0, %s351
    %s355 = sphi 0, %s354
    %s371 = sphi 0, %s355
  $region4: #{a_call__.1} parent=0 // loop_header_branch
    %24 = sbr.rel (%p22) target = $region8
  $region5: #{a_call__.1} parent=0 // loop_body
    %s26 = ssub.s32 %s21, 1
    %s27 = ssub.s32 %s21, 2
    %s28 = sadd.s32 %s21, 1
    %s29 = ssub.s32 %s21, %s28
    %p30 = scmp.eq.s32.totalorder %s29, 0
    %s32 = sadd.s32 %s31, 1
    %s33 = scalar_select %p30, %s31, %s32
    %p36 = pneg %p30
    %p37 = scmp.eq.s32.totalorder %s21, 1
    %p38 = por %p36, %p37
    %p39 = scmp.ne.s32.totalorder %s31, %s34
    %p40 = scmp.eq.s32.totalorder %s21, 0
    %p41 = por %p39, %p40
    %p42 = scmp.ne.s32.totalorder %s31, %s34
    %p43 = scmp.eq.s32.totalorder %s26, 1
    %p44 = por %p42, %p43
    %p45 = scmp.ne.s32.totalorder %s34, %s35
    %p46 = scmp.eq.s32.totalorder %s26, 0
    %p47 = por %p45, %p46
    %p48 = scmp.ne.s32.totalorder %s34, %s35
    %p49 = scmp.eq.s32.totalorder %s27, 1
    %p50 = por %p48, %p49
    %p52 = scmp.ne.s32.totalorder %s35, %s51
    %p53 = scmp.eq.s32.totalorder %s27, 0
    %p54 = por %p52, %p53
    %s56 = sadd.s32 %s55, 1
    %p59 = scmp.eq.s32.totalorder %s21, 1
    %p60 = scmp.ne.s32.totalorder %s55, %s57
    %p61 = scmp.eq.s32.totalorder %s21, 0
    %p62 = por %p60, %p61
    %p63 = scmp.ne.s32.totalorder %s55, %s57
    %p64 = scmp.eq.s32.totalorder %s26, 1
    %p65 = por %p63, %p64
    %p66 = scmp.ne.s32.totalorder %s57, %s58
    %p67 = scmp.eq.s32.totalorder %s26, 0
    %p68 = por %p66, %p67
    %p69 = scmp.ne.s32.totalorder %s57, %s58
    %p70 = scmp.eq.s32.totalorder %s27, 1
    %p71 = por %p69, %p70
    %p73 = scmp.ne.s32.totalorder %s58, %s72
    %p74 = scmp.eq.s32.totalorder %s27, 0
    %p75 = por %p73, %p74
    %s77 = sadd.s32 %s76, 1
    %p80 = scmp.eq.s32.totalorder %s21, 1
    %p81 = scmp.ne.s32.totalorder %s76, %s78
    %p82 = scmp.eq.s32.totalorder %s21, 0
    %p83 = por %p81, %p82
    %p84 = scmp.ne.s32.totalorder %s76, %s78
    %p85 = scmp.eq.s32.totalorder %s26, 1
    %p86 = por %p84, %p85
    %p87 = scmp.ne.s32.totalorder %s78, %s79
    %p88 = scmp.eq.s32.totalorder %s26, 0
    %p89 = por %p87, %p88
    %p90 = scmp.ne.s32.totalorder %s78, %s79
    %p91 = scmp.eq.s32.totalorder %s27, 1
    %p92 = por %p90, %p91
    %p94 = scmp.ne.s32.totalorder %s79, %s93
    %p95 = scmp.eq.s32.totalorder %s27, 0
    %p96 = por %p94, %p95
    %s98 = sadd.s32 %s97, 1
    %p101 = scmp.eq.s32.totalorder %s21, 1
    %p102 = scmp.ne.s32.totalorder %s97, %s99
    %p103 = scmp.eq.s32.totalorder %s21, 0
    %p104 = por %p102, %p103
    %p105 = scmp.ne.s32.totalorder %s97, %s99
    %p106 = scmp.eq.s32.totalorder %s26, 1
    %p107 = por %p105, %p106
    %p108 = scmp.ne.s32.totalorder %s99, %s100
    %p109 = scmp.eq.s32.totalorder %s26, 0
    %p110 = por %p108, %p109
    %p111 = scmp.ne.s32.totalorder %s99, %s100
    %p112 = scmp.eq.s32.totalorder %s27, 1
    %p113 = por %p111, %p112
    %p115 = scmp.ne.s32.totalorder %s100, %s114
    %p116 = scmp.eq.s32.totalorder %s27, 0
    %p117 = por %p115, %p116
    %s119 = sadd.s32 %s118, 1
    %p122 = scmp.eq.s32.totalorder %s21, 1
    %p123 = scmp.ne.s32.totalorder %s118, %s120
    %p124 = scmp.eq.s32.totalorder %s21, 0
    %p125 = por %p123, %p124
    %p126 = scmp.ne.s32.totalorder %s118, %s120
    %p127 = scmp.eq.s32.totalorder %s26, 1
    %p128 = por %p126, %p127
    %p129 = scmp.ne.s32.totalorder %s120, %s121
    %p130 = scmp.eq.s32.totalorder %s26, 0
    %p131 = por %p129, %p130
    %p132 = scmp.ne.s32.totalorder %s120, %s121
    %p133 = scmp.eq.s32.totalorder %s27, 1
    %p134 = por %p132, %p133
    %p136 = scmp.ne.s32.totalorder %s121, %s135
    %p137 = scmp.eq.s32.totalorder %s27, 0
    %p138 = por %p136, %p137
    %s140 = sadd.s32 %s139, 1
    %p143 = scmp.eq.s32.totalorder %s21, 1
    %p144 = scmp.ne.s32.totalorder %s139, %s141
    %p145 = scmp.eq.s32.totalorder %s21, 0
    %p146 = por %p144, %p145
    %p147 = scmp.ne.s32.totalorder %s139, %s141
    %p148 = scmp.eq.s32.totalorder %s26, 1
    %p149 = por %p147, %p148
    %p150 = scmp.ne.s32.totalorder %s141, %s142
    %p151 = scmp.eq.s32.totalorder %s26, 0
    %p152 = por %p150, %p151
    %p153 = scmp.ne.s32.totalorder %s141, %s142
    %p154 = scmp.eq.s32.totalorder %s27, 1
    %p155 = por %p153, %p154
    %p157 = scmp.ne.s32.totalorder %s142, %s156
    %p158 = scmp.eq.s32.totalorder %s27, 0
    %p159 = por %p157, %p158
    %s161 = sadd.s32 %s160, 1
    %p164 = scmp.eq.s32.totalorder %s21, 1
    %p165 = scmp.ne.s32.totalorder %s160, %s162
    %p166 = scmp.eq.s32.totalorder %s21, 0
    %p167 = por %p165, %p166
    %p168 = scmp.ne.s32.totalorder %s160, %s162
    %p169 = scmp.eq.s32.totalorder %s26, 1
    %p170 = por %p168, %p169
    %p171 = scmp.ne.s32.totalorder %s162, %s163
    %p172 = scmp.eq.s32.totalorder %s26, 0
    %p173 = por %p171, %p172
    %p174 = scmp.ne.s32.totalorder %s162, %s163
    %p175 = scmp.eq.s32.totalorder %s27, 1
    %p176 = por %p174, %p175
    %p178 = scmp.ne.s32.totalorder %s163, %s177
    %p179 = scmp.eq.s32.totalorder %s27, 0
    %p180 = por %p178, %p179
    %s182 = sadd.s32 %s181, 1
    %p185 = scmp.eq.s32.totalorder %s21, 1
    %p186 = scmp.ne.s32.totalorder %s181, %s183
    %p187 = scmp.eq.s32.totalorder %s21, 0
    %p188 = por %p186, %p187
    %p189 = scmp.ne.s32.totalorder %s181, %s183
    %p190 = scmp.eq.s32.totalorder %s26, 1
    %p191 = por %p189, %p190
    %p192 = scmp.ne.s32.totalorder %s183, %s184
    %p193 = scmp.eq.s32.totalorder %s26, 0
    %p194 = por %p192, %p193
    %p195 = scmp.ne.s32.totalorder %s183, %s184
    %p196 = scmp.eq.s32.totalorder %s27, 1
    %p197 = por %p195, %p196
    %p199 = scmp.ne.s32.totalorder %s184, %s198
    %p200 = scmp.eq.s32.totalorder %s27, 0
    %p201 = por %p199, %p200
    %s203 = sadd.s32 %s202, 1
    %p206 = scmp.eq.s32.totalorder %s21, 1
    %p207 = scmp.ne.s32.totalorder %s202, %s204
    %p208 = scmp.eq.s32.totalorder %s21, 0
    %p209 = por %p207, %p208
    %p210 = scmp.ne.s32.totalorder %s202, %s204
    %p211 = scmp.eq.s32.totalorder %s26, 1
    %p212 = por %p210, %p211
    %p213 = scmp.ne.s32.totalorder %s204, %s205
    %p214 = scmp.eq.s32.totalorder %s26, 0
    %p215 = por %p213, %p214
    %p216 = scmp.ne.s32.totalorder %s204, %s205
    %p217 = scmp.eq.s32.totalorder %s27, 1
    %p218 = por %p216, %p217
    %p220 = scmp.ne.s32.totalorder %s205, %s219
    %p221 = scmp.eq.s32.totalorder %s27, 0
    %p222 = por %p220, %p221
    %s224 = sadd.s32 %s223, 1
    %p227 = scmp.eq.s32.totalorder %s21, 1
    %p228 = scmp.ne.s32.totalorder %s223, %s225
    %p229 = scmp.eq.s32.totalorder %s21, 0
    %p230 = por %p228, %p229
    %p231 = scmp.ne.s32.totalorder %s223, %s225
    %p232 = scmp.eq.s32.totalorder %s26, 1
    %p233 = por %p231, %p232
    %p234 = scmp.ne.s32.totalorder %s225, %s226
    %p235 = scmp.eq.s32.totalorder %s26, 0
    %p236 = por %p234, %p235
    %p237 = scmp.ne.s32.totalorder %s225, %s226
    %p238 = scmp.eq.s32.totalorder %s27, 1
    %p239 = por %p237, %p238
    %p241 = scmp.ne.s32.totalorder %s226, %s240
    %p242 = scmp.eq.s32.totalorder %s27, 0
    %p243 = por %p241, %p242
    %s245 = sadd.s32 %s244, 1
    %p248 = scmp.eq.s32.totalorder %s21, 1
    %p249 = scmp.ne.s32.totalorder %s244, %s246
    %p250 = scmp.eq.s32.totalorder %s21, 0
    %p251 = por %p249, %p250
    %p252 = scmp.ne.s32.totalorder %s244, %s246
    %p253 = scmp.eq.s32.totalorder %s26, 1
    %p254 = por %p252, %p253
    %p255 = scmp.ne.s32.totalorder %s246, %s247
    %p256 = scmp.eq.s32.totalorder %s26, 0
    %p257 = por %p255, %p256
    %p258 = scmp.ne.s32.totalorder %s246, %s247
    %p259 = scmp.eq.s32.totalorder %s27, 1
    %p260 = por %p258, %p259
    %p262 = scmp.ne.s32.totalorder %s247, %s261
    %p263 = scmp.eq.s32.totalorder %s27, 0
    %p264 = por %p262, %p263
    %s266 = sadd.s32 %s265, 1
    %p269 = scmp.eq.s32.totalorder %s21, 1
    %p270 = scmp.ne.s32.totalorder %s265, %s267
    %p271 = scmp.eq.s32.totalorder %s21, 0
    %p272 = por %p270, %p271
    %p273 = scmp.ne.s32.totalorder %s265, %s267
    %p274 = scmp.eq.s32.totalorder %s26, 1
    %p275 = por %p273, %p274
    %p276 = scmp.ne.s32.totalorder %s267, %s268
    %p277 = scmp.eq.s32.totalorder %s26, 0
    %p278 = por %p276, %p277
    %p279 = scmp.ne.s32.totalorder %s267, %s268
    %p280 = scmp.eq.s32.totalorder %s27, 1
    %p281 = por %p279, %p280
    %p283 = scmp.ne.s32.totalorder %s268, %s282
    %p284 = scmp.eq.s32.totalorder %s27, 0
    %p285 = por %p283, %p284
    %s287 = sadd.s32 %s286, 1
    %p290 = scmp.eq.s32.totalorder %s21, 1
    %p291 = scmp.ne.s32.totalorder %s286, %s288
    %p292 = scmp.eq.s32.totalorder %s21, 0
    %p293 = por %p291, %p292
    %p294 = scmp.ne.s32.totalorder %s286, %s288
    %p295 = scmp.eq.s32.totalorder %s26, 1
    %p296 = por %p294, %p295
    %p297 = scmp.ne.s32.totalorder %s288, %s289
    %p298 = scmp.eq.s32.totalorder %s26, 0
    %p299 = por %p297, %p298
    %p300 = scmp.ne.s32.totalorder %s288, %s289
    %p301 = scmp.eq.s32.totalorder %s27, 1
    %p302 = por %p300, %p301
    %p304 = scmp.ne.s32.totalorder %s289, %s303
    %p305 = scmp.eq.s32.totalorder %s27, 0
    %p306 = por %p304, %p305
    %s308 = sadd.s32 %s307, 1
    %p311 = scmp.eq.s32.totalorder %s21, 1
    %p312 = scmp.ne.s32.totalorder %s307, %s309
    %p313 = scmp.eq.s32.totalorder %s21, 0
    %p314 = por %p312, %p313
    %p315 = scmp.ne.s32.totalorder %s307, %s309
    %p316 = scmp.eq.s32.totalorder %s26, 1
    %p317 = por %p315, %p316
    %p318 = scmp.ne.s32.totalorder %s309, %s310
    %p319 = scmp.eq.s32.totalorder %s26, 0
    %p320 = por %p318, %p319
    %p321 = scmp.ne.s32.totalorder %s309, %s310
    %p322 = scmp.eq.s32.totalorder %s27, 1
    %p323 = por %p321, %p322
    %p325 = scmp.ne.s32.totalorder %s310, %s324
    %p326 = scmp.eq.s32.totalorder %s27, 0
    %p327 = por %p325, %p326
    %s329 = sadd.s32 %s328, 1
    %p332 = scmp.eq.s32.totalorder %s21, 1
    %p333 = scmp.ne.s32.totalorder %s328, %s330
    %p334 = scmp.eq.s32.totalorder %s21, 0
    %p335 = por %p333, %p334
    %p336 = scmp.ne.s32.totalorder %s328, %s330
    %p337 = scmp.eq.s32.totalorder %s26, 1
    %p338 = por %p336, %p337
    %p339 = scmp.ne.s32.totalorder %s330, %s331
    %p340 = scmp.eq.s32.totalorder %s26, 0
    %p341 = por %p339, %p340
    %p342 = scmp.ne.s32.totalorder %s330, %s331
    %p343 = scmp.eq.s32.totalorder %s27, 1
    %p344 = por %p342, %p343
    %p346 = scmp.ne.s32.totalorder %s331, %s345
    %p347 = scmp.eq.s32.totalorder %s27, 0
    %p348 = por %p346, %p347
    %s349 = ssub.s32 %s21, %s28
    %p350 = scmp.eq.s32.totalorder %s349, 0
    %s352 = sadd.s32 %s351, 1
    %s353 = scalar_select %p350, %s351, %s352
    %p356 = pneg %p350
    %p357 = scmp.eq.s32.totalorder %s21, 1
    %p358 = por %p356, %p357
    %p359 = scmp.ne.s32.totalorder %s351, %s354
    %p360 = scmp.eq.s32.totalorder %s21, 0
    %p361 = por %p359, %p360
    %p362 = scmp.ne.s32.totalorder %s351, %s354
    %p363 = scmp.eq.s32.totalorder %s26, 1
    %p364 = por %p362, %p363
    %p365 = scmp.ne.s32.totalorder %s354, %s355
    %p366 = scmp.eq.s32.totalorder %s26, 0
    %p367 = por %p365, %p366
    %p368 = scmp.ne.s32.totalorder %s354, %s355
    %p369 = scmp.eq.s32.totalorder %s27, 1
    %p370 = por %p368, %p369
    %p372 = scmp.ne.s32.totalorder %s355, %s371
    %p373 = scmp.eq.s32.totalorder %s27, 0
    %p374 = por %p372, %p373
    %p375 = scmp.le.s32.totalorder 1, %s21
    %p376 = scmp.lt.s32.totalorder %s21, 3
    %p377 = pnand %p375, %p376
    %p378 = pneg %p377
    // Predicated region
    $region9: #{a_call__.1} parent=5 // pred_check
      _
    $region10: #{a_call__.1} parent=5 // pred_check_branch
      %380 = sbr.rel (%p377) target = $region12
    $region11: #{a_call__.1} parent=5 // pred_region
      %s381 = ssub.s32 %s21, 1
      // Predicated region
      $region13: #{a_call__.1} parent=11 // pred_check
        %p382 = pneg %p68
      $region14: #{a_call__.1} parent=11 // pred_check_branch
        %384 = sbr.rel (%p382) target = $region16
      $region15: #{a_call__.1} parent=11 // pred_region
        _
      $region16: #{a_call__.1} parent=11 // pred_fallthru
        _
      // Predicated region
      $region17: #{a_call__.1} parent=11 // pred_check
        %p385 = pneg %p89
      $region18: #{a_call__.1} parent=11 // pred_check_branch
        %387 = sbr.rel (%p385) target = $region20
      $region19: #{a_call__.1} parent=11 // pred_region
        _
      $region20: #{a_call__.1} parent=11 // pred_fallthru
        _
      // Predicated region
      $region21: #{a_call__.1} parent=11 // pred_check
        %p388 = pneg %p110
      $region22: #{a_call__.1} parent=11 // pred_check_branch
        %390 = sbr.rel (%p388) target = $region24
      $region23: #{a_call__.1} parent=11 // pred_region
        _
      $region24: #{a_call__.1} parent=11 // pred_fallthru
        _
      // Predicated region
      $region25: #{a_call__.1} parent=11 // pred_check
        %p391 = pneg %p131
      $region26: #{a_call__.1} parent=11 // pred_check_branch
        %393 = sbr.rel (%p391) target = $region28
      $region27: #{a_call__.1} parent=11 // pred_region
        _
      $region28: #{a_call__.1} parent=11 // pred_fallthru
        _
      // Predicated region
      $region29: #{a_call__.1} parent=11 // pred_check
        %p394 = pneg %p152
      $region30: #{a_call__.1} parent=11 // pred_check_branch
        %396 = sbr.rel (%p394) target = $region32
      $region31: #{a_call__.1} parent=11 // pred_region
        _
      $region32: #{a_call__.1} parent=11 // pred_fallthru
        _
      // Predicated region
      $region33: #{a_call__.1} parent=11 // pred_check
        %p397 = pneg %p173
      $region34: #{a_call__.1} parent=11 // pred_check_branch
        %399 = sbr.rel (%p397) target = $region36
      $region35: #{a_call__.1} parent=11 // pred_region
        _
      $region36: #{a_call__.1} parent=11 // pred_fallthru
        _
      // Predicated region
      $region37: #{a_call__.1} parent=11 // pred_check
        %p400 = pneg %p194
      $region38: #{a_call__.1} parent=11 // pred_check_branch
        %402 = sbr.rel (%p400) target = $region40
      $region39: #{a_call__.1} parent=11 // pred_region
        _
      $region40: #{a_call__.1} parent=11 // pred_fallthru
        _
      // Predicated region
      $region41: #{a_call__.1} parent=11 // pred_check
        %p403 = pneg %p215
      $region42: #{a_call__.1} parent=11 // pred_check_branch
        %405 = sbr.rel (%p403) target = $region44
      $region43: #{a_call__.1} parent=11 // pred_region
        _
      $region44: #{a_call__.1} parent=11 // pred_fallthru
        _
      // Predicated region
      $region45: #{a_call__.1} parent=11 // pred_check
        %p406 = pneg %p236
      $region46: #{a_call__.1} parent=11 // pred_check_branch
        %408 = sbr.rel (%p406) target = $region48
      $region47: #{a_call__.1} parent=11 // pred_region
        _
      $region48: #{a_call__.1} parent=11 // pred_fallthru
        _
      // Predicated region
      $region49: #{a_call__.1} parent=11 // pred_check
        %p409 = pneg %p257
      $region50: #{a_call__.1} parent=11 // pred_check_branch
        %411 = sbr.rel (%p409) target = $region52
      $region51: #{a_call__.1} parent=11 // pred_region
        _
      $region52: #{a_call__.1} parent=11 // pred_fallthru
        _
      // Predicated region
      $region53: #{a_call__.1} parent=11 // pred_check
        %p412 = pneg %p278
      $region54: #{a_call__.1} parent=11 // pred_check_branch
        %414 = sbr.rel (%p412) target = $region56
      $region55: #{a_call__.1} parent=11 // pred_region
        _
      $region56: #{a_call__.1} parent=11 // pred_fallthru
        _
      // Predicated region
      $region57: #{a_call__.1} parent=11 // pred_check
        %p415 = pneg %p299
      $region58: #{a_call__.1} parent=11 // pred_check_branch
        %417 = sbr.rel (%p415) target = $region60
      $region59: #{a_call__.1} parent=11 // pred_region
        _
      $region60: #{a_call__.1} parent=11 // pred_fallthru
        _
      // Predicated region
      $region61: #{a_call__.1} parent=11 // pred_check
        %p418 = pneg %p320
      $region62: #{a_call__.1} parent=11 // pred_check_branch
        %420 = sbr.rel (%p418) target = $region64
      $region63: #{a_call__.1} parent=11 // pred_region
        _
      $region64: #{a_call__.1} parent=11 // pred_fallthru
        _
      // Predicated region
      $region65: #{a_call__.1} parent=11 // pred_check
        %p421 = pneg %p341
      $region66: #{a_call__.1} parent=11 // pred_check_branch
        %423 = sbr.rel (%p421) target = $region68
      $region67: #{a_call__.1} parent=11 // pred_region
        _
      $region68: #{a_call__.1} parent=11 // pred_fallthru
        _
    $region12: #{a_call__.1} parent=5 // pred_fallthru
      _
    %p424 = scmp.lt.s32.totalorder %s21, 2
    // Predicated region
    $region69: #{a_call__.1} parent=5 // pred_check
      %p425 = pneg %p424
    $region70: #{a_call__.1} parent=5 // pred_check_branch
      %427 = sbr.rel (%p425) target = $region72
    $region71: #{a_call__.1} parent=5 // pred_region
      // Predicated region
      $region73: #{a_call__.1} parent=71 // pred_check
        %p428 = pneg %p41
      $region74: #{a_call__.1} parent=71 // pred_check_branch
        %430 = sbr.rel (%p428) target = $region76
      $region75: #{a_call__.1} parent=71 // pred_region
        %p431 = scmp.lt.s32.totalorder %s21, 1
        %s432 = scalar_select %p431, %s21, 1
        %s433 = smul.addr %s432, 32
        %s434 = smul.addr %s433, 8
        %s435 = scalar_lea.vmem %s0, %s434
      $region76: #{a_call__.1} parent=71 // pred_fallthru
        _
    $region72: #{a_call__.1} parent=5 // pred_fallthru
      _
    %p436 = scmp.le.s32.totalorder 1, %s21
    %p437 = scmp.lt.s32.totalorder %s21, 3
    %p438 = pnand %p436, %p437
    %p439 = pneg %p438
    // Predicated region
    $region77: #{a_call__.1} parent=5 // pred_check
      _
    $region78: #{a_call__.1} parent=5 // pred_check_branch
      %441 = sbr.rel (%p438) target = $region80
    $region79: #{a_call__.1} parent=5 // pred_region
      %s442 = ssub.s32 %s21, 1
      %p443 = scmp.lt.s32.totalorder %s26, 1
      %s444 = scalar_select %p443, %s26, 1
      %s445 = smul.addr %s444, 32
      %s446 = smul.addr %s445, 8
      %s447 = scalar_lea.vmem %s0, %s446
      %p448 = pneg %p47
      %p449 = pneg %p44
      %p450 = pneg %p68
      %p451 = pneg %p65
      %p452 = pneg %p89
      %p453 = pneg %p86
      %p454 = pneg %p110
      %p455 = pneg %p107
      %p456 = pneg %p131
      %p457 = pneg %p128
      %p458 = pneg %p152
      %p459 = pneg %p149
      %p460 = pneg %p173
      %p461 = pneg %p170
      %p462 = pneg %p194
      %p463 = pneg %p191
      %p464 = pneg %p215
      %p465 = pneg %p212
      %p466 = pneg %p236
      %p467 = pneg %p233
      %p468 = pneg %p257
      %p469 = pneg %p254
      %p470 = pneg %p278
      %p471 = pneg %p275
      %p472 = pneg %p299
      %p473 = pneg %p296
      %p474 = pneg %p320
      %p475 = pneg %p317
      %p476 = pneg %p341
      %p477 = pneg %p338
      %p478 = pneg %p367
      %p479 = pneg %p364
      %p480 = scmp.lt.s32.totalorder %s26, 1
      %s481 = scalar_select %p480, %s26, 1
      %s482 = smul.addr %s481, 32
      %s483 = smul.addr %s482, 8
      %s484 = scalar_lea.vmem %s15, %s483
      %p485 = scmp.lt.s32.totalorder %s26, 1
      %s486 = scalar_select %p485, %s26, 1
      %s487 = smul.addr %s486, 32
      %s488 = smul.addr %s487, 8
      %s489 = scalar_lea.vmem %s0, %s488
      %p490 = scmp.lt.s32.totalorder %s26, 1
      %s491 = scalar_select %p490, %s26, 1
      %s492 = smul.addr %s491, 32
      %s493 = smul.addr %s492, 8
      %s494 = scalar_lea.vmem %s15, %s493
      %v496 = vld [vmem:[%s1] sm:$0xff]
      %v497 = vld [vmem:[%s1 + $0x8] sm:$0xff]
      %v498 = vld [vmem:[%s1 + $0x10] sm:$0xff]
      %v499 = vld [vmem:[%s1 + $0x18] sm:$0xff]
      %v500 = vld [vmem:[%s1 + $0x20] sm:$0xff]
      %v501 = vld [vmem:[%s1 + $0x28] sm:$0xff]
      %v502 = vld [vmem:[%s1 + $0x30] sm:$0xff]
      %v503 = vld [vmem:[%s1 + $0x38] sm:$0xff]
      %v504 = vld [vmem:[%s2] sm:$0xff]
      %v505 = vld [vmem:[%s2 + $0x8] sm:$0xff]
      %v506 = vld [vmem:[%s2 + $0x10] sm:$0xff]
      %v507 = vld [vmem:[%s2 + $0x18] sm:$0xff]
      %v508 = vld [vmem:[%s2 + $0x20] sm:$0xff]
      %v509 = vld [vmem:[%s2 + $0x28] sm:$0xff]
      %v510 = vld [vmem:[%s2 + $0x30] sm:$0xff]
      %v511 = vld [vmem:[%s2 + $0x38] sm:$0xff]
      %v512 = vld [vmem:[%s489] sm:$0xff]
      %v513 = vld [vmem:[%s489 + $0x8] sm:$0xff]
      %v514 = vld [vmem:[%s489 + $0x10] sm:$0xff]
      %v515 = vld [vmem:[%s489 + $0x18] sm:$0xff]
      %v516 = vld [vmem:[%s489 + $0x20] sm:$0xff]
      %v517 = vld [vmem:[%s489 + $0x28] sm:$0xff]
      %v518 = vld [vmem:[%s489 + $0x30] sm:$0xff]
      %v519 = vld [vmem:[%s489 + $0x38] sm:$0xff]
      %s520 = scalar_lea.vmem %s489, 64
      %v521 = vld [vmem:[%s520] sm:$0xff]
      %v522 = vld [vmem:[%s520 + $0x8] sm:$0xff]
      %v523 = vld [vmem:[%s520 + $0x10] sm:$0xff]
      %v524 = vld [vmem:[%s520 + $0x18] sm:$0xff]
      %v525 = vld [vmem:[%s520 + $0x20] sm:$0xff]
      %v526 = vld [vmem:[%s520 + $0x28] sm:$0xff]
      %v527 = vld [vmem:[%s520 + $0x30] sm:$0xff]
      %v528 = vld [vmem:[%s520 + $0x38] sm:$0xff]
      %s529 = scalar_lea.vmem %s489, 128
      %v530 = vld [vmem:[%s529] sm:$0xff]
      %v531 = vld [vmem:[%s529 + $0x8] sm:$0xff]
      %v532 = vld [vmem:[%s529 + $0x10] sm:$0xff]
      %v533 = vld [vmem:[%s529 + $0x18] sm:$0xff]
      %v534 = vld [vmem:[%s529 + $0x20] sm:$0xff]
      %v535 = vld [vmem:[%s529 + $0x28] sm:$0xff]
      %v536 = vld [vmem:[%s529 + $0x30] sm:$0xff]
      %v537 = vld [vmem:[%s529 + $0x38] sm:$0xff]
      %s538 = scalar_lea.vmem %s489, 192
      %v539 = vld [vmem:[%s538] sm:$0xff]
      %v540 = vld [vmem:[%s538 + $0x8] sm:$0xff]
      %v541 = vld [vmem:[%s538 + $0x10] sm:$0xff]
      %v542 = vld [vmem:[%s538 + $0x18] sm:$0xff]
      %v543 = vld [vmem:[%s538 + $0x20] sm:$0xff]
      %v544 = vld [vmem:[%s538 + $0x28] sm:$0xff]
      %v545 = vld [vmem:[%s538 + $0x30] sm:$0xff]
      %v546 = vld [vmem:[%s538 + $0x38] sm:$0xff]
      %v547 = vld [vmem:[%s3] sm:$0x1]
      %v548 = vld [vmem:[%s3 + $0x1] sm:$0x1]
      %v549 = vld [vmem:[%s3 + $0x2] sm:$0x1]
      %v550 = vld [vmem:[%s3 + $0x3] sm:$0x1]
      %v551 = vld [vmem:[%s3 + $0x4] sm:$0x1]
      %v552 = vld [vmem:[%s3 + $0x5] sm:$0x1]
      %v553 = vld [vmem:[%s3 + $0x6] sm:$0x1]
      %v554 = vld [vmem:[%s3 + $0x7] sm:$0x1]
      %v555 = vld [vmem:[%s3 + $0x8] sm:$0x1]
      %v556 = vld [vmem:[%s4] sm:$0x1]
      %v557 = vld [vmem:[%s5] sm:$0x1]
      %v558 = vld [vmem:[%s6] sm:$0x1]
      %vm566 = vcmask 1040384
      %v567 = vrot.slane %v539, 7
      %v568 = vrot.slane %v540, 7
      %v569 = vsel %vm566, %v567, %v568
      %v570 = vrot.slane %v541, 7
      %v571 = vsel %vm566, %v568, %v570
      %v572 = vrot.slane %v542, 7
      %v573 = vsel %vm566, %v570, %v572
      %v574 = vrot.slane %v543, 7
      %v575 = vsel %vm566, %v572, %v574
      %v576 = vrot.slane %v544, 7
      %v577 = vsel %vm566, %v574, %v576
      %v578 = vrot.slane %v545, 7
      %v579 = vsel %vm566, %v576, %v578
      %v587 = vsel %vm566, 0.0, %v567
      %589 = vset.pattern.permute.xlu0 0
      %590 = vperm.xlu0 %589, %v496
      %v591 = vpop.permute.xlu0 %590
      %594 = vset.pattern.permute.xlu0 0
      %595 = vperm.xlu0 %594, %v497
      %v596 = vpop.permute.xlu0 %595
      %599 = vset.pattern.permute.xlu0 0
      %600 = vperm.xlu0 %599, %v498
      %v601 = vpop.permute.xlu0 %600
      %604 = vset.pattern.permute.xlu0 0
      %605 = vperm.xlu0 %604, %v499
      %v606 = vpop.permute.xlu0 %605
      %609 = vset.pattern.permute.xlu0 0
      %610 = vperm.xlu0 %609, %v500
      %v611 = vpop.permute.xlu0 %610
      %614 = vset.pattern.permute.xlu0 0
      %615 = vperm.xlu0 %614, %v501
      %v616 = vpop.permute.xlu0 %615
      %619 = vset.pattern.permute.xlu0 0
      %620 = vperm.xlu0 %619, %v502
      %v621 = vpop.permute.xlu0 %620
      %624 = vset.pattern.permute.xlu0 0
      %625 = vperm.xlu0 %624, %v503
      %v626 = vpop.permute.xlu0 %625
      %v628 = vmul.f32 %v591, 0.0
      %v629 = vmul.f32 %v587, %v596
      %v630 = vmul.f32 %v569, %v601
      %v631 = vmul.f32 %v571, %v606
      %v632 = vmul.f32 %v573, %v611
      %v633 = vmul.f32 %v575, %v616
      %v634 = vmul.f32 %v577, %v621
      %v635 = vmul.f32 %v579, %v626
      %v637 = vlaneseq
      %v638 = vshrl.u32 %v637, 7
      %v639 = vsub.s32 0, %v638
      %v640 = vrot.slane %v547, %v639
      %v642 = vmul.f32 %v628, %v640
      %v643 = vmul.f32 %v629, %v640
      %v644 = vmul.f32 %v630, %v640
      %v645 = vmul.f32 %v631, %v640
      %v646 = vmul.f32 %v632, %v640
      %v647 = vmul.f32 %v633, %v640
      %v648 = vmul.f32 %v634, %v640
      %v649 = vmul.f32 %v635, %v640
      %v651 = vlaneseq
      %v652 = vshrl.u32 %v651, 7
      %v653 = vsub.s32 0, %v652
      %v654 = vrot.slane %v548, %v653
      %v656 = vmul.f32 %v654, 0.0
      %v657 = vmul.f32 %v530, %v654
      %v658 = vmul.f32 %v531, %v654
      %v659 = vmul.f32 %v532, %v654
      %v660 = vmul.f32 %v533, %v654
      %v661 = vmul.f32 %v534, %v654
      %v662 = vmul.f32 %v535, %v654
      %v663 = vmul.f32 %v536, %v654
      %v664 = vadd.f32 %v642, %v656
      %v665 = vadd.f32 %v643, %v657
      %v666 = vadd.f32 %v644, %v658
      %v667 = vadd.f32 %v645, %v659
      %v668 = vadd.f32 %v646, %v660
      %v669 = vadd.f32 %v647, %v661
      %v670 = vadd.f32 %v648, %v662
      %v671 = vadd.f32 %v649, %v663
      %v673 = vlaneseq
      %v674 = vshrl.u32 %v673, 7
      %v675 = vsub.s32 0, %v674
      %v676 = vrot.slane %v549, %v675
      %v678 = vmul.f32 %v676, 0.0
      %v679 = vmul.f32 %v539, %v676
      %v680 = vmul.f32 %v540, %v676
      %v681 = vmul.f32 %v541, %v676
      %v682 = vmul.f32 %v542, %v676
      %v683 = vmul.f32 %v543, %v676
      %v684 = vmul.f32 %v544, %v676
      %v685 = vmul.f32 %v545, %v676
      %v686 = vadd.f32 %v664, %v678
      %v687 = vadd.f32 %v665, %v679
      %v688 = vadd.f32 %v666, %v680
      %v689 = vadd.f32 %v667, %v681
      %v690 = vadd.f32 %v668, %v682
      %v691 = vadd.f32 %v669, %v683
      %v692 = vadd.f32 %v670, %v684
      %v693 = vadd.f32 %v671, %v685
      %v702 = vrot.slane %v521, 7
      %v703 = vrot.slane %v522, 7
      %v704 = vsel %vm566, %v702, %v703
      %v705 = vrot.slane %v523, 7
      %v706 = vsel %vm566, %v703, %v705
      %v707 = vrot.slane %v524, 7
      %v708 = vsel %vm566, %v705, %v707
      %v709 = vrot.slane %v525, 7
      %v710 = vsel %vm566, %v707, %v709
      %v711 = vrot.slane %v526, 7
      %v712 = vsel %vm566, %v709, %v711
      %v713 = vrot.slane %v527, 7
      %v714 = vsel %vm566, %v711, %v713
      %v715 = vrot.slane %v528, 7
      %v716 = vsel %vm566, %v713, %v715
      %v725 = vsel %vm566, 0.0, %v702
      %v726 = vmul.f32 %v725, %v591
      %v727 = vmul.f32 %v704, %v596
      %v728 = vmul.f32 %v706, %v601
      %v729 = vmul.f32 %v708, %v606
      %v730 = vmul.f32 %v710, %v611
      %v731 = vmul.f32 %v712, %v616
      %v732 = vmul.f32 %v714, %v621
      %v733 = vmul.f32 %v716, %v626
      %v735 = vlaneseq
      %v736 = vshrl.u32 %v735, 7
      %v737 = vsub.s32 0, %v736
      %v738 = vrot.slane %v550, %v737
      %v740 = vmul.f32 %v726, %v738
      %v741 = vmul.f32 %v727, %v738
      %v742 = vmul.f32 %v728, %v738
      %v743 = vmul.f32 %v729, %v738
      %v744 = vmul.f32 %v730, %v738
      %v745 = vmul.f32 %v731, %v738
      %v746 = vmul.f32 %v732, %v738
      %v747 = vmul.f32 %v733, %v738
      %v748 = vadd.f32 %v686, %v740
      %v749 = vadd.f32 %v687, %v741
      %v750 = vadd.f32 %v688, %v742
      %v751 = vadd.f32 %v689, %v743
      %v752 = vadd.f32 %v690, %v744
      %v753 = vadd.f32 %v691, %v745
      %v754 = vadd.f32 %v692, %v746
      %v755 = vadd.f32 %v693, %v747
      %v757 = vlaneseq
      %v758 = vshrl.u32 %v757, 7
      %v759 = vsub.s32 0, %v758
      %v760 = vrot.slane %v551, %v759
      %v762 = vmul.f32 %v512, %v760
      %v763 = vmul.f32 %v513, %v760
      %v764 = vmul.f32 %v514, %v760
      %v765 = vmul.f32 %v515, %v760
      %v766 = vmul.f32 %v516, %v760
      %v767 = vmul.f32 %v517, %v760
      %v768 = vmul.f32 %v518, %v760
      %v769 = vmul.f32 %v519, %v760
      %v770 = vadd.f32 %v748, %v762
      %v771 = vadd.f32 %v749, %v763
      %v772 = vadd.f32 %v750, %v764
      %v773 = vadd.f32 %v751, %v765
      %v774 = vadd.f32 %v752, %v766
      %v775 = vadd.f32 %v753, %v767
      %v776 = vadd.f32 %v754, %v768
      %v777 = vadd.f32 %v755, %v769
      %v779 = vlaneseq
      %v780 = vshrl.u32 %v779, 7
      %v781 = vsub.s32 0, %v780
      %v782 = vrot.slane %v552, %v781
      %v784 = vmul.f32 %v521, %v782
      %v785 = vmul.f32 %v522, %v782
      %v786 = vmul.f32 %v523, %v782
      %v787 = vmul.f32 %v524, %v782
      %v788 = vmul.f32 %v525, %v782
      %v789 = vmul.f32 %v526, %v782
      %v790 = vmul.f32 %v527, %v782
      %v791 = vmul.f32 %v528, %v782
      %v792 = vadd.f32 %v770, %v784
      %v793 = vadd.f32 %v771, %v785
      %v794 = vadd.f32 %v772, %v786
      %v795 = vadd.f32 %v773, %v787
      %v796 = vadd.f32 %v774, %v788
      %v797 = vadd.f32 %v775, %v789
      %v798 = vadd.f32 %v776, %v790
      %v799 = vadd.f32 %v777, %v791
      %v801 = vrot.slane %v546, 7
      %v802 = vsel %vm566, %v578, %v801
      %v804 = vmul.f32 %v587, %v591
      %v805 = vmul.f32 %v569, %v596
      %v806 = vmul.f32 %v571, %v601
      %v807 = vmul.f32 %v573, %v606
      %v808 = vmul.f32 %v575, %v611
      %v809 = vmul.f32 %v577, %v616
      %v810 = vmul.f32 %v579, %v621
      %v811 = vmul.f32 %v802, %v626
      %v813 = vlaneseq
      %v814 = vshrl.u32 %v813, 7
      %v815 = vsub.s32 0, %v814
      %v816 = vrot.slane %v553, %v815
      %v818 = vmul.f32 %v804, %v816
      %v819 = vmul.f32 %v805, %v816
      %v820 = vmul.f32 %v806, %v816
      %v821 = vmul.f32 %v807, %v816
      %v822 = vmul.f32 %v808, %v816
      %v823 = vmul.f32 %v809, %v816
      %v824 = vmul.f32 %v810, %v816
      %v825 = vmul.f32 %v811, %v816
      %v826 = vadd.f32 %v792, %v818
      %v827 = vadd.f32 %v793, %v819
      %v828 = vadd.f32 %v794, %v820
      %v829 = vadd.f32 %v795, %v821
      %v830 = vadd.f32 %v796, %v822
      %v831 = vadd.f32 %v797, %v823
      %v832 = vadd.f32 %v798, %v824
      %v833 = vadd.f32 %v799, %v825
      %v835 = vlaneseq
      %v836 = vshrl.u32 %v835, 7
      %v837 = vsub.s32 0, %v836
      %v838 = vrot.slane %v554, %v837
      %v840 = vmul.f32 %v530, %v838
      %v841 = vmul.f32 %v531, %v838
      %v842 = vmul.f32 %v532, %v838
      %v843 = vmul.f32 %v533, %v838
      %v844 = vmul.f32 %v534, %v838
      %v845 = vmul.f32 %v535, %v838
      %v846 = vmul.f32 %v536, %v838
      %v847 = vmul.f32 %v537, %v838
      %v848 = vadd.f32 %v826, %v840
      %v849 = vadd.f32 %v827, %v841
      %v850 = vadd.f32 %v828, %v842
      %v851 = vadd.f32 %v829, %v843
      %v852 = vadd.f32 %v830, %v844
      %v853 = vadd.f32 %v831, %v845
      %v854 = vadd.f32 %v832, %v846
      %v855 = vadd.f32 %v833, %v847
      %v857 = vlaneseq
      %v858 = vshrl.u32 %v857, 7
      %v859 = vsub.s32 0, %v858
      %v860 = vrot.slane %v555, %v859
      %v862 = vmul.f32 %v539, %v860
      %v863 = vmul.f32 %v540, %v860
      %v864 = vmul.f32 %v541, %v860
      %v865 = vmul.f32 %v542, %v860
      %v866 = vmul.f32 %v543, %v860
      %v867 = vmul.f32 %v544, %v860
      %v868 = vmul.f32 %v545, %v860
      %v869 = vmul.f32 %v546, %v860
      %v870 = vadd.f32 %v848, %v862
      %v871 = vadd.f32 %v849, %v863
      %v872 = vadd.f32 %v850, %v864
      %v873 = vadd.f32 %v851, %v865
      %v874 = vadd.f32 %v852, %v866
      %v875 = vadd.f32 %v853, %v867
      %v876 = vadd.f32 %v854, %v868
      %v877 = vadd.f32 %v855, %v869
      %v879 = vlaneseq
      %v880 = vshrl.u32 %v879, 7
      %v881 = vsub.s32 0, %v880
      %v882 = vrot.slane %v556, %v881
      %v884 = vadd.f32 %v870, %v882
      %v885 = vadd.f32 %v871, %v882
      %v886 = vadd.f32 %v872, %v882
      %v887 = vadd.f32 %v873, %v882
      %v888 = vadd.f32 %v874, %v882
      %v889 = vadd.f32 %v875, %v882
      %v890 = vadd.f32 %v876, %v882
      %v891 = vadd.f32 %v877, %v882
      %v892 = vmax.f32 %v884, 0.0
      %v893 = vmax.f32 %v885, 0.0
      %v894 = vmax.f32 %v886, 0.0
      %v895 = vmax.f32 %v887, 0.0
      %v896 = vmax.f32 %v888, 0.0
      %v897 = vmax.f32 %v889, 0.0
      %v898 = vmax.f32 %v890, 0.0
      %v899 = vmax.f32 %v891, 0.0
      %v901 = vlaneseq
      %v902 = vshrl.u32 %v901, 7
      %v903 = vsub.s32 0, %v902
      %v904 = vrot.slane %v557, %v903
      %v906 = vmul.f32 %v892, %v904
      %v907 = vmul.f32 %v893, %v904
      %v908 = vmul.f32 %v894, %v904
      %v909 = vmul.f32 %v895, %v904
      %v910 = vmul.f32 %v896, %v904
      %v911 = vmul.f32 %v897, %v904
      %v912 = vmul.f32 %v898, %v904
      %v913 = vmul.f32 %v899, %v904
      %v915 = vlaneseq
      %v916 = vshrl.u32 %v915, 7
      %v917 = vsub.s32 0, %v916
      %v918 = vrot.slane %v558, %v917
      %v920 = vadd.f32 %v906, %v918
      %v921 = vadd.f32 %v907, %v918
      %v922 = vadd.f32 %v908, %v918
      %v923 = vadd.f32 %v909, %v918
      %v924 = vadd.f32 %v910, %v918
      %v925 = vadd.f32 %v911, %v918
      %v926 = vadd.f32 %v912, %v918
      %v927 = vadd.f32 %v913, %v918
      %v928 = vmul.f32 %v640, 0.0
      %v929 = vmul.f32 %v530, %v640
      %v930 = vmul.f32 %v531, %v640
      %v931 = vmul.f32 %v532, %v640
      %v932 = vmul.f32 %v533, %v640
      %v933 = vmul.f32 %v534, %v640
      %v934 = vmul.f32 %v535, %v640
      %v935 = vmul.f32 %v536, %v640
      %v936 = vmul.f32 %v539, %v654
      %v937 = vmul.f32 %v540, %v654
      %v938 = vmul.f32 %v541, %v654
      %v939 = vmul.f32 %v542, %v654
      %v940 = vmul.f32 %v543, %v654
      %v941 = vmul.f32 %v544, %v654
      %v942 = vmul.f32 %v545, %v654
      %v943 = vadd.f32 %v928, %v656
      %v944 = vadd.f32 %v929, %v936
      %v945 = vadd.f32 %v930, %v937
      %v946 = vadd.f32 %v931, %v938
      %v947 = vadd.f32 %v932, %v939
      %v948 = vadd.f32 %v933, %v940
      %v949 = vadd.f32 %v934, %v941
      %v950 = vadd.f32 %v935, %v942
      %vm959 = vcmask 1046528
      %v960 = vrot.slane %v530, 1
      %v961 = vrot.slane %v531, 1
      %v962 = vsel %vm959, %v960, %v961
      %v963 = vrot.slane %v532, 1
      %v964 = vsel %vm959, %v961, %v963
      %v965 = vrot.slane %v533, 1
      %v966 = vsel %vm959, %v963, %v965
      %v967 = vrot.slane %v534, 1
      %v968 = vsel %vm959, %v965, %v967
      %v969 = vrot.slane %v535, 1
      %v970 = vsel %vm959, %v967, %v969
      %v971 = vrot.slane %v536, 1
      %v972 = vsel %vm959, %v969, %v971
      %v973 = vrot.slane %v537, 1
      %v974 = vsel %vm959, %v971, %v973
      %v983 = vsel %vm959, 0.0, %v960
      %985 = vset.pattern.permute.xlu0 0
      %986 = vperm.xlu0 %985, %v504
      %v987 = vpop.permute.xlu0 %986
      %990 = vset.pattern.permute.xlu0 0
      %991 = vperm.xlu0 %990, %v505
      %v992 = vpop.permute.xlu0 %991
      %995 = vset.pattern.permute.xlu0 0
      %996 = vperm.xlu0 %995, %v506
      %v997 = vpop.permute.xlu0 %996
      %1000 = vset.pattern.permute.xlu0 0
      %1001 = vperm.xlu0 %1000, %v507
      %v1002 = vpop.permute.xlu0 %1001
      %1005 = vset.pattern.permute.xlu0 0
      %1006 = vperm.xlu0 %1005, %v508
      %v1007 = vpop.permute.xlu0 %1006
      %1010 = vset.pattern.permute.xlu0 0
      %1011 = vperm.xlu0 %1010, %v509
      %v1012 = vpop.permute.xlu0 %1011
      %1015 = vset.pattern.permute.xlu0 0
      %1016 = vperm.xlu0 %1015, %v510
      %v1017 = vpop.permute.xlu0 %1016
      %1020 = vset.pattern.permute.xlu0 0
      %1021 = vperm.xlu0 %1020, %v511
      %v1022 = vpop.permute.xlu0 %1021
      %v1024 = vmul.f32 %v983, %v987
      %v1025 = vmul.f32 %v962, %v992
      %v1026 = vmul.f32 %v964, %v997
      %v1027 = vmul.f32 %v966, %v1002
      %v1028 = vmul.f32 %v968, %v1007
      %v1029 = vmul.f32 %v970, %v1012
      %v1030 = vmul.f32 %v972, %v1017
      %v1031 = vmul.f32 %v974, %v1022
      %v1032 = vmul.f32 %v1024, %v676
      %v1033 = vmul.f32 %v1025, %v676
      %v1034 = vmul.f32 %v1026, %v676
      %v1035 = vmul.f32 %v1027, %v676
      %v1036 = vmul.f32 %v1028, %v676
      %v1037 = vmul.f32 %v1029, %v676
      %v1038 = vmul.f32 %v1030, %v676
      %v1039 = vmul.f32 %v1031, %v676
      %v1040 = vadd.f32 %v943, %v1032
      %v1041 = vadd.f32 %v944, %v1033
      %v1042 = vadd.f32 %v945, %v1034
      %v1043 = vadd.f32 %v946, %v1035
      %v1044 = vadd.f32 %v947, %v1036
      %v1045 = vadd.f32 %v948, %v1037
      %v1046 = vadd.f32 %v949, %v1038
      %v1047 = vadd.f32 %v950, %v1039
      %v1048 = vmul.f32 %v512, %v738
      %v1049 = vmul.f32 %v513, %v738
      %v1050 = vmul.f32 %v514, %v738
      %v1051 = vmul.f32 %v515, %v738
      %v1052 = vmul.f32 %v516, %v738
      %v1053 = vmul.f32 %v517, %v738
      %v1054 = vmul.f32 %v518, %v738
      %v1055 = vmul.f32 %v519, %v738
      %v1056 = vadd.f32 %v1040, %v1048
      %v1057 = vadd.f32 %v1041, %v1049
      %v1058 = vadd.f32 %v1042, %v1050
      %v1059 = vadd.f32 %v1043, %v1051
      %v1060 = vadd.f32 %v1044, %v1052
      %v1061 = vadd.f32 %v1045, %v1053
      %v1062 = vadd.f32 %v1046, %v1054
      %v1063 = vadd.f32 %v1047, %v1055
      %v1064 = vmul.f32 %v521, %v760
      %v1065 = vmul.f32 %v522, %v760
      %v1066 = vmul.f32 %v523, %v760
      %v1067 = vmul.f32 %v524, %v760
      %v1068 = vmul.f32 %v525, %v760
      %v1069 = vmul.f32 %v526, %v760
      %v1070 = vmul.f32 %v527, %v760
      %v1071 = vmul.f32 %v528, %v760
      %v1072 = vadd.f32 %v1056, %v1064
      %v1073 = vadd.f32 %v1057, %v1065
      %v1074 = vadd.f32 %v1058, %v1066
      %v1075 = vadd.f32 %v1059, %v1067
      %v1076 = vadd.f32 %v1060, %v1068
      %v1077 = vadd.f32 %v1061, %v1069
      %v1078 = vadd.f32 %v1062, %v1070
      %v1079 = vadd.f32 %v1063, %v1071
      %v1088 = vrot.slane %v512, 1
      %v1089 = vrot.slane %v513, 1
      %v1090 = vsel %vm959, %v1088, %v1089
      %v1091 = vrot.slane %v514, 1
      %v1092 = vsel %vm959, %v1089, %v1091
      %v1093 = vrot.slane %v515, 1
      %v1094 = vsel %vm959, %v1091, %v1093
      %v1095 = vrot.slane %v516, 1
      %v1096 = vsel %vm959, %v1093, %v1095
      %v1097 = vrot.slane %v517, 1
      %v1098 = vsel %vm959, %v1095, %v1097
      %v1099 = vrot.slane %v518, 1
      %v1100 = vsel %vm959, %v1097, %v1099
      %v1101 = vrot.slane %v519, 1
      %v1102 = vsel %vm959, %v1099, %v1101
      %v1111 = vsel %vm959, %v1101, 0.0
      %v1112 = vmul.f32 %v1090, %v987
      %v1113 = vmul.f32 %v1092, %v992
      %v1114 = vmul.f32 %v1094, %v997
      %v1115 = vmul.f32 %v1096, %v1002
      %v1116 = vmul.f32 %v1098, %v1007
      %v1117 = vmul.f32 %v1100, %v1012
      %v1118 = vmul.f32 %v1102, %v1017
      %v1119 = vmul.f32 %v1111, %v1022
      %v1120 = vmul.f32 %v1112, %v782
      %v1121 = vmul.f32 %v1113, %v782
      %v1122 = vmul.f32 %v1114, %v782
      %v1123 = vmul.f32 %v1115, %v782
      %v1124 = vmul.f32 %v1116, %v782
      %v1125 = vmul.f32 %v1117, %v782
      %v1126 = vmul.f32 %v1118, %v782
      %v1127 = vmul.f32 %v1119, %v782
      %v1128 = vadd.f32 %v1072, %v1120
      %v1129 = vadd.f32 %v1073, %v1121
      %v1130 = vadd.f32 %v1074, %v1122
      %v1131 = vadd.f32 %v1075, %v1123
      %v1132 = vadd.f32 %v1076, %v1124
      %v1133 = vadd.f32 %v1077, %v1125
      %v1134 = vadd.f32 %v1078, %v1126
      %v1135 = vadd.f32 %v1079, %v1127
      %v1136 = vmul.f32 %v530, %v816
      %v1137 = vmul.f32 %v531, %v816
      %v1138 = vmul.f32 %v532, %v816
      %v1139 = vmul.f32 %v533, %v816
      %v1140 = vmul.f32 %v534, %v816
      %v1141 = vmul.f32 %v535, %v816
      %v1142 = vmul.f32 %v536, %v816
      %v1143 = vmul.f32 %v537, %v816
      %v1144 = vadd.f32 %v1128, %v1136
      %v1145 = vadd.f32 %v1129, %v1137
      %v1146 = vadd.f32 %v1130, %v1138
      %v1147 = vadd.f32 %v1131, %v1139
      %v1148 = vadd.f32 %v1132, %v1140
      %v1149 = vadd.f32 %v1133, %v1141
      %v1150 = vadd.f32 %v1134, %v1142
      %v1151 = vadd.f32 %v1135, %v1143
      %v1152 = vmul.f32 %v539, %v838
      %v1153 = vmul.f32 %v540, %v838
      %v1154 = vmul.f32 %v541, %v838
      %v1155 = vmul.f32 %v542, %v838
      %v1156 = vmul.f32 %v543, %v838
      %v1157 = vmul.f32 %v544, %v838
      %v1158 = vmul.f32 %v545, %v838
      %v1159 = vmul.f32 %v546, %v838
      %v1160 = vadd.f32 %v1144, %v1152
      %v1161 = vadd.f32 %v1145, %v1153
      %v1162 = vadd.f32 %v1146, %v1154
      %v1163 = vadd.f32 %v1147, %v1155
      %v1164 = vadd.f32 %v1148, %v1156
      %v1165 = vadd.f32 %v1149, %v1157
      %v1166 = vadd.f32 %v1150, %v1158
      %v1167 = vadd.f32 %v1151, %v1159
      %v1169 = vsel %vm959, %v973, 0.0
      %v1170 = vmul.f32 %v962, %v987
      %v1171 = vmul.f32 %v964, %v992
      %v1172 = vmul.f32 %v966, %v997
      %v1173 = vmul.f32 %v968, %v1002
      %v1174 = vmul.f32 %v970, %v1007
      %v1175 = vmul.f32 %v972, %v1012
      %v1176 = vmul.f32 %v974, %v1017
      %v1177 = vmul.f32 %v1169, %v1022
      %v1178 = vmul.f32 %v1170, %v860
      %v1179 = vmul.f32 %v1171, %v860
      %v1180 = vmul.f32 %v1172, %v860
      %v1181 = vmul.f32 %v1173, %v860
      %v1182 = vmul.f32 %v1174, %v860
      %v1183 = vmul.f32 %v1175, %v860
      %v1184 = vmul.f32 %v1176, %v860
      %v1185 = vmul.f32 %v1177, %v860
      %v1186 = vadd.f32 %v1160, %v1178
      %v1187 = vadd.f32 %v1161, %v1179
      %v1188 = vadd.f32 %v1162, %v1180
      %v1189 = vadd.f32 %v1163, %v1181
      %v1190 = vadd.f32 %v1164, %v1182
      %v1191 = vadd.f32 %v1165, %v1183
      %v1192 = vadd.f32 %v1166, %v1184
      %v1193 = vadd.f32 %v1167, %v1185
      %v1194 = vadd.f32 %v1186, %v882
      %v1195 = vadd.f32 %v1187, %v882
      %v1196 = vadd.f32 %v1188, %v882
      %v1197 = vadd.f32 %v1189, %v882
      %v1198 = vadd.f32 %v1190, %v882
      %v1199 = vadd.f32 %v1191, %v882
      %v1200 = vadd.f32 %v1192, %v882
      %v1201 = vadd.f32 %v1193, %v882
      %v1202 = vmax.f32 %v1194, 0.0
      %v1203 = vmax.f32 %v1195, 0.0
      %v1204 = vmax.f32 %v1196, 0.0
      %v1205 = vmax.f32 %v1197, 0.0
      %v1206 = vmax.f32 %v1198, 0.0
      %v1207 = vmax.f32 %v1199, 0.0
      %v1208 = vmax.f32 %v1200, 0.0
      %v1209 = vmax.f32 %v1201, 0.0
      %v1210 = vmul.f32 %v1202, %v904
      %v1211 = vmul.f32 %v1203, %v904
      %v1212 = vmul.f32 %v1204, %v904
      %v1213 = vmul.f32 %v1205, %v904
      %v1214 = vmul.f32 %v1206, %v904
      %v1215 = vmul.f32 %v1207, %v904
      %v1216 = vmul.f32 %v1208, %v904
      %v1217 = vmul.f32 %v1209, %v904
      %v1218 = vadd.f32 %v1210, %v918
      %v1219 = vadd.f32 %v1211, %v918
      %v1220 = vadd.f32 %v1212, %v918
      %v1221 = vadd.f32 %v1213, %v918
      %v1222 = vadd.f32 %v1214, %v918
      %v1223 = vadd.f32 %v1215, %v918
      %v1224 = vadd.f32 %v1216, %v918
      %v1225 = vadd.f32 %v1217, %v918
      %v1226 = vmul.f32 %v726, %v640
      %v1227 = vmul.f32 %v727, %v640
      %v1228 = vmul.f32 %v728, %v640
      %v1229 = vmul.f32 %v729, %v640
      %v1230 = vmul.f32 %v730, %v640
      %v1231 = vmul.f32 %v731, %v640
      %v1232 = vmul.f32 %v732, %v640
      %v1233 = vmul.f32 %v733, %v640
      %v1234 = vmul.f32 %v512, %v654
      %v1235 = vmul.f32 %v513, %v654
      %v1236 = vmul.f32 %v514, %v654
      %v1237 = vmul.f32 %v515, %v654
      %v1238 = vmul.f32 %v516, %v654
      %v1239 = vmul.f32 %v517, %v654
      %v1240 = vmul.f32 %v518, %v654
      %v1241 = vmul.f32 %v519, %v654
      %v1242 = vadd.f32 %v1226, %v1234
      %v1243 = vadd.f32 %v1227, %v1235
      %v1244 = vadd.f32 %v1228, %v1236
      %v1245 = vadd.f32 %v1229, %v1237
      %v1246 = vadd.f32 %v1230, %v1238
      %v1247 = vadd.f32 %v1231, %v1239
      %v1248 = vadd.f32 %v1232, %v1240
      %v1249 = vadd.f32 %v1233, %v1241
      %v1250 = vmul.f32 %v521, %v676
      %v1251 = vmul.f32 %v522, %v676
      %v1252 = vmul.f32 %v523, %v676
      %v1253 = vmul.f32 %v524, %v676
      %v1254 = vmul.f32 %v525, %v676
      %v1255 = vmul.f32 %v526, %v676
      %v1256 = vmul.f32 %v527, %v676
      %v1257 = vmul.f32 %v528, %v676
      %v1258 = vadd.f32 %v1242, %v1250
      %v1259 = vadd.f32 %v1243, %v1251
      %v1260 = vadd.f32 %v1244, %v1252
      %v1261 = vadd.f32 %v1245, %v1253
      %v1262 = vadd.f32 %v1246, %v1254
      %v1263 = vadd.f32 %v1247, %v1255
      %v1264 = vadd.f32 %v1248, %v1256
      %v1265 = vadd.f32 %v1249, %v1257
      %v1266 = vmul.f32 %v804, %v738
      %v1267 = vmul.f32 %v805, %v738
      %v1268 = vmul.f32 %v806, %v738
      %v1269 = vmul.f32 %v807, %v738
      %v1270 = vmul.f32 %v808, %v738
      %v1271 = vmul.f32 %v809, %v738
      %v1272 = vmul.f32 %v810, %v738
      %v1273 = vmul.f32 %v811, %v738
      %v1274 = vadd.f32 %v1258, %v1266
      %v1275 = vadd.f32 %v1259, %v1267
      %v1276 = vadd.f32 %v1260, %v1268
      %v1277 = vadd.f32 %v1261, %v1269
      %v1278 = vadd.f32 %v1262, %v1270
      %v1279 = vadd.f32 %v1263, %v1271
      %v1280 = vadd.f32 %v1264, %v1272
      %v1281 = vadd.f32 %v1265, %v1273
      %v1282 = vmul.f32 %v530, %v760
      %v1283 = vmul.f32 %v531, %v760
      %v1284 = vmul.f32 %v532, %v760
      %v1285 = vmul.f32 %v533, %v760
      %v1286 = vmul.f32 %v534, %v760
      %v1287 = vmul.f32 %v535, %v760
      %v1288 = vmul.f32 %v536, %v760
      %v1289 = vmul.f32 %v537, %v760
      %v1290 = vadd.f32 %v1274, %v1282
      %v1291 = vadd.f32 %v1275, %v1283
      %v1292 = vadd.f32 %v1276, %v1284
      %v1293 = vadd.f32 %v1277, %v1285
      %v1294 = vadd.f32 %v1278, %v1286
      %v1295 = vadd.f32 %v1279, %v1287
      %v1296 = vadd.f32 %v1280, %v1288
      %v1297 = vadd.f32 %v1281, %v1289
      %v1298 = vmul.f32 %v539, %v782
      %v1299 = vmul.f32 %v540, %v782
      %v1300 = vmul.f32 %v541, %v782
      %v1301 = vmul.f32 %v542, %v782
      %v1302 = vmul.f32 %v543, %v782
      %v1303 = vmul.f32 %v544, %v782
      %v1304 = vmul.f32 %v545, %v782
      %v1305 = vmul.f32 %v546, %v782
      %v1306 = vadd.f32 %v1290, %v1298
      %v1307 = vadd.f32 %v1291, %v1299
      %v1308 = vadd.f32 %v1292, %v1300
      %v1309 = vadd.f32 %v1293, %v1301
      %v1310 = vadd.f32 %v1294, %v1302
      %v1311 = vadd.f32 %v1295, %v1303
      %v1312 = vadd.f32 %v1296, %v1304
      %v1313 = vadd.f32 %v1297, %v1305
      %v1315 = vsel %vm566, %v715, 0.0
      %v1316 = vmul.f32 %v704, %v591
      %v1317 = vmul.f32 %v706, %v596
      %v1318 = vmul.f32 %v708, %v601
      %v1319 = vmul.f32 %v710, %v606
      %v1320 = vmul.f32 %v712, %v611
      %v1321 = vmul.f32 %v714, %v616
      %v1322 = vmul.f32 %v716, %v621
      %v1323 = vmul.f32 %v1315, %v626
      %v1324 = vmul.f32 %v1316, %v816
      %v1325 = vmul.f32 %v1317, %v816
      %v1326 = vmul.f32 %v1318, %v816
      %v1327 = vmul.f32 %v1319, %v816
      %v1328 = vmul.f32 %v1320, %v816
      %v1329 = vmul.f32 %v1321, %v816
      %v1330 = vmul.f32 %v1322, %v816
      %v1331 = vmul.f32 %v1323, %v816
      %v1332 = vadd.f32 %v1306, %v1324
      %v1333 = vadd.f32 %v1307, %v1325
      %v1334 = vadd.f32 %v1308, %v1326
      %v1335 = vadd.f32 %v1309, %v1327
      %v1336 = vadd.f32 %v1310, %v1328
      %v1337 = vadd.f32 %v1311, %v1329
      %v1338 = vadd.f32 %v1312, %v1330
      %v1339 = vadd.f32 %v1313, %v1331
      %v1340 = vmul.f32 %v513, %v838
      %v1341 = vmul.f32 %v514, %v838
      %v1342 = vmul.f32 %v515, %v838
      %v1343 = vmul.f32 %v516, %v838
      %v1344 = vmul.f32 %v517, %v838
      %v1345 = vmul.f32 %v518, %v838
      %v1346 = vmul.f32 %v519, %v838
      %v1347 = vmul.f32 %v838, 0.0
      %v1348 = vadd.f32 %v1332, %v1340
      %v1349 = vadd.f32 %v1333, %v1341
      %v1350 = vadd.f32 %v1334, %v1342
      %v1351 = vadd.f32 %v1335, %v1343
      %v1352 = vadd.f32 %v1336, %v1344
      %v1353 = vadd.f32 %v1337, %v1345
      %v1354 = vadd.f32 %v1338, %v1346
      %v1355 = vadd.f32 %v1339, %v1347
      %v1356 = vmul.f32 %v522, %v860
      %v1357 = vmul.f32 %v523, %v860
      %v1358 = vmul.f32 %v524, %v860
      %v1359 = vmul.f32 %v525, %v860
      %v1360 = vmul.f32 %v526, %v860
      %v1361 = vmul.f32 %v527, %v860
      %v1362 = vmul.f32 %v528, %v860
      %v1363 = vmul.f32 %v860, 0.0
      %v1364 = vadd.f32 %v1348, %v1356
      %v1365 = vadd.f32 %v1349, %v1357
      %v1366 = vadd.f32 %v1350, %v1358
      %v1367 = vadd.f32 %v1351, %v1359
      %v1368 = vadd.f32 %v1352, %v1360
      %v1369 = vadd.f32 %v1353, %v1361
      %v1370 = vadd.f32 %v1354, %v1362
      %v1371 = vadd.f32 %v1355, %v1363
      %v1372 = vadd.f32 %v1364, %v882
      %v1373 = vadd.f32 %v1365, %v882
      %v1374 = vadd.f32 %v1366, %v882
      %v1375 = vadd.f32 %v1367, %v882
      %v1376 = vadd.f32 %v1368, %v882
      %v1377 = vadd.f32 %v1369, %v882
      %v1378 = vadd.f32 %v1370, %v882
      %v1379 = vadd.f32 %v1371, %v882
      %v1380 = vmax.f32 %v1372, 0.0
      %v1381 = vmax.f32 %v1373, 0.0
      %v1382 = vmax.f32 %v1374, 0.0
      %v1383 = vmax.f32 %v1375, 0.0
      %v1384 = vmax.f32 %v1376, 0.0
      %v1385 = vmax.f32 %v1377, 0.0
      %v1386 = vmax.f32 %v1378, 0.0
      %v1387 = vmax.f32 %v1379, 0.0
      %v1388 = vmul.f32 %v1380, %v904
      %v1389 = vmul.f32 %v1381, %v904
      %v1390 = vmul.f32 %v1382, %v904
      %v1391 = vmul.f32 %v1383, %v904
      %v1392 = vmul.f32 %v1384, %v904
      %v1393 = vmul.f32 %v1385, %v904
      %v1394 = vmul.f32 %v1386, %v904
      %v1395 = vmul.f32 %v1387, %v904
      %v1396 = vadd.f32 %v1388, %v918
      %v1397 = vadd.f32 %v1389, %v918
      %v1398 = vadd.f32 %v1390, %v918
      %v1399 = vadd.f32 %v1391, %v918
      %v1400 = vadd.f32 %v1392, %v918
      %v1401 = vadd.f32 %v1393, %v918
      %v1402 = vadd.f32 %v1394, %v918
      %v1403 = vadd.f32 %v1395, %v918
      %v1404 = vmul.f32 %v512, %v640
      %v1405 = vmul.f32 %v513, %v640
      %v1406 = vmul.f32 %v514, %v640
      %v1407 = vmul.f32 %v515, %v640
      %v1408 = vmul.f32 %v516, %v640
      %v1409 = vmul.f32 %v517, %v640
      %v1410 = vmul.f32 %v518, %v640
      %v1411 = vmul.f32 %v519, %v640
      %v1412 = vmul.f32 %v521, %v654
      %v1413 = vmul.f32 %v522, %v654
      %v1414 = vmul.f32 %v523, %v654
      %v1415 = vmul.f32 %v524, %v654
      %v1416 = vmul.f32 %v525, %v654
      %v1417 = vmul.f32 %v526, %v654
      %v1418 = vmul.f32 %v527, %v654
      %v1419 = vmul.f32 %v528, %v654
      %v1420 = vadd.f32 %v1404, %v1412
      %v1421 = vadd.f32 %v1405, %v1413
      %v1422 = vadd.f32 %v1406, %v1414
      %v1423 = vadd.f32 %v1407, %v1415
      %v1424 = vadd.f32 %v1408, %v1416
      %v1425 = vadd.f32 %v1409, %v1417
      %v1426 = vadd.f32 %v1410, %v1418
      %v1427 = vadd.f32 %v1411, %v1419
      %v1428 = vmul.f32 %v1112, %v676
      %v1429 = vmul.f32 %v1113, %v676
      %v1430 = vmul.f32 %v1114, %v676
      %v1431 = vmul.f32 %v1115, %v676
      %v1432 = vmul.f32 %v1116, %v676
      %v1433 = vmul.f32 %v1117, %v676
      %v1434 = vmul.f32 %v1118, %v676
      %v1435 = vmul.f32 %v1119, %v676
      %v1436 = vadd.f32 %v1420, %v1428
      %v1437 = vadd.f32 %v1421, %v1429
      %v1438 = vadd.f32 %v1422, %v1430
      %v1439 = vadd.f32 %v1423, %v1431
      %v1440 = vadd.f32 %v1424, %v1432
      %v1441 = vadd.f32 %v1425, %v1433
      %v1442 = vadd.f32 %v1426, %v1434
      %v1443 = vadd.f32 %v1427, %v1435
      %v1444 = vmul.f32 %v530, %v738
      %v1445 = vmul.f32 %v531, %v738
      %v1446 = vmul.f32 %v532, %v738
      %v1447 = vmul.f32 %v533, %v738
      %v1448 = vmul.f32 %v534, %v738
      %v1449 = vmul.f32 %v535, %v738
      %v1450 = vmul.f32 %v536, %v738
      %v1451 = vmul.f32 %v537, %v738
      %v1452 = vadd.f32 %v1436, %v1444
      %v1453 = vadd.f32 %v1437, %v1445
      %v1454 = vadd.f32 %v1438, %v1446
      %v1455 = vadd.f32 %v1439, %v1447
      %v1456 = vadd.f32 %v1440, %v1448
      %v1457 = vadd.f32 %v1441, %v1449
      %v1458 = vadd.f32 %v1442, %v1450
      %v1459 = vadd.f32 %v1443, %v1451
      %v1460 = vmul.f32 %v539, %v760
      %v1461 = vmul.f32 %v540, %v760
      %v1462 = vmul.f32 %v541, %v760
      %v1463 = vmul.f32 %v542, %v760
      %v1464 = vmul.f32 %v543, %v760
      %v1465 = vmul.f32 %v544, %v760
      %v1466 = vmul.f32 %v545, %v760
      %v1467 = vmul.f32 %v546, %v760
      %v1468 = vadd.f32 %v1452, %v1460
      %v1469 = vadd.f32 %v1453, %v1461
      %v1470 = vadd.f32 %v1454, %v1462
      %v1471 = vadd.f32 %v1455, %v1463
      %v1472 = vadd.f32 %v1456, %v1464
      %v1473 = vadd.f32 %v1457, %v1465
      %v1474 = vadd.f32 %v1458, %v1466
      %v1475 = vadd.f32 %v1459, %v1467
      %v1476 = vmul.f32 %v1170, %v782
      %v1477 = vmul.f32 %v1171, %v782
      %v1478 = vmul.f32 %v1172, %v782
      %v1479 = vmul.f32 %v1173, %v782
      %v1480 = vmul.f32 %v1174, %v782
      %v1481 = vmul.f32 %v1175, %v782
      %v1482 = vmul.f32 %v1176, %v782
      %v1483 = vmul.f32 %v1177, %v782
      %v1484 = vadd.f32 %v1468, %v1476
      %v1485 = vadd.f32 %v1469, %v1477
      %v1486 = vadd.f32 %v1470, %v1478
      %v1487 = vadd.f32 %v1471, %v1479
      %v1488 = vadd.f32 %v1472, %v1480
      %v1489 = vadd.f32 %v1473, %v1481
      %v1490 = vadd.f32 %v1474, %v1482
      %v1491 = vadd.f32 %v1475, %v1483
      %v1492 = vmul.f32 %v513, %v816
      %v1493 = vmul.f32 %v514, %v816
      %v1494 = vmul.f32 %v515, %v816
      %v1495 = vmul.f32 %v516, %v816
      %v1496 = vmul.f32 %v517, %v816
      %v1497 = vmul.f32 %v518, %v816
      %v1498 = vmul.f32 %v519, %v816
      %v1499 = vmul.f32 %v816, 0.0
      %v1500 = vadd.f32 %v1484, %v1492
      %v1501 = vadd.f32 %v1485, %v1493
      %v1502 = vadd.f32 %v1486, %v1494
      %v1503 = vadd.f32 %v1487, %v1495
      %v1504 = vadd.f32 %v1488, %v1496
      %v1505 = vadd.f32 %v1489, %v1497
      %v1506 = vadd.f32 %v1490, %v1498
      %v1507 = vadd.f32 %v1491, %v1499
      %v1508 = vmul.f32 %v522, %v838
      %v1509 = vmul.f32 %v523, %v838
      %v1510 = vmul.f32 %v524, %v838
      %v1511 = vmul.f32 %v525, %v838
      %v1512 = vmul.f32 %v526, %v838
      %v1513 = vmul.f32 %v527, %v838
      %v1514 = vmul.f32 %v528, %v838
      %v1515 = vadd.f32 %v1500, %v1508
      %v1516 = vadd.f32 %v1501, %v1509
      %v1517 = vadd.f32 %v1502, %v1510
      %v1518 = vadd.f32 %v1503, %v1511
      %v1519 = vadd.f32 %v1504, %v1512
      %v1520 = vadd.f32 %v1505, %v1513
      %v1521 = vadd.f32 %v1506, %v1514
      %v1522 = vadd.f32 %v1507, %v1347
      %v1523 = vmul.f32 %v1092, %v987
      %v1524 = vmul.f32 %v1094, %v992
      %v1525 = vmul.f32 %v1096, %v997
      %v1526 = vmul.f32 %v1098, %v1002
      %v1527 = vmul.f32 %v1100, %v1007
      %v1528 = vmul.f32 %v1102, %v1012
      %v1529 = vmul.f32 %v1111, %v1017
      %v1530 = vmul.f32 %v1022, 0.0
      %v1531 = vmul.f32 %v1523, %v860
      %v1532 = vmul.f32 %v1524, %v860
      %v1533 = vmul.f32 %v1525, %v860
      %v1534 = vmul.f32 %v1526, %v860
      %v1535 = vmul.f32 %v1527, %v860
      %v1536 = vmul.f32 %v1528, %v860
      %v1537 = vmul.f32 %v1529, %v860
      %v1538 = vmul.f32 %v1530, %v860
      %v1539 = vadd.f32 %v1515, %v1531
      %v1540 = vadd.f32 %v1516, %v1532
      %v1541 = vadd.f32 %v1517, %v1533
      %v1542 = vadd.f32 %v1518, %v1534
      %v1543 = vadd.f32 %v1519, %v1535
      %v1544 = vadd.f32 %v1520, %v1536
      %v1545 = vadd.f32 %v1521, %v1537
      %v1546 = vadd.f32 %v1522, %v1538
      %v1547 = vadd.f32 %v1539, %v882
      %v1548 = vadd.f32 %v1540, %v882
      %v1549 = vadd.f32 %v1541, %v882
      %v1550 = vadd.f32 %v1542, %v882
      %v1551 = vadd.f32 %v1543, %v882
      %v1552 = vadd.f32 %v1544, %v882
      %v1553 = vadd.f32 %v1545, %v882
      %v1554 = vadd.f32 %v1546, %v882
      %v1555 = vmax.f32 %v1547, 0.0
      %v1556 = vmax.f32 %v1548, 0.0
      %v1557 = vmax.f32 %v1549, 0.0
      %v1558 = vmax.f32 %v1550, 0.0
      %v1559 = vmax.f32 %v1551, 0.0
      %v1560 = vmax.f32 %v1552, 0.0
      %v1561 = vmax.f32 %v1553, 0.0
      %v1562 = vmax.f32 %v1554, 0.0
      %v1563 = vmul.f32 %v1555, %v904
      %v1564 = vmul.f32 %v1556, %v904
      %v1565 = vmul.f32 %v1557, %v904
      %v1566 = vmul.f32 %v1558, %v904
      %v1567 = vmul.f32 %v1559, %v904
      %v1568 = vmul.f32 %v1560, %v904
      %v1569 = vmul.f32 %v1561, %v904
      %v1570 = vmul.f32 %v1562, %v904
      %v1571 = vadd.f32 %v1563, %v918
      %v1572 = vadd.f32 %v1564, %v918
      %v1573 = vadd.f32 %v1565, %v918
      %v1574 = vadd.f32 %v1566, %v918
      %v1575 = vadd.f32 %v1567, %v918
      %v1576 = vadd.f32 %v1568, %v918
      %v1577 = vadd.f32 %v1569, %v918
      %v1578 = vadd.f32 %v1570, %v918
      %v1579 = vmul.f32 %v920, 0.5
      %v1580 = vmul.f32 %v921, 0.5
      %v1581 = vmul.f32 %v922, 0.5
      %v1582 = vmul.f32 %v923, 0.5
      %v1583 = vmul.f32 %v924, 0.5
      %v1584 = vmul.f32 %v925, 0.5
      %v1585 = vmul.f32 %v926, 0.5
      %v1586 = vmul.f32 %v927, 0.5
      %v1587 = vmul.f32 %v1218, 0.5
      %v1588 = vmul.f32 %v1219, 0.5
      %v1589 = vmul.f32 %v1220, 0.5
      %v1590 = vmul.f32 %v1221, 0.5
      %v1591 = vmul.f32 %v1222, 0.5
      %v1592 = vmul.f32 %v1223, 0.5
      %v1593 = vmul.f32 %v1224, 0.5
      %v1594 = vmul.f32 %v1225, 0.5
      %v1595 = vadd.f32 %v1579, %v1587
      %v1596 = vadd.f32 %v1580, %v1588
      %v1597 = vadd.f32 %v1581, %v1589
      %v1598 = vadd.f32 %v1582, %v1590
      %v1599 = vadd.f32 %v1583, %v1591
      %v1600 = vadd.f32 %v1584, %v1592
      %v1601 = vadd.f32 %v1585, %v1593
      %v1602 = vadd.f32 %v1586, %v1594
      %v1603 = vmul.f32 %v1396, 0.5
      %v1604 = vmul.f32 %v1397, 0.5
      %v1605 = vmul.f32 %v1398, 0.5
      %v1606 = vmul.f32 %v1399, 0.5
      %v1607 = vmul.f32 %v1400, 0.5
      %v1608 = vmul.f32 %v1401, 0.5
      %v1609 = vmul.f32 %v1402, 0.5
      %v1610 = vmul.f32 %v1403, 0.5
      %v1611 = vadd.f32 %v1595, %v1603
      %v1612 = vadd.f32 %v1596, %v1604
      %v1613 = vadd.f32 %v1597, %v1605
      %v1614 = vadd.f32 %v1598, %v1606
      %v1615 = vadd.f32 %v1599, %v1607
      %v1616 = vadd.f32 %v1600, %v1608
      %v1617 = vadd.f32 %v1601, %v1609
      %v1618 = vadd.f32 %v1602, %v1610
      %v1619 = vmul.f32 %v1571, 0.5
      %v1620 = vmul.f32 %v1572, 0.5
      %v1621 = vmul.f32 %v1573, 0.5
      %v1622 = vmul.f32 %v1574, 0.5
      %v1623 = vmul.f32 %v1575, 0.5
      %v1624 = vmul.f32 %v1576, 0.5
      %v1625 = vmul.f32 %v1577, 0.5
      %v1626 = vmul.f32 %v1578, 0.5
      %v1627 = vadd.f32 %v1611, %v1619
      %v1628 = vadd.f32 %v1612, %v1620
      %v1629 = vadd.f32 %v1613, %v1621
      %v1630 = vadd.f32 %v1614, %v1622
      %v1631 = vadd.f32 %v1615, %v1623
      %v1632 = vadd.f32 %v1616, %v1624
      %v1633 = vadd.f32 %v1617, %v1625
      %v1634 = vadd.f32 %v1618, %v1626
      %v1635 = vmul.f32 %v1396, -0.5
      %v1636 = vmul.f32 %v1397, -0.5
      %v1637 = vmul.f32 %v1398, -0.5
      %v1638 = vmul.f32 %v1399, -0.5
      %v1639 = vmul.f32 %v1400, -0.5
      %v1640 = vmul.f32 %v1401, -0.5
      %v1641 = vmul.f32 %v1402, -0.5
      %v1642 = vmul.f32 %v1403, -0.5
      %v1643 = vadd.f32 %v1595, %v1635
      %v1644 = vadd.f32 %v1596, %v1636
      %v1645 = vadd.f32 %v1597, %v1637
      %v1646 = vadd.f32 %v1598, %v1638
      %v1647 = vadd.f32 %v1599, %v1639
      %v1648 = vadd.f32 %v1600, %v1640
      %v1649 = vadd.f32 %v1601, %v1641
      %v1650 = vadd.f32 %v1602, %v1642
      %v1651 = vmul.f32 %v1571, -0.5
      %v1652 = vmul.f32 %v1572, -0.5
      %v1653 = vmul.f32 %v1573, -0.5
      %v1654 = vmul.f32 %v1574, -0.5
      %v1655 = vmul.f32 %v1575, -0.5
      %v1656 = vmul.f32 %v1576, -0.5
      %v1657 = vmul.f32 %v1577, -0.5
      %v1658 = vmul.f32 %v1578, -0.5
      %v1659 = vadd.f32 %v1643, %v1651
      %v1660 = vadd.f32 %v1644, %v1652
      %v1661 = vadd.f32 %v1645, %v1653
      %v1662 = vadd.f32 %v1646, %v1654
      %v1663 = vadd.f32 %v1647, %v1655
      %v1664 = vadd.f32 %v1648, %v1656
      %v1665 = vadd.f32 %v1649, %v1657
      %v1666 = vadd.f32 %v1650, %v1658
      %v1667 = vld [vmem:[%s7] sm:$0x1]
      %v1668 = vld [vmem:[%s7 + $0x1] sm:$0x1]
      %v1669 = vld [vmem:[%s7 + $0x2] sm:$0x1]
      %v1670 = vld [vmem:[%s7 + $0x3] sm:$0x1]
      %v1671 = vld [vmem:[%s7 + $0x4] sm:$0x1]
      %v1672 = vld [vmem:[%s7 + $0x5] sm:$0x1]
      %v1673 = vld [vmem:[%s7 + $0x6] sm:$0x1]
      %v1674 = vld [vmem:[%s7 + $0x7] sm:$0x1]
      %v1675 = vld [vmem:[%s7 + $0x8] sm:$0x1]
      %v1677 = vlaneseq
      %v1678 = vshrl.u32 %v1677, 7
      %v1679 = vsub.s32 0, %v1678
      %v1680 = vrot.slane %v1671, %v1679
      %v1682 = vmul.f32 %v1627, %v1680
      %v1683 = vmul.f32 %v1628, %v1680
      %v1684 = vmul.f32 %v1629, %v1680
      %v1685 = vmul.f32 %v1630, %v1680
      %v1686 = vmul.f32 %v1631, %v1680
      %v1687 = vmul.f32 %v1632, %v1680
      %v1688 = vmul.f32 %v1633, %v1680
      %v1689 = vmul.f32 %v1634, %v1680
      %v1697 = vrot.slane %v1627, 7
      %v1698 = vrot.slane %v1628, 7
      %v1699 = vsel %vm566, %v1697, %v1698
      %v1700 = vrot.slane %v1629, 7
      %v1701 = vsel %vm566, %v1698, %v1700
      %v1702 = vrot.slane %v1630, 7
      %v1703 = vsel %vm566, %v1700, %v1702
      %v1704 = vrot.slane %v1631, 7
      %v1705 = vsel %vm566, %v1702, %v1704
      %v1706 = vrot.slane %v1632, 7
      %v1707 = vsel %vm566, %v1704, %v1706
      %v1708 = vrot.slane %v1633, 7
      %v1709 = vsel %vm566, %v1706, %v1708
      %v1717 = vsel %vm566, 0.0, %v1697
      %v1718 = vmul.f32 %v1717, %v596
      %v1719 = vmul.f32 %v1699, %v601
      %v1720 = vmul.f32 %v1701, %v606
      %v1721 = vmul.f32 %v1703, %v611
      %v1722 = vmul.f32 %v1705, %v616
      %v1723 = vmul.f32 %v1707, %v621
      %v1724 = vmul.f32 %v1709, %v626
      %v1726 = vlaneseq
      %v1727 = vshrl.u32 %v1726, 7
      %v1728 = vsub.s32 0, %v1727
      %v1729 = vrot.slane %v1667, %v1728
      %v1731 = vmul.f32 %v628, %v1729
      %v1732 = vmul.f32 %v1718, %v1729
      %v1733 = vmul.f32 %v1719, %v1729
      %v1734 = vmul.f32 %v1720, %v1729
      %v1735 = vmul.f32 %v1721, %v1729
      %v1736 = vmul.f32 %v1722, %v1729
      %v1737 = vmul.f32 %v1723, %v1729
      %v1738 = vmul.f32 %v1724, %v1729
      %v1739 = vadd.f32 %v1682, %v1731
      %v1740 = vadd.f32 %v1683, %v1732
      %v1741 = vadd.f32 %v1684, %v1733
      %v1742 = vadd.f32 %v1685, %v1734
      %v1743 = vadd.f32 %v1686, %v1735
      %v1744 = vadd.f32 %v1687, %v1736
      %v1745 = vadd.f32 %v1688, %v1737
      %v1746 = vadd.f32 %v1689, %v1738
      %v1748 = vlaneseq
      %v1749 = vshrl.u32 %v1748, 7
      %v1750 = vsub.s32 0, %v1749
      %v1751 = vrot.slane %v1668, %v1750
      %v1753 = vmul.f32 %v1751, 0.0
      %v1754 = vmul.f32 %v1627, %v1751
      %v1755 = vmul.f32 %v1628, %v1751
      %v1756 = vmul.f32 %v1629, %v1751
      %v1757 = vmul.f32 %v1630, %v1751
      %v1758 = vmul.f32 %v1631, %v1751
      %v1759 = vmul.f32 %v1632, %v1751
      %v1760 = vmul.f32 %v1633, %v1751
      %v1761 = vadd.f32 %v1739, %v1753
      %v1762 = vadd.f32 %v1740, %v1754
      %v1763 = vadd.f32 %v1741, %v1755
      %v1764 = vadd.f32 %v1742, %v1756
      %v1765 = vadd.f32 %v1743, %v1757
      %v1766 = vadd.f32 %v1744, %v1758
      %v1767 = vadd.f32 %v1745, %v1759
      %v1768 = vadd.f32 %v1746, %v1760
      %v1770 = vrot.slane %v1627, 1
      %v1771 = vrot.slane %v1628, 1
      %v1772 = vsel %vm959, %v1770, %v1771
      %v1773 = vrot.slane %v1629, 1
      %v1774 = vsel %vm959, %v1771, %v1773
      %v1775 = vrot.slane %v1630, 1
      %v1776 = vsel %vm959, %v1773, %v1775
      %v1777 = vrot.slane %v1631, 1
      %v1778 = vsel %vm959, %v1775, %v1777
      %v1779 = vrot.slane %v1632, 1
      %v1780 = vsel %vm959, %v1777, %v1779
      %v1781 = vrot.slane %v1633, 1
      %v1782 = vsel %vm959, %v1779, %v1781
      %v1783 = vrot.slane %v1634, 1
      %v1784 = vsel %vm959, %v1781, %v1783
      %v1793 = vsel %vm959, 0.0, %v1770
      %v1794 = vmul.f32 %v1793, %v987
      %v1795 = vmul.f32 %v1772, %v992
      %v1796 = vmul.f32 %v1774, %v997
      %v1797 = vmul.f32 %v1776, %v1002
      %v1798 = vmul.f32 %v1778, %v1007
      %v1799 = vmul.f32 %v1780, %v1012
      %v1800 = vmul.f32 %v1782, %v1017
      %v1801 = vmul.f32 %v1784, %v1022
      %v1803 = vlaneseq
      %v1804 = vshrl.u32 %v1803, 7
      %v1805 = vsub.s32 0, %v1804
      %v1806 = vrot.slane %v1669, %v1805
      %v1808 = vmul.f32 %v1794, %v1806
      %v1809 = vmul.f32 %v1795, %v1806
      %v1810 = vmul.f32 %v1796, %v1806
      %v1811 = vmul.f32 %v1797, %v1806
      %v1812 = vmul.f32 %v1798, %v1806
      %v1813 = vmul.f32 %v1799, %v1806
      %v1814 = vmul.f32 %v1800, %v1806
      %v1815 = vmul.f32 %v1801, %v1806
      %v1816 = vadd.f32 %v1761, %v1808
      %v1817 = vadd.f32 %v1762, %v1809
      %v1818 = vadd.f32 %v1763, %v1810
      %v1819 = vadd.f32 %v1764, %v1811
      %v1820 = vadd.f32 %v1765, %v1812
      %v1821 = vadd.f32 %v1766, %v1813
      %v1822 = vadd.f32 %v1767, %v1814
      %v1823 = vadd.f32 %v1768, %v1815
      %v1824 = vrot.slane %v1634, 7
      %v1825 = vsel %vm566, %v1708, %v1824
      %v1827 = vmul.f32 %v1717, %v591
      %v1828 = vmul.f32 %v1699, %v596
      %v1829 = vmul.f32 %v1701, %v601
      %v1830 = vmul.f32 %v1703, %v606
      %v1831 = vmul.f32 %v1705, %v611
      %v1832 = vmul.f32 %v1707, %v616
      %v1833 = vmul.f32 %v1709, %v621
      %v1834 = vmul.f32 %v1825, %v626
      %v1836 = vlaneseq
      %v1837 = vshrl.u32 %v1836, 7
      %v1838 = vsub.s32 0, %v1837
      %v1839 = vrot.slane %v1670, %v1838
      %v1841 = vmul.f32 %v1827, %v1839
      %v1842 = vmul.f32 %v1828, %v1839
      %v1843 = vmul.f32 %v1829, %v1839
      %v1844 = vmul.f32 %v1830, %v1839
      %v1845 = vmul.f32 %v1831, %v1839
      %v1846 = vmul.f32 %v1832, %v1839
      %v1847 = vmul.f32 %v1833, %v1839
      %v1848 = vmul.f32 %v1834, %v1839
      %v1849 = vadd.f32 %v1816, %v1841
      %v1850 = vadd.f32 %v1817, %v1842
      %v1851 = vadd.f32 %v1818, %v1843
      %v1852 = vadd.f32 %v1819, %v1844
      %v1853 = vadd.f32 %v1820, %v1845
      %v1854 = vadd.f32 %v1821, %v1846
      %v1855 = vadd.f32 %v1822, %v1847
      %v1856 = vadd.f32 %v1823, %v1848
      %v1858 = vsel %vm959, %v1783, 0.0
      %v1859 = vmul.f32 %v1772, %v987
      %v1860 = vmul.f32 %v1774, %v992
      %v1861 = vmul.f32 %v1776, %v997
      %v1862 = vmul.f32 %v1778, %v1002
      %v1863 = vmul.f32 %v1780, %v1007
      %v1864 = vmul.f32 %v1782, %v1012
      %v1865 = vmul.f32 %v1784, %v1017
      %v1866 = vmul.f32 %v1858, %v1022
      %v1868 = vlaneseq
      %v1869 = vshrl.u32 %v1868, 7
      %v1870 = vsub.s32 0, %v1869
      %v1871 = vrot.slane %v1672, %v1870
      %v1873 = vmul.f32 %v1859, %v1871
      %v1874 = vmul.f32 %v1860, %v1871
      %v1875 = vmul.f32 %v1861, %v1871
      %v1876 = vmul.f32 %v1862, %v1871
      %v1877 = vmul.f32 %v1863, %v1871
      %v1878 = vmul.f32 %v1864, %v1871
      %v1879 = vmul.f32 %v1865, %v1871
      %v1880 = vmul.f32 %v1866, %v1871
      %v1881 = vadd.f32 %v1849, %v1873
      %v1882 = vadd.f32 %v1850, %v1874
      %v1883 = vadd.f32 %v1851, %v1875
      %v1884 = vadd.f32 %v1852, %v1876
      %v1885 = vadd.f32 %v1853, %v1877
      %v1886 = vadd.f32 %v1854, %v1878
      %v1887 = vadd.f32 %v1855, %v1879
      %v1888 = vadd.f32 %v1856, %v1880
      %v1890 = vsel %vm566, %v1824, 0.0
      %v1891 = vmul.f32 %v1699, %v591
      %v1892 = vmul.f32 %v1701, %v596
      %v1893 = vmul.f32 %v1703, %v601
      %v1894 = vmul.f32 %v1705, %v606
      %v1895 = vmul.f32 %v1707, %v611
      %v1896 = vmul.f32 %v1709, %v616
      %v1897 = vmul.f32 %v1825, %v621
      %v1898 = vmul.f32 %v1890, %v626
      %v1900 = vlaneseq
      %v1901 = vshrl.u32 %v1900, 7
      %v1902 = vsub.s32 0, %v1901
      %v1903 = vrot.slane %v1673, %v1902
      %v1905 = vmul.f32 %v1891, %v1903
      %v1906 = vmul.f32 %v1892, %v1903
      %v1907 = vmul.f32 %v1893, %v1903
      %v1908 = vmul.f32 %v1894, %v1903
      %v1909 = vmul.f32 %v1895, %v1903
      %v1910 = vmul.f32 %v1896, %v1903
      %v1911 = vmul.f32 %v1897, %v1903
      %v1912 = vmul.f32 %v1898, %v1903
      %v1913 = vadd.f32 %v1881, %v1905
      %v1914 = vadd.f32 %v1882, %v1906
      %v1915 = vadd.f32 %v1883, %v1907
      %v1916 = vadd.f32 %v1884, %v1908
      %v1917 = vadd.f32 %v1885, %v1909
      %v1918 = vadd.f32 %v1886, %v1910
      %v1919 = vadd.f32 %v1887, %v1911
      %v1920 = vadd.f32 %v1888, %v1912
      %v1922 = vlaneseq
      %v1923 = vshrl.u32 %v1922, 7
      %v1924 = vsub.s32 0, %v1923
      %v1925 = vrot.slane %v1674, %v1924
      %v1927 = vmul.f32 %v1628, %v1925
      %v1928 = vmul.f32 %v1629, %v1925
      %v1929 = vmul.f32 %v1630, %v1925
      %v1930 = vmul.f32 %v1631, %v1925
      %v1931 = vmul.f32 %v1632, %v1925
      %v1932 = vmul.f32 %v1633, %v1925
      %v1933 = vmul.f32 %v1634, %v1925
      %v1934 = vmul.f32 %v1925, 0.0
      %v1935 = vadd.f32 %v1913, %v1927
      %v1936 = vadd.f32 %v1914, %v1928
      %v1937 = vadd.f32 %v1915, %v1929
      %v1938 = vadd.f32 %v1916, %v1930
      %v1939 = vadd.f32 %v1917, %v1931
      %v1940 = vadd.f32 %v1918, %v1932
      %v1941 = vadd.f32 %v1919, %v1933
      %v1942 = vadd.f32 %v1920, %v1934
      %v1943 = vmul.f32 %v1774, %v987
      %v1944 = vmul.f32 %v1776, %v992
      %v1945 = vmul.f32 %v1778, %v997
      %v1946 = vmul.f32 %v1780, %v1002
      %v1947 = vmul.f32 %v1782, %v1007
      %v1948 = vmul.f32 %v1784, %v1012
      %v1949 = vmul.f32 %v1858, %v1017
      %v1951 = vlaneseq
      %v1952 = vshrl.u32 %v1951, 7
      %v1953 = vsub.s32 0, %v1952
      %v1954 = vrot.slane %v1675, %v1953
      %v1956 = vmul.f32 %v1943, %v1954
      %v1957 = vmul.f32 %v1944, %v1954
      %v1958 = vmul.f32 %v1945, %v1954
      %v1959 = vmul.f32 %v1946, %v1954
      %v1960 = vmul.f32 %v1947, %v1954
      %v1961 = vmul.f32 %v1948, %v1954
      %v1962 = vmul.f32 %v1949, %v1954
      %v1963 = vmul.f32 %v1530, %v1954
      %v1964 = vadd.f32 %v1935, %v1956
      %v1965 = vadd.f32 %v1936, %v1957
      %v1966 = vadd.f32 %v1937, %v1958
      %v1967 = vadd.f32 %v1938, %v1959
      %v1968 = vadd.f32 %v1939, %v1960
      %v1969 = vadd.f32 %v1940, %v1961
      %v1970 = vadd.f32 %v1941, %v1962
      %v1971 = vadd.f32 %v1942, %v1963
      %v1972 = vpack.c.bf16 %v1965, %v1964
      %v1973 = vpack.c.bf16 %v1967, %v1966
      %v1974 = vpack.c.bf16 %v1969, %v1968
      %v1975 = vpack.c.bf16 %v1971, %v1970
      %v1976 = vld [vmem:[%s8] sm:$0xf]
      %v1977 = vld [vmem:[%s9] sm:$0x1]
      %v1979 = vlaneseq
      %v1980 = vshrl.u32 %v1979, 7
      %v1981 = vsub.s32 0, %v1980
      %v1982 = vrot.slane %v1977, %v1981
      %vm1984 = vcmask 64512
      %v1986 = vsel %vm1984, %v1972, 0
      %v1989 = vsel %vm1984, %v1973, 0
      %v1992 = vsel %vm1984, %v1974, 0
      %v1995 = vsel %vm1984, %v1975, 0
      %vm1997 = vcmask 1043456
      %v1999 = vsel %vm1997, %v1976, 0
      %2001 = vmatprep.subr.bf16.mxu0 0
      %2002 = vmatpush1.bf16.msra.mxu0 0
      %2003 = vmatprep.subr.bf16.mxu0 0
      %2004 = vmatpush1.bf16.msra.mxu0 0
      %2005 = vmatprep.subr.bf16.mxu0 0
      %2006 = vmatpush1.bf16.msra.mxu0 0
      %2007 = vmatprep.subr.bf16.mxu0 0
      %2008 = vmatpush1.bf16.msra.mxu0 0
      %2009 = vmatprep.subr.bf16.mxu0 0
      %2010 = vmatpush1.bf16.msra.mxu0 0
      %2011 = vmatprep.subr.bf16.mxu0 0
      %2012 = vmatpush1.bf16.msra.mxu0 0
      %2013 = vmatprep.subr.bf16.mxu0 0
      %2014 = vmatpush1.bf16.msra.mxu0 0
      %2015 = vmatprep.subr.bf16.mxu0 0
      %2016 = vmatpush1.bf16.msra.mxu0 %v1999
      %2017 = vmatprep.subr.bf16.mxu0 0
      %2018 = vmatpush2.bf16.msra.mxu0 0
      %2019 = vmatprep.subr.bf16.mxu0 0
      %2020 = vmatpush2.bf16.msra.mxu0 0
      %2021 = vmatprep.subr.bf16.mxu0 0
      %2022 = vmatpush2.bf16.msra.mxu0 0
      %2023 = vmatprep.subr.bf16.mxu0 0
      %2024 = vmatpush2.bf16.msra.mxu0 0
      %2025 = vmatprep.subr.bf16.mxu0 0
      %2026 = vmatpush2.bf16.msra.mxu0 0
      %2027 = vmatprep.subr.bf16.mxu0 0
      %2028 = vmatpush2.bf16.msra.mxu0 0
      %2029 = vmatprep.subr.bf16.mxu0 0
      %2030 = vmatpush2.bf16.msra.mxu0 0
      %2031 = vmatprep.subr.bf16.mxu0 0
      %2032 = vmatpush2.bf16.msra.mxu0 0
      %2033 = vmatprep.mubr.bf16.mxu0 0
      %2034 = vmatmul.mubr.bf16.gmra.mxu0 %v1986
      %v2035 = vpop.f32.mrf.mxu0
      %v2036 = vadd.f32 %v1982, %v2035
      %v2037 = vpop.f32.mrf.mxu0
      %v2038 = vpop.f32.mrf.mxu0
      %v2039 = vadd.f32 %v1982, %v2038
      %v2040 = vpop.f32.mrf.mxu0
      %2041 = vmatprep.mubr.bf16.mxu0 0
      %2042 = vmatmul.mubr.bf16.gmra.mxu0 %v1989
      %v2043 = vpop.f32.mrf.mxu0
      %v2044 = vadd.f32 %v1982, %v2043
      %v2045 = vpop.f32.mrf.mxu0
      %v2046 = vpop.f32.mrf.mxu0
      %v2047 = vadd.f32 %v1982, %v2046
      %v2048 = vpop.f32.mrf.mxu0
      %2049 = vmatprep.mubr.bf16.mxu0 0
      %2050 = vmatmul.mubr.bf16.gmra.mxu0 %v1992
      %v2051 = vpop.f32.mrf.mxu0
      %v2052 = vadd.f32 %v1982, %v2051
      %v2053 = vpop.f32.mrf.mxu0
      %v2054 = vpop.f32.mrf.mxu0
      %v2055 = vadd.f32 %v1982, %v2054
      %v2056 = vpop.f32.mrf.mxu0
      %2057 = vmatprep.mubr.bf16.mxu0 0
      %2058 = vmatmul.mubr.bf16.gmra.mxu0 %v1995
      %v2059 = vpop.f32.mrf.mxu0
      %v2060 = vadd.f32 %v1982, %v2059
      %v2061 = vpop.f32.mrf.mxu0
      %v2062 = vpop.f32.mrf.mxu0
      %v2063 = vadd.f32 %v1982, %v2062
      %v2064 = vpop.f32.mrf.mxu0
      %2065 = vdwg.mxu0
      %v2066 = vld [vmem:[%s10] sm:$0x1]
      %v2067 = vld [vmem:[%s10 + $0x1] sm:$0x1]
      %v2068 = vld [vmem:[%s10 + $0x2] sm:$0x1]
      %v2069 = vld [vmem:[%s10 + $0x3] sm:$0x1]
      %v2070 = vld [vmem:[%s10 + $0x4] sm:$0x1]
      %v2071 = vld [vmem:[%s10 + $0x5] sm:$0x1]
      %v2072 = vld [vmem:[%s10 + $0x6] sm:$0x1]
      %v2073 = vld [vmem:[%s10 + $0x7] sm:$0x1]
      %v2074 = vld [vmem:[%s10 + $0x8] sm:$0x1]
      %v2076 = vlaneseq
      %v2077 = vshrl.u32 %v2076, 7
      %v2078 = vsub.s32 0, %v2077
      %v2079 = vrot.slane %v2070, %v2078
      %v2081 = vmul.f32 %v1659, %v2079
      %v2082 = vmul.f32 %v1660, %v2079
      %v2083 = vmul.f32 %v1661, %v2079
      %v2084 = vmul.f32 %v1662, %v2079
      %v2085 = vmul.f32 %v1663, %v2079
      %v2086 = vmul.f32 %v1664, %v2079
      %v2087 = vmul.f32 %v1665, %v2079
      %v2088 = vmul.f32 %v1666, %v2079
      %v2096 = vrot.slane %v1659, 7
      %v2097 = vrot.slane %v1660, 7
      %v2098 = vsel %vm566, %v2096, %v2097
      %v2099 = vrot.slane %v1661, 7
      %v2100 = vsel %vm566, %v2097, %v2099
      %v2101 = vrot.slane %v1662, 7
      %v2102 = vsel %vm566, %v2099, %v2101
      %v2103 = vrot.slane %v1663, 7
      %v2104 = vsel %vm566, %v2101, %v2103
      %v2105 = vrot.slane %v1664, 7
      %v2106 = vsel %vm566, %v2103, %v2105
      %v2107 = vrot.slane %v1665, 7
      %v2108 = vsel %vm566, %v2105, %v2107
      %v2116 = vsel %vm566, 0.0, %v2096
      %v2117 = vmul.f32 %v2116, %v596
      %v2118 = vmul.f32 %v2098, %v601
      %v2119 = vmul.f32 %v2100, %v606
      %v2120 = vmul.f32 %v2102, %v611
      %v2121 = vmul.f32 %v2104, %v616
      %v2122 = vmul.f32 %v2106, %v621
      %v2123 = vmul.f32 %v2108, %v626
      %v2125 = vlaneseq
      %v2126 = vshrl.u32 %v2125, 7
      %v2127 = vsub.s32 0, %v2126
      %v2128 = vrot.slane %v2066, %v2127
      %v2130 = vmul.f32 %v628, %v2128
      %v2131 = vmul.f32 %v2117, %v2128
      %v2132 = vmul.f32 %v2118, %v2128
      %v2133 = vmul.f32 %v2119, %v2128
      %v2134 = vmul.f32 %v2120, %v2128
      %v2135 = vmul.f32 %v2121, %v2128
      %v2136 = vmul.f32 %v2122, %v2128
      %v2137 = vmul.f32 %v2123, %v2128
      %v2138 = vadd.f32 %v2081, %v2130
      %v2139 = vadd.f32 %v2082, %v2131
      %v2140 = vadd.f32 %v2083, %v2132
      %v2141 = vadd.f32 %v2084, %v2133
      %v2142 = vadd.f32 %v2085, %v2134
      %v2143 = vadd.f32 %v2086, %v2135
      %v2144 = vadd.f32 %v2087, %v2136
      %v2145 = vadd.f32 %v2088, %v2137
      %v2147 = vlaneseq
      %v2148 = vshrl.u32 %v2147, 7
      %v2149 = vsub.s32 0, %v2148
      %v2150 = vrot.slane %v2067, %v2149
      %v2152 = vmul.f32 %v2150, 0.0
      %v2153 = vmul.f32 %v1659, %v2150
      %v2154 = vmul.f32 %v1660, %v2150
      %v2155 = vmul.f32 %v1661, %v2150
      %v2156 = vmul.f32 %v1662, %v2150
      %v2157 = vmul.f32 %v1663, %v2150
      %v2158 = vmul.f32 %v1664, %v2150
      %v2159 = vmul.f32 %v1665, %v2150
      %v2160 = vadd.f32 %v2138, %v2152
      %v2161 = vadd.f32 %v2139, %v2153
      %v2162 = vadd.f32 %v2140, %v2154
      %v2163 = vadd.f32 %v2141, %v2155
      %v2164 = vadd.f32 %v2142, %v2156
      %v2165 = vadd.f32 %v2143, %v2157
      %v2166 = vadd.f32 %v2144, %v2158
      %v2167 = vadd.f32 %v2145, %v2159
      %v2169 = vrot.slane %v1659, 1
      %v2170 = vrot.slane %v1660, 1
      %v2171 = vsel %vm959, %v2169, %v2170
      %v2172 = vrot.slane %v1661, 1
      %v2173 = vsel %vm959, %v2170, %v2172
      %v2174 = vrot.slane %v1662, 1
      %v2175 = vsel %vm959, %v2172, %v2174
      %v2176 = vrot.slane %v1663, 1
      %v2177 = vsel %vm959, %v2174, %v2176
      %v2178 = vrot.slane %v1664, 1
      %v2179 = vsel %vm959, %v2176, %v2178
      %v2180 = vrot.slane %v1665, 1
      %v2181 = vsel %vm959, %v2178, %v2180
      %v2182 = vrot.slane %v1666, 1
      %v2183 = vsel %vm959, %v2180, %v2182
      %v2192 = vsel %vm959, 0.0, %v2169
      %v2193 = vmul.f32 %v2192, %v987
      %v2194 = vmul.f32 %v2171, %v992
      %v2195 = vmul.f32 %v2173, %v997
      %v2196 = vmul.f32 %v2175, %v1002
      %v2197 = vmul.f32 %v2177, %v1007
      %v2198 = vmul.f32 %v2179, %v1012
      %v2199 = vmul.f32 %v2181, %v1017
      %v2200 = vmul.f32 %v2183, %v1022
      %v2202 = vlaneseq
      %v2203 = vshrl.u32 %v2202, 7
      %v2204 = vsub.s32 0, %v2203
      %v2205 = vrot.slane %v2068, %v2204
      %v2207 = vmul.f32 %v2193, %v2205
      %v2208 = vmul.f32 %v2194, %v2205
      %v2209 = vmul.f32 %v2195, %v2205
      %v2210 = vmul.f32 %v2196, %v2205
      %v2211 = vmul.f32 %v2197, %v2205
      %v2212 = vmul.f32 %v2198, %v2205
      %v2213 = vmul.f32 %v2199, %v2205
      %v2214 = vmul.f32 %v2200, %v2205
      %v2215 = vadd.f32 %v2160, %v2207
      %v2216 = vadd.f32 %v2161, %v2208
      %v2217 = vadd.f32 %v2162, %v2209
      %v2218 = vadd.f32 %v2163, %v2210
      %v2219 = vadd.f32 %v2164, %v2211
      %v2220 = vadd.f32 %v2165, %v2212
      %v2221 = vadd.f32 %v2166, %v2213
      %v2222 = vadd.f32 %v2167, %v2214
      %v2223 = vrot.slane %v1666, 7
      %v2224 = vsel %vm566, %v2107, %v2223
      %v2226 = vmul.f32 %v2116, %v591
      %v2227 = vmul.f32 %v2098, %v596
      %v2228 = vmul.f32 %v2100, %v601
      %v2229 = vmul.f32 %v2102, %v606
      %v2230 = vmul.f32 %v2104, %v611
      %v2231 = vmul.f32 %v2106, %v616
      %v2232 = vmul.f32 %v2108, %v621
      %v2233 = vmul.f32 %v2224, %v626
      %v2235 = vlaneseq
      %v2236 = vshrl.u32 %v2235, 7
      %v2237 = vsub.s32 0, %v2236
      %v2238 = vrot.slane %v2069, %v2237
      %v2240 = vmul.f32 %v2226, %v2238
      %v2241 = vmul.f32 %v2227, %v2238
      %v2242 = vmul.f32 %v2228, %v2238
      %v2243 = vmul.f32 %v2229, %v2238
      %v2244 = vmul.f32 %v2230, %v2238
      %v2245 = vmul.f32 %v2231, %v2238
      %v2246 = vmul.f32 %v2232, %v2238
      %v2247 = vmul.f32 %v2233, %v2238
      %v2248 = vadd.f32 %v2215, %v2240
      %v2249 = vadd.f32 %v2216, %v2241
      %v2250 = vadd.f32 %v2217, %v2242
      %v2251 = vadd.f32 %v2218, %v2243
      %v2252 = vadd.f32 %v2219, %v2244
      %v2253 = vadd.f32 %v2220, %v2245
      %v2254 = vadd.f32 %v2221, %v2246
      %v2255 = vadd.f32 %v2222, %v2247
      %v2257 = vsel %vm959, %v2182, 0.0
      %v2258 = vmul.f32 %v2171, %v987
      %v2259 = vmul.f32 %v2173, %v992
      %v2260 = vmul.f32 %v2175, %v997
      %v2261 = vmul.f32 %v2177, %v1002
      %v2262 = vmul.f32 %v2179, %v1007
      %v2263 = vmul.f32 %v2181, %v1012
      %v2264 = vmul.f32 %v2183, %v1017
      %v2265 = vmul.f32 %v2257, %v1022
      %v2267 = vlaneseq
      %v2268 = vshrl.u32 %v2267, 7
      %v2269 = vsub.s32 0, %v2268
      %v2270 = vrot.slane %v2071, %v2269
      %v2272 = vmul.f32 %v2258, %v2270
      %v2273 = vmul.f32 %v2259, %v2270
      %v2274 = vmul.f32 %v2260, %v2270
      %v2275 = vmul.f32 %v2261, %v2270
      %v2276 = vmul.f32 %v2262, %v2270
      %v2277 = vmul.f32 %v2263, %v2270
      %v2278 = vmul.f32 %v2264, %v2270
      %v2279 = vmul.f32 %v2265, %v2270
      %v2280 = vadd.f32 %v2248, %v2272
      %v2281 = vadd.f32 %v2249, %v2273
      %v2282 = vadd.f32 %v2250, %v2274
      %v2283 = vadd.f32 %v2251, %v2275
      %v2284 = vadd.f32 %v2252, %v2276
      %v2285 = vadd.f32 %v2253, %v2277
      %v2286 = vadd.f32 %v2254, %v2278
      %v2287 = vadd.f32 %v2255, %v2279
      %v2289 = vsel %vm566, %v2223, 0.0
      %v2290 = vmul.f32 %v2098, %v591
      %v2291 = vmul.f32 %v2100, %v596
      %v2292 = vmul.f32 %v2102, %v601
      %v2293 = vmul.f32 %v2104, %v606
      %v2294 = vmul.f32 %v2106, %v611
      %v2295 = vmul.f32 %v2108, %v616
      %v2296 = vmul.f32 %v2224, %v621
      %v2297 = vmul.f32 %v2289, %v626
      %v2299 = vlaneseq
      %v2300 = vshrl.u32 %v2299, 7
      %v2301 = vsub.s32 0, %v2300
      %v2302 = vrot.slane %v2072, %v2301
      %v2304 = vmul.f32 %v2290, %v2302
      %v2305 = vmul.f32 %v2291, %v2302
      %v2306 = vmul.f32 %v2292, %v2302
      %v2307 = vmul.f32 %v2293, %v2302
      %v2308 = vmul.f32 %v2294, %v2302
      %v2309 = vmul.f32 %v2295, %v2302
      %v2310 = vmul.f32 %v2296, %v2302
      %v2311 = vmul.f32 %v2297, %v2302
      %v2312 = vadd.f32 %v2280, %v2304
      %v2313 = vadd.f32 %v2281, %v2305
      %v2314 = vadd.f32 %v2282, %v2306
      %v2315 = vadd.f32 %v2283, %v2307
      %v2316 = vadd.f32 %v2284, %v2308
      %v2317 = vadd.f32 %v2285, %v2309
      %v2318 = vadd.f32 %v2286, %v2310
      %v2319 = vadd.f32 %v2287, %v2311
      %v2321 = vlaneseq
      %v2322 = vshrl.u32 %v2321, 7
      %v2323 = vsub.s32 0, %v2322
      %v2324 = vrot.slane %v2073, %v2323
      %v2326 = vmul.f32 %v1660, %v2324
      %v2327 = vmul.f32 %v1661, %v2324
      %v2328 = vmul.f32 %v1662, %v2324
      %v2329 = vmul.f32 %v1663, %v2324
      %v2330 = vmul.f32 %v1664, %v2324
      %v2331 = vmul.f32 %v1665, %v2324
      %v2332 = vmul.f32 %v1666, %v2324
      %v2333 = vmul.f32 %v2324, 0.0
      %v2334 = vadd.f32 %v2312, %v2326
      %v2335 = vadd.f32 %v2313, %v2327
      %v2336 = vadd.f32 %v2314, %v2328
      %v2337 = vadd.f32 %v2315, %v2329
      %v2338 = vadd.f32 %v2316, %v2330
      %v2339 = vadd.f32 %v2317, %v2331
      %v2340 = vadd.f32 %v2318, %v2332
      %v2341 = vadd.f32 %v2319, %v2333
      %v2342 = vmul.f32 %v2173, %v987
      %v2343 = vmul.f32 %v2175, %v992
      %v2344 = vmul.f32 %v2177, %v997
      %v2345 = vmul.f32 %v2179, %v1002
      %v2346 = vmul.f32 %v2181, %v1007
      %v2347 = vmul.f32 %v2183, %v1012
      %v2348 = vmul.f32 %v2257, %v1017
      %v2350 = vlaneseq
      %v2351 = vshrl.u32 %v2350, 7
      %v2352 = vsub.s32 0, %v2351
      %v2353 = vrot.slane %v2074, %v2352
      %v2355 = vmul.f32 %v2342, %v2353
      %v2356 = vmul.f32 %v2343, %v2353
      %v2357 = vmul.f32 %v2344, %v2353
      %v2358 = vmul.f32 %v2345, %v2353
      %v2359 = vmul.f32 %v2346, %v2353
      %v2360 = vmul.f32 %v2347, %v2353
      %v2361 = vmul.f32 %v2348, %v2353
      %v2362 = vmul.f32 %v1530, %v2353
      %v2363 = vadd.f32 %v2334, %v2355
      %v2364 = vadd.f32 %v2335, %v2356
      %v2365 = vadd.f32 %v2336, %v2357
      %v2366 = vadd.f32 %v2337, %v2358
      %v2367 = vadd.f32 %v2338, %v2359
      %v2368 = vadd.f32 %v2339, %v2360
      %v2369 = vadd.f32 %v2340, %v2361
      %v2370 = vadd.f32 %v2341, %v2362
      %v2378 = vrot.slane %v2363, 7
      %v2379 = vrot.slane %v2364, 7
      %v2380 = vsel %vm566, %v2378, %v2379
      %v2381 = vrot.slane %v2365, 7
      %v2382 = vsel %vm566, %v2379, %v2381
      %v2383 = vrot.slane %v2366, 7
      %v2384 = vsel %vm566, %v2381, %v2383
      %v2385 = vrot.slane %v2367, 7
      %v2386 = vsel %vm566, %v2383, %v2385
      %v2387 = vrot.slane %v2368, 7
      %v2388 = vsel %vm566, %v2385, %v2387
      %v2389 = vrot.slane %v2369, 7
      %v2390 = vsel %vm566, %v2387, %v2389
      %v2398 = vsel %vm566, 0.0, %v2378
      %v2399 = vmul.f32 %v2398, %v596
      %v2400 = vmul.f32 %v2380, %v601
      %v2401 = vmul.f32 %v2382, %v606
      %v2402 = vmul.f32 %v2384, %v611
      %v2403 = vmul.f32 %v2386, %v616
      %v2404 = vmul.f32 %v2388, %v621
      %v2405 = vmul.f32 %v2390, %v626
      %v2407 = vrot.slane %v2363, 1
      %v2408 = vrot.slane %v2364, 1
      %v2409 = vsel %vm959, %v2407, %v2408
      %v2410 = vrot.slane %v2365, 1
      %v2411 = vsel %vm959, %v2408, %v2410
      %v2412 = vrot.slane %v2366, 1
      %v2413 = vsel %vm959, %v2410, %v2412
      %v2414 = vrot.slane %v2367, 1
      %v2415 = vsel %vm959, %v2412, %v2414
      %v2416 = vrot.slane %v2368, 1
      %v2417 = vsel %vm959, %v2414, %v2416
      %v2418 = vrot.slane %v2369, 1
      %v2419 = vsel %vm959, %v2416, %v2418
      %v2420 = vrot.slane %v2370, 1
      %v2421 = vsel %vm959, %v2418, %v2420
      %v2430 = vsel %vm959, 0.0, %v2407
      %v2431 = vmul.f32 %v2430, %v987
      %v2432 = vmul.f32 %v2409, %v992
      %v2433 = vmul.f32 %v2411, %v997
      %v2434 = vmul.f32 %v2413, %v1002
      %v2435 = vmul.f32 %v2415, %v1007
      %v2436 = vmul.f32 %v2417, %v1012
      %v2437 = vmul.f32 %v2419, %v1017
      %v2438 = vmul.f32 %v2421, %v1022
      %v2439 = vrot.slane %v2370, 7
      %v2440 = vsel %vm566, %v2389, %v2439
      %v2442 = vmul.f32 %v2398, %v591
      %v2443 = vmul.f32 %v2380, %v596
      %v2444 = vmul.f32 %v2382, %v601
      %v2445 = vmul.f32 %v2384, %v606
      %v2446 = vmul.f32 %v2386, %v611
      %v2447 = vmul.f32 %v2388, %v616
      %v2448 = vmul.f32 %v2390, %v621
      %v2449 = vmul.f32 %v2440, %v626
      %v2451 = vsel %vm959, %v2420, 0.0
      %v2452 = vmul.f32 %v2409, %v987
      %v2453 = vmul.f32 %v2411, %v992
      %v2454 = vmul.f32 %v2413, %v997
      %v2455 = vmul.f32 %v2415, %v1002
      %v2456 = vmul.f32 %v2417, %v1007
      %v2457 = vmul.f32 %v2419, %v1012
      %v2458 = vmul.f32 %v2421, %v1017
      %v2459 = vmul.f32 %v2451, %v1022
      %v2461 = vsel %vm566, %v2439, 0.0
      %v2462 = vmul.f32 %v2380, %v591
      %v2463 = vmul.f32 %v2382, %v596
      %v2464 = vmul.f32 %v2384, %v601
      %v2465 = vmul.f32 %v2386, %v606
      %v2466 = vmul.f32 %v2388, %v611
      %v2467 = vmul.f32 %v2390, %v616
      %v2468 = vmul.f32 %v2440, %v621
      %v2469 = vmul.f32 %v2461, %v626
      %v2470 = vmul.f32 %v2411, %v987
      %v2471 = vmul.f32 %v2413, %v992
      %v2472 = vmul.f32 %v2415, %v997
      %v2473 = vmul.f32 %v2417, %v1002
      %v2474 = vmul.f32 %v2419, %v1007
      %v2475 = vmul.f32 %v2421, %v1012
      %v2476 = vmul.f32 %v2451, %v1017
      %2478 = vrot.lane.b32.xlu0 0.0, 8
      %v2479 = vpop.permute.xlu0 %2478
      %2480 = vrot.lane.b32.xlu0 %v2363, 8
      %v2481 = vpop.permute.xlu0 %2480
      %2482 = vrot.lane.b32.xlu0 %v2364, 8
      %v2483 = vpop.permute.xlu0 %2482
      %2484 = vrot.lane.b32.xlu0 %v2365, 8
      %v2485 = vpop.permute.xlu0 %2484
      %2486 = vrot.lane.b32.xlu0 %v2366, 8
      %v2487 = vpop.permute.xlu0 %2486
      %2488 = vrot.lane.b32.xlu0 %v2367, 8
      %v2489 = vpop.permute.xlu0 %2488
      %2490 = vrot.lane.b32.xlu0 %v2368, 8
      %v2491 = vpop.permute.xlu0 %2490
      %2492 = vrot.lane.b32.xlu0 %v2369, 8
      %v2493 = vpop.permute.xlu0 %2492
      %2510 = vrot.lane.b32.xlu0 %v2431, 16
      %v2511 = vpop.permute.xlu0 %2510
      %2512 = vrot.lane.b32.xlu0 %v2432, 16
      %v2513 = vpop.permute.xlu0 %2512
      %2514 = vrot.lane.b32.xlu0 %v2433, 16
      %v2515 = vpop.permute.xlu0 %2514
      %2516 = vrot.lane.b32.xlu0 %v2434, 16
      %v2517 = vpop.permute.xlu0 %2516
      %2518 = vrot.lane.b32.xlu0 %v2435, 16
      %v2519 = vpop.permute.xlu0 %2518
      %2520 = vrot.lane.b32.xlu0 %v2436, 16
      %v2521 = vpop.permute.xlu0 %2520
      %2522 = vrot.lane.b32.xlu0 %v2437, 16
      %v2523 = vpop.permute.xlu0 %2522
      %2524 = vrot.lane.b32.xlu0 %v2438, 16
      %v2525 = vpop.permute.xlu0 %2524
      %2542 = vrot.lane.b32.xlu0 %v2442, 24
      %v2543 = vpop.permute.xlu0 %2542
      %2544 = vrot.lane.b32.xlu0 %v2443, 24
      %v2545 = vpop.permute.xlu0 %2544
      %2546 = vrot.lane.b32.xlu0 %v2444, 24
      %v2547 = vpop.permute.xlu0 %2546
      %2548 = vrot.lane.b32.xlu0 %v2445, 24
      %v2549 = vpop.permute.xlu0 %2548
      %2550 = vrot.lane.b32.xlu0 %v2446, 24
      %v2551 = vpop.permute.xlu0 %2550
      %2552 = vrot.lane.b32.xlu0 %v2447, 24
      %v2553 = vpop.permute.xlu0 %2552
      %2554 = vrot.lane.b32.xlu0 %v2448, 24
      %v2555 = vpop.permute.xlu0 %2554
      %2556 = vrot.lane.b32.xlu0 %v2449, 24
      %v2557 = vpop.permute.xlu0 %2556
      %2566 = vrot.lane.b32.xlu0 %v2363, 32
      %v2567 = vpop.permute.xlu0 %2566
      %2568 = vrot.lane.b32.xlu0 %v2364, 32
      %v2569 = vpop.permute.xlu0 %2568
      %2570 = vrot.lane.b32.xlu0 %v2365, 32
      %v2571 = vpop.permute.xlu0 %2570
      %2572 = vrot.lane.b32.xlu0 %v2366, 32
      %v2573 = vpop.permute.xlu0 %2572
      %2574 = vrot.lane.b32.xlu0 %v2367, 32
      %v2575 = vpop.permute.xlu0 %2574
      %2576 = vrot.lane.b32.xlu0 %v2368, 32
      %v2577 = vpop.permute.xlu0 %2576
      %2578 = vrot.lane.b32.xlu0 %v2369, 32
      %v2579 = vpop.permute.xlu0 %2578
      %2580 = vrot.lane.b32.xlu0 %v2370, 32
      %v2581 = vpop.permute.xlu0 %2580
      %2598 = vrot.lane.b32.xlu0 %v2452, 40
      %v2599 = vpop.permute.xlu0 %2598
      %2600 = vrot.lane.b32.xlu0 %v2453, 40
      %v2601 = vpop.permute.xlu0 %2600
      %2602 = vrot.lane.b32.xlu0 %v2454, 40
      %v2603 = vpop.permute.xlu0 %2602
      %2604 = vrot.lane.b32.xlu0 %v2455, 40
      %v2605 = vpop.permute.xlu0 %2604
      %2606 = vrot.lane.b32.xlu0 %v2456, 40
      %v2607 = vpop.permute.xlu0 %2606
      %2608 = vrot.lane.b32.xlu0 %v2457, 40
      %v2609 = vpop.permute.xlu0 %2608
      %2610 = vrot.lane.b32.xlu0 %v2458, 40
      %v2611 = vpop.permute.xlu0 %2610
      %2612 = vrot.lane.b32.xlu0 %v2459, 40
      %v2613 = vpop.permute.xlu0 %2612
      %2630 = vrot.lane.b32.xlu0 %v2462, 48
      %v2631 = vpop.permute.xlu0 %2630
      %2632 = vrot.lane.b32.xlu0 %v2463, 48
      %v2633 = vpop.permute.xlu0 %2632
      %2634 = vrot.lane.b32.xlu0 %v2464, 48
      %v2635 = vpop.permute.xlu0 %2634
      %2636 = vrot.lane.b32.xlu0 %v2465, 48
      %v2637 = vpop.permute.xlu0 %2636
      %2638 = vrot.lane.b32.xlu0 %v2466, 48
      %v2639 = vpop.permute.xlu0 %2638
      %2640 = vrot.lane.b32.xlu0 %v2467, 48
      %v2641 = vpop.permute.xlu0 %2640
      %2642 = vrot.lane.b32.xlu0 %v2468, 48
      %v2643 = vpop.permute.xlu0 %2642
      %2644 = vrot.lane.b32.xlu0 %v2469, 48
      %v2645 = vpop.permute.xlu0 %2644
      %2654 = vrot.lane.b32.xlu0 %v2364, 56
      %v2655 = vpop.permute.xlu0 %2654
      %2656 = vrot.lane.b32.xlu0 %v2365, 56
      %v2657 = vpop.permute.xlu0 %2656
      %2658 = vrot.lane.b32.xlu0 %v2366, 56
      %v2659 = vpop.permute.xlu0 %2658
      %2660 = vrot.lane.b32.xlu0 %v2367, 56
      %v2661 = vpop.permute.xlu0 %2660
      %2662 = vrot.lane.b32.xlu0 %v2368, 56
      %v2663 = vpop.permute.xlu0 %2662
      %2664 = vrot.lane.b32.xlu0 %v2369, 56
      %v2665 = vpop.permute.xlu0 %2664
      %2666 = vrot.lane.b32.xlu0 %v2370, 56
      %v2667 = vpop.permute.xlu0 %2666
      %2668 = vrot.lane.b32.xlu0 0.0, 56
      %v2669 = vpop.permute.xlu0 %2668
      %2686 = vrot.lane.b32.xlu0 %v2470, 64
      %v2687 = vpop.permute.xlu0 %2686
      %2688 = vrot.lane.b32.xlu0 %v2471, 64
      %v2689 = vpop.permute.xlu0 %2688
      %2690 = vrot.lane.b32.xlu0 %v2472, 64
      %v2691 = vpop.permute.xlu0 %2690
      %2692 = vrot.lane.b32.xlu0 %v2473, 64
      %v2693 = vpop.permute.xlu0 %2692
      %2694 = vrot.lane.b32.xlu0 %v2474, 64
      %v2695 = vpop.permute.xlu0 %2694
      %2696 = vrot.lane.b32.xlu0 %v2475, 64
      %v2697 = vpop.permute.xlu0 %2696
      %2698 = vrot.lane.b32.xlu0 %v2476, 64
      %v2699 = vpop.permute.xlu0 %2698
      %2700 = vrot.lane.b32.xlu0 %v1530, 64
      %v2701 = vpop.permute.xlu0 %2700
      %v2710 = vsel %vm1984, %v628, %v2479
      %v2711 = vsel %vm1984, %v2399, %v2481
      %v2712 = vsel %vm1984, %v2400, %v2483
      %v2713 = vsel %vm1984, %v2401, %v2485
      %v2714 = vsel %vm1984, %v2402, %v2487
      %v2715 = vsel %vm1984, %v2403, %v2489
      %v2716 = vsel %vm1984, %v2404, %v2491
      %v2717 = vsel %vm1984, %v2405, %v2493
      %vm2718 = vcmask 130048
      %v2719 = vsel %vm2718, %v2710, %v2511
      %v2720 = vsel %vm2718, %v2711, %v2513
      %v2721 = vsel %vm2718, %v2712, %v2515
      %v2722 = vsel %vm2718, %v2713, %v2517
      %v2723 = vsel %vm2718, %v2714, %v2519
      %v2724 = vsel %vm2718, %v2715, %v2521
      %v2725 = vsel %vm2718, %v2716, %v2523
      %v2726 = vsel %vm2718, %v2717, %v2525
      %vm2727 = vcmask 195584
      %v2728 = vsel %vm2727, %v2719, %v2543
      %v2729 = vsel %vm2727, %v2720, %v2545
      %v2730 = vsel %vm2727, %v2721, %v2547
      %v2731 = vsel %vm2727, %v2722, %v2549
      %v2732 = vsel %vm2727, %v2723, %v2551
      %v2733 = vsel %vm2727, %v2724, %v2553
      %v2734 = vsel %vm2727, %v2725, %v2555
      %v2735 = vsel %vm2727, %v2726, %v2557
      %vm2736 = vcmask 261120
      %v2737 = vsel %vm2736, %v2728, %v2567
      %v2738 = vsel %vm2736, %v2729, %v2569
      %v2739 = vsel %vm2736, %v2730, %v2571
      %v2740 = vsel %vm2736, %v2731, %v2573
      %v2741 = vsel %vm2736, %v2732, %v2575
      %v2742 = vsel %vm2736, %v2733, %v2577
      %v2743 = vsel %vm2736, %v2734, %v2579
      %v2744 = vsel %vm2736, %v2735, %v2581
      %vm2745 = vcmask 326656
      %v2746 = vsel %vm2745, %v2737, %v2599
      %v2747 = vsel %vm2745, %v2738, %v2601
      %v2748 = vsel %vm2745, %v2739, %v2603
      %v2749 = vsel %vm2745, %v2740, %v2605
      %v2750 = vsel %vm2745, %v2741, %v2607
      %v2751 = vsel %vm2745, %v2742, %v2609
      %v2752 = vsel %vm2745, %v2743, %v2611
      %v2753 = vsel %vm2745, %v2744, %v2613
      %vm2754 = vcmask 392192
      %v2755 = vsel %vm2754, %v2746, %v2631
      %v2756 = vsel %vm2754, %v2747, %v2633
      %v2757 = vsel %vm2754, %v2748, %v2635
      %v2758 = vsel %vm2754, %v2749, %v2637
      %v2759 = vsel %vm2754, %v2750, %v2639
      %v2760 = vsel %vm2754, %v2751, %v2641
      %v2761 = vsel %vm2754, %v2752, %v2643
      %v2762 = vsel %vm2754, %v2753, %v2645
      %vm2763 = vcmask 457728
      %v2764 = vsel %vm2763, %v2755, %v2655
      %v2765 = vsel %vm2763, %v2756, %v2657
      %v2766 = vsel %vm2763, %v2757, %v2659
      %v2767 = vsel %vm2763, %v2758, %v2661
      %v2768 = vsel %vm2763, %v2759, %v2663
      %v2769 = vsel %vm2763, %v2760, %v2665
      %v2770 = vsel %vm2763, %v2761, %v2667
      %v2771 = vsel %vm2763, %v2762, %v2669
      %vm2772 = vcmask 523264
      %v2773 = vsel %vm2772, %v2764, %v2687
      %v2774 = vsel %vm2772, %v2765, %v2689
      %v2775 = vsel %vm2772, %v2766, %v2691
      %v2776 = vsel %vm2772, %v2767, %v2693
      %v2777 = vsel %vm2772, %v2768, %v2695
      %v2778 = vsel %vm2772, %v2769, %v2697
      %v2779 = vsel %vm2772, %v2770, %v2699
      %v2780 = vsel %vm2772, %v2771, %v2701
      %v2781 = vpack.c.bf16 %v2774, %v2773
      %v2782 = vpack.c.bf16 %v2776, %v2775
      %v2783 = vpack.c.bf16 %v2778, %v2777
      %v2784 = vpack.c.bf16 %v2780, %v2779
      %v2785 = vld [vmem:[%s11] sm:$0xf]
      %v2786 = vld [vmem:[%s11 + $0x4] sm:$0xf]
      %v2787 = vld [vmem:[%s11 + $0x8] sm:$0xf]
      %v2788 = vld [vmem:[%s11 + $0xc] sm:$0xf]
      %v2789 = vld [vmem:[%s11 + $0x10] sm:$0xf]
      %v2790 = vld [vmem:[%s11 + $0x14] sm:$0xf]
      %v2791 = vld [vmem:[%s11 + $0x18] sm:$0xf]
      %v2792 = vld [vmem:[%s11 + $0x1c] sm:$0xf]
      %v2793 = vld [vmem:[%s11 + $0x20] sm:$0xf]
      %v2794 = vld [vmem:[%s12] sm:$0x1]
      %v2796 = vlaneseq
      %v2797 = vshrl.u32 %v2796, 7
      %v2798 = vsub.s32 0, %v2797
      %v2799 = vrot.slane %v2794, %v2798
      %v2810 = vunpack.c.l.b16 %v2785
      %v2811 = vunpack.c.l.b16 %v2786
      %v2812 = vunpack.c.l.b16 %v2787
      %v2813 = vunpack.c.l.b16 %v2788
      %v2814 = vunpack.c.l.b16 %v2789
      %v2815 = vunpack.c.l.b16 %v2790
      %v2816 = vunpack.c.l.b16 %v2791
      %v2817 = vunpack.c.l.b16 %v2792
      %v2818 = vunpack.c.l.b16 %v2793
      %v2819 = vpack.c.b16 %v2811, %v2810
      %v2820 = vpack.c.b16 %v2813, %v2812
      %v2821 = vpack.c.b16 %v2815, %v2814
      %v2822 = vpack.c.b16 %v2817, %v2816
      %v2823 = vpack.c.b16 %v2818, %v2818
      %vm2828 = vcmask 588800
      %v2830 = vsel %vm2828, %v2781, 0
      %v2833 = vsel %vm2828, %v2782, 0
      %v2836 = vsel %vm2828, %v2783, 0
      %v2839 = vsel %vm2828, %v2784, 0
      %v2842 = vsel %vm1997, %v2823, 0
      %2844 = vmatprep.subr.bf16.mxu0 0
      %2845 = vmatpush1.bf16.msra.mxu0 0
      %2846 = vmatprep.subr.bf16.mxu0 0
      %2847 = vmatpush1.bf16.msra.mxu0 0
      %2848 = vmatprep.subr.bf16.mxu0 0
      %2849 = vmatpush1.bf16.msra.mxu0 0
      %2850 = vmatprep.subr.bf16.mxu0 0
      %2851 = vmatpush1.bf16.msra.mxu0 %v2842
      %2852 = vmatprep.subr.bf16.mxu0 0
      %2853 = vmatpush1.bf16.msra.mxu0 %v2822
      %2854 = vmatprep.subr.bf16.mxu0 0
      %2855 = vmatpush1.bf16.msra.mxu0 %v2821
      %2856 = vmatprep.subr.bf16.mxu0 0
      %2857 = vmatpush1.bf16.msra.mxu0 %v2820
      %2858 = vmatprep.subr.bf16.mxu0 0
      %2859 = vmatpush1.bf16.msra.mxu0 %v2819
      %2860 = vmatprep.subr.bf16.mxu0 0
      %2861 = vmatpush2.bf16.msra.mxu0 0
      %2862 = vmatprep.subr.bf16.mxu0 0
      %2863 = vmatpush2.bf16.msra.mxu0 0
      %2864 = vmatprep.subr.bf16.mxu0 0
      %2865 = vmatpush2.bf16.msra.mxu0 0
      %2866 = vmatprep.subr.bf16.mxu0 0
      %2867 = vmatpush2.bf16.msra.mxu0 0
      %2868 = vmatprep.subr.bf16.mxu0 0
      %2869 = vmatpush2.bf16.msra.mxu0 0
      %2870 = vmatprep.subr.bf16.mxu0 0
      %2871 = vmatpush2.bf16.msra.mxu0 0
      %2872 = vmatprep.subr.bf16.mxu0 0
      %2873 = vmatpush2.bf16.msra.mxu0 0
      %2874 = vmatprep.subr.bf16.mxu0 0
      %2875 = vmatpush2.bf16.msra.mxu0 0
      %2876 = vmatprep.mubr.bf16.mxu0 0
      %2877 = vmatmul.mubr.bf16.gmra.mxu0 %v2830
      %v2878 = vpop.f32.mrf.mxu0
      %v2879 = vadd.f32 %v2799, %v2878
      %v2880 = vpop.f32.mrf.mxu0
      %v2881 = vpop.f32.mrf.mxu0
      %v2882 = vadd.f32 %v2799, %v2881
      %v2883 = vpop.f32.mrf.mxu0
      %2884 = vmatprep.mubr.bf16.mxu0 0
      %2885 = vmatmul.mubr.bf16.gmra.mxu0 %v2833
      %v2886 = vpop.f32.mrf.mxu0
      %v2887 = vadd.f32 %v2799, %v2886
      %v2888 = vpop.f32.mrf.mxu0
      %v2889 = vpop.f32.mrf.mxu0
      %v2890 = vadd.f32 %v2799, %v2889
      %v2891 = vpop.f32.mrf.mxu0
      %2892 = vmatprep.mubr.bf16.mxu0 0
      %2893 = vmatmul.mubr.bf16.gmra.mxu0 %v2836
      %v2894 = vpop.f32.mrf.mxu0
      %v2895 = vadd.f32 %v2799, %v2894
      %v2896 = vpop.f32.mrf.mxu0
      %v2897 = vpop.f32.mrf.mxu0
      %v2898 = vadd.f32 %v2799, %v2897
      %v2899 = vpop.f32.mrf.mxu0
      %2900 = vmatprep.mubr.bf16.mxu0 0
      %2901 = vmatmul.mubr.bf16.gmra.mxu0 %v2839
      %v2902 = vpop.f32.mrf.mxu0
      %v2903 = vadd.f32 %v2799, %v2902
      %v2904 = vpop.f32.mrf.mxu0
      %v2905 = vpop.f32.mrf.mxu0
      %v2906 = vadd.f32 %v2799, %v2905
      %v2907 = vpop.f32.mrf.mxu0
      %2908 = vdwg.mxu0
      %v2909 = vmul.f32 %v2036, 0.5
      %v2910 = vmul.f32 %v2039, 0.5
      %v2911 = vmul.f32 %v2044, 0.5
      %v2912 = vmul.f32 %v2047, 0.5
      %v2913 = vmul.f32 %v2052, 0.5
      %v2914 = vmul.f32 %v2055, 0.5
      %v2915 = vmul.f32 %v2060, 0.5
      %v2916 = vmul.f32 %v2063, 0.5
      %v2917 = vadd.f32 %v2909, %v2879
      %v2918 = vadd.f32 %v2910, %v2882
      %v2919 = vadd.f32 %v2911, %v2887
      %v2920 = vadd.f32 %v2912, %v2890
      %v2921 = vadd.f32 %v2913, %v2895
      %v2922 = vadd.f32 %v2914, %v2898
      %v2923 = vadd.f32 %v2915, %v2903
      %v2924 = vadd.f32 %v2916, %v2906
      %2933 = vrot.lane.b32.xlu0 %v2879, 120
      %v2934 = vpop.permute.xlu0 %2933
      %2935 = vrot.lane.b32.xlu0 %v2882, 120
      %v2936 = vpop.permute.xlu0 %2935
      %2937 = vrot.lane.b32.xlu0 %v2887, 120
      %v2938 = vpop.permute.xlu0 %2937
      %2939 = vrot.lane.b32.xlu0 %v2890, 120
      %v2940 = vpop.permute.xlu0 %2939
      %2941 = vrot.lane.b32.xlu0 %v2895, 120
      %v2942 = vpop.permute.xlu0 %2941
      %2943 = vrot.lane.b32.xlu0 %v2898, 120
      %v2944 = vpop.permute.xlu0 %2943
      %2945 = vrot.lane.b32.xlu0 %v2903, 120
      %v2946 = vpop.permute.xlu0 %2945
      %2947 = vrot.lane.b32.xlu0 %v2906, 120
      %v2948 = vpop.permute.xlu0 %2947
      %v2957 = vadd.f32 %v2909, %v2934
      %v2958 = vadd.f32 %v2910, %v2936
      %v2959 = vadd.f32 %v2911, %v2938
      %v2960 = vadd.f32 %v2912, %v2940
      %v2961 = vadd.f32 %v2913, %v2942
      %v2962 = vadd.f32 %v2914, %v2944
      %v2963 = vadd.f32 %v2915, %v2946
      %v2964 = vadd.f32 %v2916, %v2948
      %2965 = vrot.lane.b32.xlu0 %v2879, 112
      %v2966 = vpop.permute.xlu0 %2965
      %2967 = vrot.lane.b32.xlu0 %v2882, 112
      %v2968 = vpop.permute.xlu0 %2967
      %2969 = vrot.lane.b32.xlu0 %v2887, 112
      %v2970 = vpop.permute.xlu0 %2969
      %2971 = vrot.lane.b32.xlu0 %v2890, 112
      %v2972 = vpop.permute.xlu0 %2971
      %2973 = vrot.lane.b32.xlu0 %v2895, 112
      %v2974 = vpop.permute.xlu0 %2973
      %2975 = vrot.lane.b32.xlu0 %v2898, 112
      %v2976 = vpop.permute.xlu0 %2975
      %2977 = vrot.lane.b32.xlu0 %v2903, 112
      %v2978 = vpop.permute.xlu0 %2977
      %2979 = vrot.lane.b32.xlu0 %v2906, 112
      %v2980 = vpop.permute.xlu0 %2979
      %v2989 = vadd.f32 %v2909, %v2966
      %v2990 = vadd.f32 %v2910, %v2968
      %v2991 = vadd.f32 %v2911, %v2970
      %v2992 = vadd.f32 %v2912, %v2972
      %v2993 = vadd.f32 %v2913, %v2974
      %v2994 = vadd.f32 %v2914, %v2976
      %v2995 = vadd.f32 %v2915, %v2978
      %v2996 = vadd.f32 %v2916, %v2980
      %2997 = vrot.lane.b32.xlu0 %v2879, 104
      %v2998 = vpop.permute.xlu0 %2997
      %2999 = vrot.lane.b32.xlu0 %v2882, 104
      %v3000 = vpop.permute.xlu0 %2999
      %3001 = vrot.lane.b32.xlu0 %v2887, 104
      %v3002 = vpop.permute.xlu0 %3001
      %3003 = vrot.lane.b32.xlu0 %v2890, 104
      %v3004 = vpop.permute.xlu0 %3003
      %3005 = vrot.lane.b32.xlu0 %v2895, 104
      %v3006 = vpop.permute.xlu0 %3005
      %3007 = vrot.lane.b32.xlu0 %v2898, 104
      %v3008 = vpop.permute.xlu0 %3007
      %3009 = vrot.lane.b32.xlu0 %v2903, 104
      %v3010 = vpop.permute.xlu0 %3009
      %3011 = vrot.lane.b32.xlu0 %v2906, 104
      %v3012 = vpop.permute.xlu0 %3011
      %v3021 = vadd.f32 %v2909, %v2998
      %v3022 = vadd.f32 %v2910, %v3000
      %v3023 = vadd.f32 %v2911, %v3002
      %v3024 = vadd.f32 %v2912, %v3004
      %v3025 = vadd.f32 %v2913, %v3006
      %v3026 = vadd.f32 %v2914, %v3008
      %v3027 = vadd.f32 %v2915, %v3010
      %v3028 = vadd.f32 %v2916, %v3012
      %v3029 = vmax.f32 %v2917, 0.0
      %v3030 = vmax.f32 %v2918, 0.0
      %v3031 = vmax.f32 %v2919, 0.0
      %v3032 = vmax.f32 %v2920, 0.0
      %v3033 = vmax.f32 %v2921, 0.0
      %v3034 = vmax.f32 %v2922, 0.0
      %v3035 = vmax.f32 %v2923, 0.0
      %v3036 = vmax.f32 %v2924, 0.0
      %v3037 = vmax.f32 %v2957, 0.0
      %v3038 = vmax.f32 %v2958, 0.0
      %v3039 = vmax.f32 %v2959, 0.0
      %v3040 = vmax.f32 %v2960, 0.0
      %v3041 = vmax.f32 %v2961, 0.0
      %v3042 = vmax.f32 %v2962, 0.0
      %v3043 = vmax.f32 %v2963, 0.0
      %v3044 = vmax.f32 %v2964, 0.0
      %v3045 = vmax.f32 %v2989, 0.0
      %v3046 = vmax.f32 %v2990, 0.0
      %v3047 = vmax.f32 %v2991, 0.0
      %v3048 = vmax.f32 %v2992, 0.0
      %v3049 = vmax.f32 %v2993, 0.0
      %v3050 = vmax.f32 %v2994, 0.0
      %v3051 = vmax.f32 %v2995, 0.0
      %v3052 = vmax.f32 %v2996, 0.0
      %v3053 = vmax.f32 %v3021, 0.0
      %v3054 = vmax.f32 %v3022, 0.0
      %v3055 = vmax.f32 %v3023, 0.0
      %v3056 = vmax.f32 %v3024, 0.0
      %v3057 = vmax.f32 %v3025, 0.0
      %v3058 = vmax.f32 %v3026, 0.0
      %v3059 = vmax.f32 %v3027, 0.0
      %v3060 = vmax.f32 %v3028, 0.0
      %v3061 = vpack.c.bf16 %v3030, %v3029
      %v3062 = vpack.c.bf16 %v3032, %v3031
      %v3063 = vpack.c.bf16 %v3034, %v3033
      %v3064 = vpack.c.bf16 %v3036, %v3035
      %v3065 = vpack.c.bf16 %v3038, %v3037
      %v3066 = vpack.c.bf16 %v3040, %v3039
      %v3067 = vpack.c.bf16 %v3042, %v3041
      %v3068 = vpack.c.bf16 %v3044, %v3043
      %v3069 = vpack.c.bf16 %v3046, %v3045
      %v3070 = vpack.c.bf16 %v3048, %v3047
      %v3071 = vpack.c.bf16 %v3050, %v3049
      %v3072 = vpack.c.bf16 %v3052, %v3051
      %v3073 = vpack.c.bf16 %v3054, %v3053
      %v3074 = vpack.c.bf16 %v3056, %v3055
      %v3075 = vpack.c.bf16 %v3058, %v3057
      %v3076 = vpack.c.bf16 %v3060, %v3059
      %v3077 = vld [vmem:[%s13] sm:$0xf]
      %v3078 = vld [vmem:[%s14] sm:$0x1]
      %v3080 = vlaneseq
      %v3081 = vshrl.u32 %v3080, 7
      %v3082 = vsub.s32 0, %v3081
      %v3083 = vrot.slane %v3078, %v3082
      %v3086 = vsel %vm1984, %v3061, 0
      %v3089 = vsel %vm1984, %v3062, 0
      %v3092 = vsel %vm1984, %v3063, 0
      %v3095 = vsel %vm1984, %v3064, 0
      %v3098 = vsel %vm1984, %v3065, 0
      %v3101 = vsel %vm1984, %v3066, 0
      %v3104 = vsel %vm1984, %v3067, 0
      %v3107 = vsel %vm1984, %v3068, 0
      %v3110 = vsel %vm1984, %v3069, 0
      %v3113 = vsel %vm1984, %v3070, 0
      %v3116 = vsel %vm1984, %v3071, 0
      %v3119 = vsel %vm1984, %v3072, 0
      %v3122 = vsel %vm1984, %v3073, 0
      %v3125 = vsel %vm1984, %v3074, 0
      %v3128 = vsel %vm1984, %v3075, 0
      %v3131 = vsel %vm1984, %v3076, 0
      %v3134 = vsel %vm1997, %v3077, 0
      %3136 = vmatprep.subr.bf16.mxu0 0
      %3137 = vmatpush1.bf16.msra.mxu0 0
      %3138 = vmatprep.subr.bf16.mxu0 0
      %3139 = vmatpush1.bf16.msra.mxu0 0
      %3140 = vmatprep.subr.bf16.mxu0 0
      %3141 = vmatpush1.bf16.msra.mxu0 0
      %3142 = vmatprep.subr.bf16.mxu0 0
      %3143 = vmatpush1.bf16.msra.mxu0 0
      %3144 = vmatprep.subr.bf16.mxu0 0
      %3145 = vmatpush1.bf16.msra.mxu0 0
      %3146 = vmatprep.subr.bf16.mxu0 0
      %3147 = vmatpush1.bf16.msra.mxu0 0
      %3148 = vmatprep.subr.bf16.mxu0 0
      %3149 = vmatpush1.bf16.msra.mxu0 0
      %3150 = vmatprep.subr.bf16.mxu0 0
      %3151 = vmatpush1.bf16.msra.mxu0 %v3134
      %3152 = vmatprep.subr.bf16.mxu0 0
      %3153 = vmatpush2.bf16.msra.mxu0 0
      %3154 = vmatprep.subr.bf16.mxu0 0
      %3155 = vmatpush2.bf16.msra.mxu0 0
      %3156 = vmatprep.subr.bf16.mxu0 0
      %3157 = vmatpush2.bf16.msra.mxu0 0
      %3158 = vmatprep.subr.bf16.mxu0 0
      %3159 = vmatpush2.bf16.msra.mxu0 0
      %3160 = vmatprep.subr.bf16.mxu0 0
      %3161 = vmatpush2.bf16.msra.mxu0 0
      %3162 = vmatprep.subr.bf16.mxu0 0
      %3163 = vmatpush2.bf16.msra.mxu0 0
      %3164 = vmatprep.subr.bf16.mxu0 0
      %3165 = vmatpush2.bf16.msra.mxu0 0
      %3166 = vmatprep.subr.bf16.mxu0 0
      %3167 = vmatpush2.bf16.msra.mxu0 0
      %3168 = vmatprep.mubr.bf16.mxu0 0
      %3169 = vmatmul.mubr.bf16.gmra.mxu0 %v3086
      %v3170 = vpop.f32.mrf.mxu0
      %v3171 = vadd.f32 %v3083, %v3170
      %v3172 = vpop.f32.mrf.mxu0
      %v3173 = vpop.f32.mrf.mxu0
      %v3174 = vadd.f32 %v3083, %v3173
      %v3175 = vpop.f32.mrf.mxu0
      %3176 = vmatprep.mubr.bf16.mxu0 0
      %3177 = vmatmul.mubr.bf16.gmra.mxu0 %v3089
      %v3178 = vpop.f32.mrf.mxu0
      %v3179 = vadd.f32 %v3083, %v3178
      %v3180 = vpop.f32.mrf.mxu0
      %v3181 = vpop.f32.mrf.mxu0
      %v3182 = vadd.f32 %v3083, %v3181
      %v3183 = vpop.f32.mrf.mxu0
      %3184 = vmatprep.mubr.bf16.mxu0 0
      %3185 = vmatmul.mubr.bf16.gmra.mxu0 %v3092
      %v3186 = vpop.f32.mrf.mxu0
      %v3187 = vadd.f32 %v3083, %v3186
      %v3188 = vpop.f32.mrf.mxu0
      %v3189 = vpop.f32.mrf.mxu0
      %v3190 = vadd.f32 %v3083, %v3189
      %v3191 = vpop.f32.mrf.mxu0
      %3192 = vmatprep.mubr.bf16.mxu0 0
      %3193 = vmatmul.mubr.bf16.gmra.mxu0 %v3095
      %v3194 = vpop.f32.mrf.mxu0
      %v3195 = vadd.f32 %v3083, %v3194
      %v3196 = vpop.f32.mrf.mxu0
      %v3197 = vpop.f32.mrf.mxu0
      %v3198 = vadd.f32 %v3083, %v3197
      %v3199 = vpop.f32.mrf.mxu0
      %3200 = vmatprep.mubr.bf16.mxu0 0
      %3201 = vmatmul.mubr.bf16.gmra.mxu0 %v3098
      %v3202 = vpop.f32.mrf.mxu0
      %v3203 = vadd.f32 %v3083, %v3202
      %v3204 = vpop.f32.mrf.mxu0
      %v3205 = vpop.f32.mrf.mxu0
      %v3206 = vadd.f32 %v3083, %v3205
      %v3207 = vpop.f32.mrf.mxu0
      %3208 = vmatprep.mubr.bf16.mxu0 0
      %3209 = vmatmul.mubr.bf16.gmra.mxu0 %v3101
      %v3210 = vpop.f32.mrf.mxu0
      %v3211 = vadd.f32 %v3083, %v3210
      %v3212 = vpop.f32.mrf.mxu0
      %v3213 = vpop.f32.mrf.mxu0
      %v3214 = vadd.f32 %v3083, %v3213
      %v3215 = vpop.f32.mrf.mxu0
      %3216 = vmatprep.mubr.bf16.mxu0 0
      %3217 = vmatmul.mubr.bf16.gmra.mxu0 %v3104
      %v3218 = vpop.f32.mrf.mxu0
      %v3219 = vadd.f32 %v3083, %v3218
      %v3220 = vpop.f32.mrf.mxu0
      %v3221 = vpop.f32.mrf.mxu0
      %v3222 = vadd.f32 %v3083, %v3221
      %v3223 = vpop.f32.mrf.mxu0
      %3224 = vmatprep.mubr.bf16.mxu0 0
      %3225 = vmatmul.mubr.bf16.gmra.mxu0 %v3107
      %v3226 = vpop.f32.mrf.mxu0
      %v3227 = vadd.f32 %v3083, %v3226
      %v3228 = vpop.f32.mrf.mxu0
      %v3229 = vpop.f32.mrf.mxu0
      %v3230 = vadd.f32 %v3083, %v3229
      %v3231 = vpop.f32.mrf.mxu0
      %3232 = vmatprep.mubr.bf16.mxu0 0
      %3233 = vmatmul.mubr.bf16.gmra.mxu0 %v3110
      %v3234 = vpop.f32.mrf.mxu0
      %v3235 = vadd.f32 %v3083, %v3234
      %v3236 = vpop.f32.mrf.mxu0
      %v3237 = vpop.f32.mrf.mxu0
      %v3238 = vadd.f32 %v3083, %v3237
      %v3239 = vpop.f32.mrf.mxu0
      %3240 = vmatprep.mubr.bf16.mxu0 0
      %3241 = vmatmul.mubr.bf16.gmra.mxu0 %v3113
      %v3242 = vpop.f32.mrf.mxu0
      %v3243 = vadd.f32 %v3083, %v3242
      %v3244 = vpop.f32.mrf.mxu0
      %v3245 = vpop.f32.mrf.mxu0
      %v3246 = vadd.f32 %v3083, %v3245
      %v3247 = vpop.f32.mrf.mxu0
      %3248 = vmatprep.mubr.bf16.mxu0 0
      %3249 = vmatmul.mubr.bf16.gmra.mxu0 %v3116
      %v3250 = vpop.f32.mrf.mxu0
      %v3251 = vadd.f32 %v3083, %v3250
      %v3252 = vpop.f32.mrf.mxu0
      %v3253 = vpop.f32.mrf.mxu0
      %v3254 = vadd.f32 %v3083, %v3253
      %v3255 = vpop.f32.mrf.mxu0
      %3256 = vmatprep.mubr.bf16.mxu0 0
      %3257 = vmatmul.mubr.bf16.gmra.mxu0 %v3119
      %v3258 = vpop.f32.mrf.mxu0
      %v3259 = vadd.f32 %v3083, %v3258
      %v3260 = vpop.f32.mrf.mxu0
      %v3261 = vpop.f32.mrf.mxu0
      %v3262 = vadd.f32 %v3083, %v3261
      %v3263 = vpop.f32.mrf.mxu0
      %3264 = vmatprep.mubr.bf16.mxu0 0
      %3265 = vmatmul.mubr.bf16.gmra.mxu0 %v3122
      %v3266 = vpop.f32.mrf.mxu0
      %v3267 = vadd.f32 %v3083, %v3266
      %v3268 = vpop.f32.mrf.mxu0
      %v3269 = vpop.f32.mrf.mxu0
      %v3270 = vadd.f32 %v3083, %v3269
      %v3271 = vpop.f32.mrf.mxu0
      %3272 = vmatprep.mubr.bf16.mxu0 0
      %3273 = vmatmul.mubr.bf16.gmra.mxu0 %v3125
      %v3274 = vpop.f32.mrf.mxu0
      %v3275 = vadd.f32 %v3083, %v3274
      %v3276 = vpop.f32.mrf.mxu0
      %v3277 = vpop.f32.mrf.mxu0
      %v3278 = vadd.f32 %v3083, %v3277
      %v3279 = vpop.f32.mrf.mxu0
      %3280 = vmatprep.mubr.bf16.mxu0 0
      %3281 = vmatmul.mubr.bf16.gmra.mxu0 %v3128
      %v3282 = vpop.f32.mrf.mxu0
      %v3283 = vadd.f32 %v3083, %v3282
      %v3284 = vpop.f32.mrf.mxu0
      %v3285 = vpop.f32.mrf.mxu0
      %v3286 = vadd.f32 %v3083, %v3285
      %v3287 = vpop.f32.mrf.mxu0
      %3288 = vmatprep.mubr.bf16.mxu0 0
      %3289 = vmatmul.mubr.bf16.gmra.mxu0 %v3131
      %v3290 = vpop.f32.mrf.mxu0
      %v3291 = vadd.f32 %v3083, %v3290
      %v3292 = vpop.f32.mrf.mxu0
      %v3293 = vpop.f32.mrf.mxu0
      %v3294 = vadd.f32 %v3083, %v3293
      %v3295 = vpop.f32.mrf.mxu0
      %3296 = vdwg.mxu0
      %3297 = vst.msk [vmem:[%s494] sm:$0xff] %vm1984, %v3171
      %3298 = vst.msk [vmem:[%s494 + $0x8] sm:$0xff] %vm1984, %v3174
      %3299 = vst.msk [vmem:[%s494 + $0x10] sm:$0xff] %vm1984, %v3179
      %3300 = vst.msk [vmem:[%s494 + $0x18] sm:$0xff] %vm1984, %v3182
      %3301 = vst.msk [vmem:[%s494 + $0x20] sm:$0xff] %vm1984, %v3187
      %3302 = vst.msk [vmem:[%s494 + $0x28] sm:$0xff] %vm1984, %v3190
      %3303 = vst.msk [vmem:[%s494 + $0x30] sm:$0xff] %vm1984, %v3195
      %3304 = vst.msk [vmem:[%s494 + $0x38] sm:$0xff] %vm1984, %v3198
      %s3305 = scalar_lea.vmem %s494, 64
      %3306 = vst.msk [vmem:[%s3305] sm:$0xff] %vm1984, %v3203
      %3307 = vst.msk [vmem:[%s3305 + $0x8] sm:$0xff] %vm1984, %v3206
      %3308 = vst.msk [vmem:[%s3305 + $0x10] sm:$0xff] %vm1984, %v3211
      %3309 = vst.msk [vmem:[%s3305 + $0x18] sm:$0xff] %vm1984, %v3214
      %3310 = vst.msk [vmem:[%s3305 + $0x20] sm:$0xff] %vm1984, %v3219
      %3311 = vst.msk [vmem:[%s3305 + $0x28] sm:$0xff] %vm1984, %v3222
      %3312 = vst.msk [vmem:[%s3305 + $0x30] sm:$0xff] %vm1984, %v3227
      %3313 = vst.msk [vmem:[%s3305 + $0x38] sm:$0xff] %vm1984, %v3230
      %s3314 = scalar_lea.vmem %s494, 128
      %3315 = vst.msk [vmem:[%s3314] sm:$0xff] %vm1984, %v3235
      %3316 = vst.msk [vmem:[%s3314 + $0x8] sm:$0xff] %vm1984, %v3238
      %3317 = vst.msk [vmem:[%s3314 + $0x10] sm:$0xff] %vm1984, %v3243
      %3318 = vst.msk [vmem:[%s3314 + $0x18] sm:$0xff] %vm1984, %v3246
      %3319 = vst.msk [vmem:[%s3314 + $0x20] sm:$0xff] %vm1984, %v3251
      %3320 = vst.msk [vmem:[%s3314 + $0x28] sm:$0xff] %vm1984, %v3254
      %3321 = vst.msk [vmem:[%s3314 + $0x30] sm:$0xff] %vm1984, %v3259
      %3322 = vst.msk [vmem:[%s3314 + $0x38] sm:$0xff] %vm1984, %v3262
      %s3323 = scalar_lea.vmem %s494, 192
      %3324 = vst.msk [vmem:[%s3323] sm:$0xff] %vm1984, %v3267
      %3325 = vst.msk [vmem:[%s3323 + $0x8] sm:$0xff] %vm1984, %v3270
      %3326 = vst.msk [vmem:[%s3323 + $0x10] sm:$0xff] %vm1984, %v3275
      %3327 = vst.msk [vmem:[%s3323 + $0x18] sm:$0xff] %vm1984, %v3278
      %3328 = vst.msk [vmem:[%s3323 + $0x20] sm:$0xff] %vm1984, %v3283
      %3329 = vst.msk [vmem:[%s3323 + $0x28] sm:$0xff] %vm1984, %v3286
      %3330 = vst.msk [vmem:[%s3323 + $0x30] sm:$0xff] %vm1984, %v3291
      %3331 = vst.msk [vmem:[%s3323 + $0x38] sm:$0xff] %vm1984, %v3294
      %p3332 = scmp.lt.s32.totalorder %s26, 1
      %s3333 = scalar_select %p3332, %s26, 1
      %s3334 = smul.addr %s3333, 32
      %s3335 = smul.addr %s3334, 8
      %s3336 = scalar_lea.vmem %s15, %s3335
      // Predicated region
      $region81: #{a_call__.1} parent=79 // pred_check
        %p3337 = pneg %p364
      $region82: #{a_call__.1} parent=79 // pred_check_branch
        %3339 = sbr.rel (%p3337) target = $region84
      $region83: #{a_call__.1} parent=79 // pred_region
        _
      $region84: #{a_call__.1} parent=79 // pred_fallthru
        _
    $region80: #{a_call__.1} parent=5 // pred_fallthru
      _
    %p3340 = scmp.le.s32.totalorder 2, %s21
    // Predicated region
    $region85: #{a_call__.1} parent=5 // pred_check
      %p3341 = pneg %p3340
    $region86: #{a_call__.1} parent=5 // pred_check_branch
      %3343 = sbr.rel (%p3341) target = $region88
    $region87: #{a_call__.1} parent=5 // pred_region
      %s3344 = ssub.s32 %s21, 2
      // Predicated region
      $region89: #{a_call__.1} parent=87 // pred_check
        %p3345 = pneg %p370
      $region90: #{a_call__.1} parent=87 // pred_check_branch
        %3347 = sbr.rel (%p3345) target = $region92
      $region91: #{a_call__.1} parent=87 // pred_region
        %p3348 = scmp.lt.s32.totalorder %s27, 1
        %s3349 = scalar_select %p3348, %s27, 1
        %s3350 = smul.addr %s3349, 32
        %s3351 = smul.addr %s3350, 8
        %s3352 = scalar_lea.vmem %s15, %s3351
      $region92: #{a_call__.1} parent=87 // pred_fallthru
        _
    $region88: #{a_call__.1} parent=5 // pred_fallthru
      _
  $region6: #{a_call__.1} parent=0 // loop_footer
    %s25 = sadd.s32 1, %s21
  $region7: #{a_call__.1} parent=0 // loop_footer_branch
    %20 = sbr.rel target = $region3
  $region8: #{a_call__.1} parent=0 // loop_exit
    _

</llo_original>
